<compile_context>
chip_gen: v7x
topology: tpu7x:2x2x1
jax: 0.10.0
libtpu: 0.0.40
codegen_flags: <defaults>
</compile_context>

<pallas_src>
import functools

import jax
import jax.numpy as jnp
from jax.experimental import pallas as pl
from jax.experimental.pallas import tpu as pltpu

IN_FEATURES = 28 * 28     # 784 (nn.Flatten on NCHW (B,1,28,28))
HIDDEN = 512
OUT_FEATURES = 10
OUT_PADDED = 128          # lane-dense output width; sliced to 10 outside


def mlp_kernel(x_ref, w1_ref, b1_ref, w2_ref, b2_ref, w3_ref, b3_ref, o_ref):
    # x arrives as f32 straight from HBM; cast to bf16 on the VPU here instead
    # of an extra wrapper-side pad+cast HBM pass.
    x = x_ref[...].astype(jnp.bfloat16)                          # (tb, 784)

    # Three fused MXU matmuls: bf16 inputs, f32 accumulation.
    # Hidden-layer epilogues (bias + ReLU) run in bf16 (native VALU on
    # v6e/v7x; on v5e this simply up-converts and stays correct).
    h1 = jnp.dot(x, w1_ref[...], preferred_element_type=jnp.float32)
    h1 = jnp.maximum(h1.astype(jnp.bfloat16) + b1_ref[...], 0.0)

    h2 = jnp.dot(h1, w2_ref[...], preferred_element_type=jnp.float32)
    h2 = jnp.maximum(h2.astype(jnp.bfloat16) + b2_ref[...], 0.0)

    h3 = jnp.dot(h2, w3_ref[...], preferred_element_type=jnp.float32)
    o_ref[...] = jnp.maximum(h3 + b3_ref[...], 0.0)              # (tb, 128) f32


def _round_up(v, m):
    return ((v + m - 1) // m) * m


@functools.partial(jax.jit, static_argnames=("block_b",))
def mlp_forward(x_nchw, w1, b1, w2, b2, w3, b3, *, block_b=512):
    """Forward pass. Weights are (in_features, out_features); biases (1, out)."""
    B = x_nchw.shape[0]
    x = x_nchw.reshape(B, -1).astype(jnp.float32)     # == nn.Flatten on NCHW
    assert x.shape[1] == IN_FEATURES

    # --- adaptive, MXU-aligned batch tile ---------------------------------
    # Small batches round to 128 rows (no 512-row tile full of padded zeros);
    # a batch that would otherwise be one big single tile is split into >=2
    # grid steps so v7x can shard it across both TensorCores.
    b128 = _round_up(B, 128)
    block_b_eff = min(block_b, b128)
    if b128 > 128 and b128 <= block_b_eff:
        block_b_eff = _round_up(b128 // 2, 128)
    B_pad = _round_up(B, block_b_eff)
    if B_pad != B:
        # Zero rows; cheap, and XLA fuses it with the flatten producer.
        x = jnp.pad(x, ((0, B_pad - B), (0, 0)))

    # Zero-pad the last layer to 128 output lanes (lane-dense stores).
    w3p = jnp.pad(w3, ((0, 0), (0, OUT_PADDED - OUT_FEATURES)))
    b3p = jnp.pad(b3, ((0, 0), (0, OUT_PADDED - OUT_FEATURES)))

    # bf16 MXU weights / bf16 hidden-layer biases (tiny one-off casts).
    w1b = w1.astype(jnp.bfloat16)
    w2b = w2.astype(jnp.bfloat16)
    w3b = w3p.astype(jnp.bfloat16)
    b1b = b1.astype(jnp.bfloat16)
    b2b = b2.astype(jnp.bfloat16)

    # Grid-invariant operands stay resident in VMEM; Buffered(1) avoids a
    # dead second copy (VMEM headroom on v7x).
    resident = dict(pipeline_mode=pl.Buffered(1))

    grid = (B_pad // block_b_eff,)
    out = pl.pallas_call(
        mlp_kernel,
        out_shape=jax.ShapeDtypeStruct((B_pad, OUT_PADDED), jnp.float32),
        grid_spec=pltpu.PrefetchScalarGridSpec(
            num_scalar_prefetch=0,
            grid=grid,
            in_specs=[
                # Only the batch axis is tiled; last dim 784 equals the full
                # array dim, which is legal for BlockSpec.
                pl.BlockSpec((block_b_eff, IN_FEATURES), lambda i: (i, 0)),
                pl.BlockSpec((IN_FEATURES, HIDDEN), lambda i: (0, 0), **resident),
                pl.BlockSpec((1, HIDDEN), lambda i: (0, 0), **resident),
                pl.BlockSpec((HIDDEN, HIDDEN), lambda i: (0, 0), **resident),
                pl.BlockSpec((1, HIDDEN), lambda i: (0, 0), **resident),
                pl.BlockSpec((HIDDEN, OUT_PADDED), lambda i: (0, 0), **resident),
                pl.BlockSpec((1, OUT_PADDED), lambda i: (0, 0), **resident),
            ],
            out_specs=pl.BlockSpec((block_b_eff, OUT_PADDED), lambda i: (i, 0)),
        ),
        compiler_params=pltpu.CompilerParams(
            dimension_semantics=("parallel",),        # batch sharded across TCs
            vmem_limit_bytes=32 * 1024 * 1024,        # headroom beyond v5e's 16 MiB default
        ),
    )(x, w1b, b1b, w2b, b2b, w3b, b3p)

    # Slice away batch + lane padding.
    # TODO(synk): for large serving batches, fuse this slice into the consumer
    # instead of materializing the padded (B_pad, 128) f32 array.
    return out[:B, :OUT_FEATURES]


def init_linear_params(key, fan_in, fan_out):
    # Mirrors PyTorch nn.Linear default init: U(-1/sqrt(fan_in), 1/sqrt(fan_in)).
    kw, kb = jax.random.split(key)
    bound = 1.0 / jnp.sqrt(fan_in)
    # Stored as (in_features, out_features) so the kernel computes x @ W.
    w = jax.random.uniform(kw, (fan_in, fan_out), jnp.float32, -bound, bound)
    b = jax.random.uniform(kb, (1, fan_out), jnp.float32, -bound, bound)
    return w, b


if __name__ == "__main__":
    key = jax.random.PRNGKey(0)
    k_x, k1, k2, k3 = jax.random.split(key, 4)

    batch = 8  # small example batch; adaptive tile rounds it to one 128-row tile
    x = jax.random.normal(k_x, (batch, 1, 28, 28), jnp.float32)

    w1, b1 = init_linear_params(k1, IN_FEATURES, HIDDEN)
    w2, b2 = init_linear_params(k2, HIDDEN, HIDDEN)
    w3, b3 = init_linear_params(k3, HIDDEN, OUT_FEATURES)

    logits = mlp_forward(x, w1, b1, w2, b2, w3, b3)
    logits = jax.block_until_ready(logits)

    # Pure-JAX f32 reference of the same forward pass (kernel uses bf16 MXU
    # inputs / bf16 hidden epilogues with f32 accumulation, so compare with a
    # modest tolerance).
    xf = x.reshape(batch, -1)
    ref = jnp.maximum(xf @ w1 + b1, 0.0)
    ref = jnp.maximum(ref @ w2 + b2, 0.0)
    ref = jnp.maximum(ref @ w3 + b3, 0.0)
    assert logits.shape == (batch, OUT_FEATURES)
    assert jnp.allclose(logits, ref, atol=5e-2, rtol=5e-2), (
        float(jnp.max(jnp.abs(logits - ref))))

    print("KERNEL_OK")
</pallas_src>

<mosaic_0001>
module attributes {stable_mosaic.version = 11 : i64} {
  func.func @mlp_kernel(%arg0: i32, %arg1: memref<128x784xf32, #tpu.memory_space<vmem>>, %arg2: memref<784x512xbf16, #tpu.memory_space<vmem>>, %arg3: memref<1x512xbf16, #tpu.memory_space<vmem>>, %arg4: memref<512x512xbf16, #tpu.memory_space<vmem>>, %arg5: memref<1x512xbf16, #tpu.memory_space<vmem>>, %arg6: memref<512x128xbf16, #tpu.memory_space<vmem>>, %arg7: memref<1x128xf32, #tpu.memory_space<vmem>>, %arg8: memref<128x128xf32, #tpu.memory_space<vmem>>) attributes {dimension_semantics = [#tpu.dimension_semantics<parallel>], iteration_bounds = array<i64: 1>, scalar_prefetch = 0 : i64, scratch_operands = 0 : i64, tpu.core_type = #tpu.core_type<tc>, window_params = [{transform_indices = @transform_0, window_bounds = array<i64: 128, 784>}, {pipeline_mode = #tpu.pipeline_mode<synchronous>, transform_indices = @transform_1, window_bounds = array<i64: 784, 512>}, {pipeline_mode = #tpu.pipeline_mode<synchronous>, transform_indices = @transform_2, window_bounds = array<i64: 1, 512>}, {pipeline_mode = #tpu.pipeline_mode<synchronous>, transform_indices = @transform_3, window_bounds = array<i64: 512, 512>}, {pipeline_mode = #tpu.pipeline_mode<synchronous>, transform_indices = @transform_4, window_bounds = array<i64: 1, 512>}, {pipeline_mode = #tpu.pipeline_mode<synchronous>, transform_indices = @transform_5, window_bounds = array<i64: 512, 128>}, {pipeline_mode = #tpu.pipeline_mode<synchronous>, transform_indices = @transform_6, window_bounds = array<i64: 1, 128>}, {transform_indices = @transform_7, window_bounds = array<i64: 128, 128>}]} {
    %c0 = arith.constant 0 : index
    %c0_0 = arith.constant 0 : index
    %0 = vector.load %arg1[%c0, %c0_0] : memref<128x784xf32, #tpu.memory_space<vmem>>, vector<128x784xf32>
    %1 = arith.truncf %0 : vector<128x784xf32> to vector<128x784xbf16>
    %c0_1 = arith.constant 0 : index
    %c0_2 = arith.constant 0 : index
    %2 = vector.load %arg2[%c0_1, %c0_2] : memref<784x512xbf16, #tpu.memory_space<vmem>>, vector<784x512xbf16>
    %cst = arith.constant dense<0.000000e+00> : vector<128x512xf32>
    %3 = tpu.matmul %1, %2, %cst {dimension_numbers = #tpu.dot_dimension_numbers<[1], [0], [0], [1], [0, 0, 1, 1], [], []>} : vector<128x784xbf16>, vector<784x512xbf16>, vector<128x512xf32> -> vector<128x512xf32>
    %4 = arith.truncf %3 : vector<128x512xf32> to vector<128x512xbf16>
    %c0_3 = arith.constant 0 : index
    %c0_4 = arith.constant 0 : index
    %5 = vector.load %arg3[%c0_3, %c0_4] : memref<1x512xbf16, #tpu.memory_space<vmem>>, vector<1x512xbf16>
    %6 = vector.broadcast %5 : vector<1x512xbf16> to vector<128x512xbf16>
    %7 = arith.addf %4, %6 : vector<128x512xbf16>
    %cst_5 = arith.constant 0.000000e+00 : bf16
    %8 = vector.broadcast %cst_5 : bf16 to vector<128x512xbf16>
    %9 = arith.maximumf %7, %8 : vector<128x512xbf16>
    %c0_6 = arith.constant 0 : index
    %c0_7 = arith.constant 0 : index
    %10 = vector.load %arg4[%c0_6, %c0_7] : memref<512x512xbf16, #tpu.memory_space<vmem>>, vector<512x512xbf16>
    %cst_8 = arith.constant dense<0.000000e+00> : vector<128x512xf32>
    %11 = tpu.matmul %9, %10, %cst_8 {dimension_numbers = #tpu.dot_dimension_numbers<[1], [0], [0], [1], [0, 0, 1, 1], [], []>} : vector<128x512xbf16>, vector<512x512xbf16>, vector<128x512xf32> -> vector<128x512xf32>
    %12 = arith.truncf %11 : vector<128x512xf32> to vector<128x512xbf16>
    %c0_9 = arith.constant 0 : index
    %c0_10 = arith.constant 0 : index
    %13 = vector.load %arg5[%c0_9, %c0_10] : memref<1x512xbf16, #tpu.memory_space<vmem>>, vector<1x512xbf16>
    %14 = vector.broadcast %13 : vector<1x512xbf16> to vector<128x512xbf16>
    %15 = arith.addf %12, %14 : vector<128x512xbf16>
    %cst_11 = arith.constant 0.000000e+00 : bf16
    %16 = vector.broadcast %cst_11 : bf16 to vector<128x512xbf16>
    %17 = arith.maximumf %15, %16 : vector<128x512xbf16>
    %c0_12 = arith.constant 0 : index
    %c0_13 = arith.constant 0 : index
    %18 = vector.load %arg6[%c0_12, %c0_13] : memref<512x128xbf16, #tpu.memory_space<vmem>>, vector<512x128xbf16>
    %cst_14 = arith.constant dense<0.000000e+00> : vector<128x128xf32>
    %19 = tpu.matmul %17, %18, %cst_14 {dimension_numbers = #tpu.dot_dimension_numbers<[1], [0], [0], [1], [0, 0, 1, 1], [], []>} : vector<128x512xbf16>, vector<512x128xbf16>, vector<128x128xf32> -> vector<128x128xf32>
    %c0_15 = arith.constant 0 : index
    %c0_16 = arith.constant 0 : index
    %20 = vector.load %arg7[%c0_15, %c0_16] : memref<1x128xf32, #tpu.memory_space<vmem>>, vector<1x128xf32>
    %21 = vector.broadcast %20 : vector<1x128xf32> to vector<128x128xf32>
    %22 = arith.addf %19, %21 : vector<128x128xf32>
    %cst_17 = arith.constant 0.000000e+00 : f32
    %23 = vector.broadcast %cst_17 : f32 to vector<128x128xf32>
    %24 = arith.maximumf %22, %23 : vector<128x128xf32>
    %c0_18 = arith.constant 0 : index
    %c0_19 = arith.constant 0 : index
    %25 = vector.load %arg8[%c0_18, %c0_19] : memref<128x128xf32, #tpu.memory_space<vmem>>, vector<128x128xf32>
    tpu.vector_store %arg8[%c0_18, %c0_19], %24 {strides = array<i32>} : memref<128x128xf32, #tpu.memory_space<vmem>>, vector<128x128xf32>,
    return
  }
  func.func @transform_0(%arg0: i32) -> (i32, i32) {
    %c0_i32 = arith.constant 0 : i32
    %c0_i32_0 = arith.constant 0 : i32
    return %arg0, %c0_i32 : i32, i32
  }
  func.func @transform_1(%arg0: i32) -> (i32, i32) {
    %c0_i32 = arith.constant 0 : i32
    %c0_i32_0 = arith.constant 0 : i32
    %c0_i32_1 = arith.constant 0 : i32
    return %c0_i32, %c0_i32_0 : i32, i32
  }
  func.func @transform_2(%arg0: i32) -> (i32, i32) {
    %c0_i32 = arith.constant 0 : i32
    %c0_i32_0 = arith.constant 0 : i32
    %c0_i32_1 = arith.constant 0 : i32
    return %c0_i32, %c0_i32_0 : i32, i32
  }
  func.func @transform_3(%arg0: i32) -> (i32, i32) {
    %c0_i32 = arith.constant 0 : i32
    %c0_i32_0 = arith.constant 0 : i32
    %c0_i32_1 = arith.constant 0 : i32
    return %c0_i32, %c0_i32_0 : i32, i32
  }
  func.func @transform_4(%arg0: i32) -> (i32, i32) {
    %c0_i32 = arith.constant 0 : i32
    %c0_i32_0 = arith.constant 0 : i32
    %c0_i32_1 = arith.constant 0 : i32
    return %c0_i32, %c0_i32_0 : i32, i32
  }
  func.func @transform_5(%arg0: i32) -> (i32, i32) {
    %c0_i32 = arith.constant 0 : i32
    %c0_i32_0 = arith.constant 0 : i32
    %c0_i32_1 = arith.constant 0 : i32
    return %c0_i32, %c0_i32_0 : i32, i32
  }
  func.func @transform_6(%arg0: i32) -> (i32, i32) {
    %c0_i32 = arith.constant 0 : i32
    %c0_i32_0 = arith.constant 0 : i32
    %c0_i32_1 = arith.constant 0 : i32
    return %c0_i32, %c0_i32_0 : i32, i32
  }
  func.func @transform_7(%arg0: i32) -> (i32, i32) {
    %c0_i32 = arith.constant 0 : i32
    %c0_i32_0 = arith.constant 0 : i32
    return %arg0, %c0_i32 : i32, i32
  }
}

</mosaic_0001>

<llo_original>
// kernel: mlp_forward.1
$region0: #{mlp_forward.1}
  #allocation0 [shape = 'u32[]', space=smem, size = 0x4, offset = 0x4, fixed_abs, tag = 'smem constant byte address 0x4 - core index']
  #allocation1 [shape = 'u32[144,128]{1,0:T(1,128)}', space=vmem, size = 0x12000, scoped, tag = 'internal scratch']
  %s0 = inlined_call_operand.vmem [shape: f32[128,784], index: 0, kind: input, shape index: {}]
  %s1 = inlined_call_operand.vmem [shape: bf16[784,512], index: 1, kind: input, shape index: {}]
  %s2 = inlined_call_operand.vmem [shape: bf16[1,512], index: 2, kind: input, shape index: {}]
  %s3 = inlined_call_operand.vmem [shape: bf16[512,512], index: 3, kind: input, shape index: {}]
  %s4 = inlined_call_operand.vmem [shape: bf16[1,512], index: 4, kind: input, shape index: {}]
  %s5 = inlined_call_operand.vmem [shape: bf16[512,128], index: 5, kind: input, shape index: {}]
  %s6 = inlined_call_operand.vmem [shape: f32[1,128], index: 6, kind: input, shape index: {}]
  %s7 = inlined_call_operand.vmem [shape: f32[128,128], index: 7, kind: output, shape index: {}]
  %s8 = sld [smem:[#allocation0]]
  $region38: #{mlp_forward.1} parent=0
    _
  %s10 = ssub.s32 1, %s8
  %s11 = scalar_select 0, %s10, %s8
  // Predicated region
  $region2: #{mlp_forward.1} parent=0 // pred_check
    _
  $region3: #{mlp_forward.1} parent=0 // pred_check_branch
    %13 = sbr.rel (0) target = $region5
  $region4: #{mlp_forward.1} parent=0 // pred_region
    _
  $region5: #{mlp_forward.1} parent=0 // pred_fallthru
    _
  // Predicated region
  $region6: #{mlp_forward.1} parent=0 // pred_check
    _
  $region7: #{mlp_forward.1} parent=0 // pred_check_branch
    %15 = sbr.rel (0) target = $region9
  $region8: #{mlp_forward.1} parent=0 // pred_region
    _
  $region9: #{mlp_forward.1} parent=0 // pred_fallthru
    _
  // Predicated region
  $region10: #{mlp_forward.1} parent=0 // pred_check
    _
  $region11: #{mlp_forward.1} parent=0 // pred_check_branch
    %17 = sbr.rel (0) target = $region13
  $region12: #{mlp_forward.1} parent=0 // pred_region
    _
  $region13: #{mlp_forward.1} parent=0 // pred_fallthru
    _
  // Predicated region
  $region14: #{mlp_forward.1} parent=0 // pred_check
    _
  $region15: #{mlp_forward.1} parent=0 // pred_check_branch
    %19 = sbr.rel (0) target = $region17
  $region16: #{mlp_forward.1} parent=0 // pred_region
    _
  $region17: #{mlp_forward.1} parent=0 // pred_fallthru
    _
  // Predicated region
  $region18: #{mlp_forward.1} parent=0 // pred_check
    _
  $region19: #{mlp_forward.1} parent=0 // pred_check_branch
    %21 = sbr.rel (0) target = $region21
  $region20: #{mlp_forward.1} parent=0 // pred_region
    _
  $region21: #{mlp_forward.1} parent=0 // pred_fallthru
    _
  // Predicated region
  $region22: #{mlp_forward.1} parent=0 // pred_check
    _
  $region23: #{mlp_forward.1} parent=0 // pred_check_branch
    %23 = sbr.rel (0) target = $region25
  $region24: #{mlp_forward.1} parent=0 // pred_region
    _
  $region25: #{mlp_forward.1} parent=0 // pred_fallthru
    _
  // Predicated region
  $region26: #{mlp_forward.1} parent=0 // pred_check
    _
  $region27: #{mlp_forward.1} parent=0 // pred_check_branch
    %25 = sbr.rel (0) target = $region29
  $region28: #{mlp_forward.1} parent=0 // pred_region
    _
  $region29: #{mlp_forward.1} parent=0 // pred_fallthru
    _
  %v27 = vld [vmem:[%s0] sm:$0xff]
  %v28 = vld [vmem:[%s0 + $0x8] sm:$0xff]
  %v29 = vld [vmem:[%s0 + $0x10] sm:$0xff]
  %v30 = vld [vmem:[%s0 + $0x18] sm:$0xff]
  %v31 = vld [vmem:[%s0 + $0x20] sm:$0xff]
  %v32 = vld [vmem:[%s0 + $0x28] sm:$0xff]
  %v33 = vld [vmem:[%s0 + $0x30] sm:$0xff]
  %v34 = vld [vmem:[%s0 + $0x38] sm:$0xff]
  %v35 = vld [vmem:[%s0 + $0x40] sm:$0xff]
  %v36 = vld [vmem:[%s0 + $0x48] sm:$0xff]
  %v37 = vld [vmem:[%s0 + $0x50] sm:$0xff]
  %v38 = vld [vmem:[%s0 + $0x58] sm:$0xff]
  %v39 = vld [vmem:[%s0 + $0x60] sm:$0xff]
  %v40 = vld [vmem:[%s0 + $0x68] sm:$0xff]
  %v41 = vld [vmem:[%s0 + $0x70] sm:$0xff]
  %v42 = vld [vmem:[%s0 + $0x78] sm:$0xff]
  %v43 = vld [vmem:[%s0 + $0x80] sm:$0xff]
  %v44 = vld [vmem:[%s0 + $0x88] sm:$0xff]
  %v45 = vld [vmem:[%s0 + $0x90] sm:$0xff]
  %v46 = vld [vmem:[%s0 + $0x98] sm:$0xff]
  %v47 = vld [vmem:[%s0 + $0xa0] sm:$0xff]
  %v48 = vld [vmem:[%s0 + $0xa8] sm:$0xff]
  %v49 = vld [vmem:[%s0 + $0xb0] sm:$0xff]
  %v50 = vld [vmem:[%s0 + $0xb8] sm:$0xff]
  %v51 = vld [vmem:[%s0 + $0xc0] sm:$0xff]
  %v52 = vld [vmem:[%s0 + $0xc8] sm:$0xff]
  %v53 = vld [vmem:[%s0 + $0xd0] sm:$0xff]
  %v54 = vld [vmem:[%s0 + $0xd8] sm:$0xff]
  %v55 = vld [vmem:[%s0 + $0xe0] sm:$0xff]
  %v56 = vld [vmem:[%s0 + $0xe8] sm:$0xff]
  %v57 = vld [vmem:[%s0 + $0xf0] sm:$0xff]
  %v58 = vld [vmem:[%s0 + $0xf8] sm:$0xff]
  %v59 = vld [vmem:[%s0 + $0x100] sm:$0xff]
  %v60 = vld [vmem:[%s0 + $0x108] sm:$0xff]
  %v61 = vld [vmem:[%s0 + $0x110] sm:$0xff]
  %v62 = vld [vmem:[%s0 + $0x118] sm:$0xff]
  %v63 = vld [vmem:[%s0 + $0x120] sm:$0xff]
  %v64 = vld [vmem:[%s0 + $0x128] sm:$0xff]
  %v65 = vld [vmem:[%s0 + $0x130] sm:$0xff]
  %v66 = vld [vmem:[%s0 + $0x138] sm:$0xff]
  %v67 = vld [vmem:[%s0 + $0x140] sm:$0xff]
  %v68 = vld [vmem:[%s0 + $0x148] sm:$0xff]
  %v69 = vld [vmem:[%s0 + $0x150] sm:$0xff]
  %v70 = vld [vmem:[%s0 + $0x158] sm:$0xff]
  %v71 = vld [vmem:[%s0 + $0x160] sm:$0xff]
  %v72 = vld [vmem:[%s0 + $0x168] sm:$0xff]
  %v73 = vld [vmem:[%s0 + $0x170] sm:$0xff]
  %v74 = vld [vmem:[%s0 + $0x178] sm:$0xff]
  %v75 = vld [vmem:[%s0 + $0x180] sm:$0xff]
  %v76 = vld [vmem:[%s0 + $0x188] sm:$0xff]
  %v77 = vld [vmem:[%s0 + $0x190] sm:$0xff]
  %v78 = vld [vmem:[%s0 + $0x198] sm:$0xff]
  %v79 = vld [vmem:[%s0 + $0x1a0] sm:$0xff]
  %v80 = vld [vmem:[%s0 + $0x1a8] sm:$0xff]
  %v81 = vld [vmem:[%s0 + $0x1b0] sm:$0xff]
  %v82 = vld [vmem:[%s0 + $0x1b8] sm:$0xff]
  %v83 = vld [vmem:[%s0 + $0x1c0] sm:$0xff]
  %v84 = vld [vmem:[%s0 + $0x1c8] sm:$0xff]
  %v85 = vld [vmem:[%s0 + $0x1d0] sm:$0xff]
  %v86 = vld [vmem:[%s0 + $0x1d8] sm:$0xff]
  %v87 = vld [vmem:[%s0 + $0x1e0] sm:$0xff]
  %v88 = vld [vmem:[%s0 + $0x1e8] sm:$0xff]
  %v89 = vld [vmem:[%s0 + $0x1f0] sm:$0xff]
  %v90 = vld [vmem:[%s0 + $0x1f8] sm:$0xff]
  %v91 = vld [vmem:[%s0 + $0x200] sm:$0xff]
  %v92 = vld [vmem:[%s0 + $0x208] sm:$0xff]
  %v93 = vld [vmem:[%s0 + $0x210] sm:$0xff]
  %v94 = vld [vmem:[%s0 + $0x218] sm:$0xff]
  %v95 = vld [vmem:[%s0 + $0x220] sm:$0xff]
  %v96 = vld [vmem:[%s0 + $0x228] sm:$0xff]
  %v97 = vld [vmem:[%s0 + $0x230] sm:$0xff]
  %v98 = vld [vmem:[%s0 + $0x238] sm:$0xff]
  %v99 = vld [vmem:[%s0 + $0x240] sm:$0xff]
  %v100 = vld [vmem:[%s0 + $0x248] sm:$0xff]
  %v101 = vld [vmem:[%s0 + $0x250] sm:$0xff]
  %v102 = vld [vmem:[%s0 + $0x258] sm:$0xff]
  %v103 = vld [vmem:[%s0 + $0x260] sm:$0xff]
  %v104 = vld [vmem:[%s0 + $0x268] sm:$0xff]
  %v105 = vld [vmem:[%s0 + $0x270] sm:$0xff]
  %v106 = vld [vmem:[%s0 + $0x278] sm:$0xff]
  %v107 = vld [vmem:[%s0 + $0x280] sm:$0xff]
  %v108 = vld [vmem:[%s0 + $0x288] sm:$0xff]
  %v109 = vld [vmem:[%s0 + $0x290] sm:$0xff]
  %v110 = vld [vmem:[%s0 + $0x298] sm:$0xff]
  %v111 = vld [vmem:[%s0 + $0x2a0] sm:$0xff]
  %v112 = vld [vmem:[%s0 + $0x2a8] sm:$0xff]
  %v113 = vld [vmem:[%s0 + $0x2b0] sm:$0xff]
  %v114 = vld [vmem:[%s0 + $0x2b8] sm:$0xff]
  %v115 = vld [vmem:[%s0 + $0x2c0] sm:$0xff]
  %v116 = vld [vmem:[%s0 + $0x2c8] sm:$0xff]
  %v117 = vld [vmem:[%s0 + $0x2d0] sm:$0xff]
  %v118 = vld [vmem:[%s0 + $0x2d8] sm:$0xff]
  %v119 = vld [vmem:[%s0 + $0x2e0] sm:$0xff]
  %v120 = vld [vmem:[%s0 + $0x2e8] sm:$0xff]
  %v121 = vld [vmem:[%s0 + $0x2f0] sm:$0xff]
  %v122 = vld [vmem:[%s0 + $0x2f8] sm:$0xff]
  %v123 = vld [vmem:[%s0 + $0x300] sm:$0xff]
  %v124 = vld [vmem:[%s0 + $0x308] sm:$0xff]
  %v125 = vld [vmem:[%s0 + $0x310] sm:$0xff]
  %v126 = vld [vmem:[%s0 + $0x318] sm:$0xff]
  %v127 = vld [vmem:[%s0 + $0x320] sm:$0xff]
  %v128 = vld [vmem:[%s0 + $0x328] sm:$0xff]
  %v129 = vld [vmem:[%s0 + $0x330] sm:$0xff]
  %v130 = vld [vmem:[%s0 + $0x338] sm:$0xff]
  %v131 = vld [vmem:[%s0 + $0x340] sm:$0xff]
  %v132 = vld [vmem:[%s0 + $0x348] sm:$0xff]
  %v133 = vld [vmem:[%s0 + $0x350] sm:$0xff]
  %v134 = vld [vmem:[%s0 + $0x358] sm:$0xff]
  %v135 = vld [vmem:[%s0 + $0x360] sm:$0xff]
  %v136 = vld [vmem:[%s0 + $0x368] sm:$0xff]
  %v137 = vld [vmem:[%s0 + $0x370] sm:$0xff]
  %v138 = vld [vmem:[%s0 + $0x378] sm:$0xff]
  %v139 = vpack.c.bf16 %v34, %v27
  %v140 = vpack.c.bf16 %v35, %v28
  %v141 = vpack.c.bf16 %v36, %v29
  %v142 = vpack.c.bf16 %v37, %v30
  %v143 = vpack.c.bf16 %v38, %v31
  %v144 = vpack.c.bf16 %v39, %v32
  %v145 = vpack.c.bf16 %v40, %v33
  %v146 = vpack.c.bf16 %v48, %v41
  %v147 = vpack.c.bf16 %v49, %v42
  %v148 = vpack.c.bf16 %v50, %v43
  %v149 = vpack.c.bf16 %v51, %v44
  %v150 = vpack.c.bf16 %v52, %v45
  %v151 = vpack.c.bf16 %v53, %v46
  %v152 = vpack.c.bf16 %v54, %v47
  %v153 = vpack.c.bf16 %v62, %v55
  %v154 = vpack.c.bf16 %v63, %v56
  %v155 = vpack.c.bf16 %v64, %v57
  %v156 = vpack.c.bf16 %v65, %v58
  %v157 = vpack.c.bf16 %v66, %v59
  %v158 = vpack.c.bf16 %v67, %v60
  %v159 = vpack.c.bf16 %v68, %v61
  %v160 = vpack.c.bf16 %v76, %v69
  %v161 = vpack.c.bf16 %v77, %v70
  %v162 = vpack.c.bf16 %v78, %v71
  %v163 = vpack.c.bf16 %v79, %v72
  %v164 = vpack.c.bf16 %v80, %v73
  %v165 = vpack.c.bf16 %v81, %v74
  %v166 = vpack.c.bf16 %v82, %v75
  %v167 = vpack.c.bf16 %v90, %v83
  %v168 = vpack.c.bf16 %v91, %v84
  %v169 = vpack.c.bf16 %v92, %v85
  %v170 = vpack.c.bf16 %v93, %v86
  %v171 = vpack.c.bf16 %v94, %v87
  %v172 = vpack.c.bf16 %v95, %v88
  %v173 = vpack.c.bf16 %v96, %v89
  %v174 = vpack.c.bf16 %v104, %v97
  %v175 = vpack.c.bf16 %v105, %v98
  %v176 = vpack.c.bf16 %v106, %v99
  %v177 = vpack.c.bf16 %v107, %v100
  %v178 = vpack.c.bf16 %v108, %v101
  %v179 = vpack.c.bf16 %v109, %v102
  %v180 = vpack.c.bf16 %v110, %v103
  %v181 = vpack.c.bf16 %v118, %v111
  %v182 = vpack.c.bf16 %v119, %v112
  %v183 = vpack.c.bf16 %v120, %v113
  %v184 = vpack.c.bf16 %v121, %v114
  %v185 = vpack.c.bf16 %v122, %v115
  %v186 = vpack.c.bf16 %v123, %v116
  %v187 = vpack.c.bf16 %v124, %v117
  %v188 = vpack.c.bf16 %v132, %v125
  %v189 = vpack.c.bf16 %v133, %v126
  %v190 = vpack.c.bf16 %v134, %v127
  %v191 = vpack.c.bf16 %v135, %v128
  %v192 = vpack.c.bf16 %v136, %v129
  %v193 = vpack.c.bf16 %v137, %v130
  %v194 = vpack.c.bf16 %v138, %v131
  %v195 = vld [vmem:[%s1] sm:$0xff]
  %v196 = vld [vmem:[%s1 + $0x8] sm:$0xff]
  %v197 = vld [vmem:[%s1 + $0x10] sm:$0xff]
  %v198 = vld [vmem:[%s1 + $0x18] sm:$0xff]
  %v199 = vld [vmem:[%s1 + $0x20] sm:$0xff]
  %v200 = vld [vmem:[%s1 + $0x28] sm:$0xff]
  %v201 = vld [vmem:[%s1 + $0x30] sm:$0xff]
  %v202 = vld [vmem:[%s1 + $0x38] sm:$0xff]
  %v203 = vld [vmem:[%s1 + $0x40] sm:$0xff]
  %v204 = vld [vmem:[%s1 + $0x48] sm:$0xff]
  %v205 = vld [vmem:[%s1 + $0x50] sm:$0xff]
  %v206 = vld [vmem:[%s1 + $0x58] sm:$0xff]
  %v207 = vld [vmem:[%s1 + $0x60] sm:$0xff]
  %v208 = vld [vmem:[%s1 + $0x68] sm:$0xff]
  %v209 = vld [vmem:[%s1 + $0x70] sm:$0xff]
  %v210 = vld [vmem:[%s1 + $0x78] sm:$0xff]
  %v211 = vld [vmem:[%s1 + $0x80] sm:$0xff]
  %v212 = vld [vmem:[%s1 + $0x88] sm:$0xff]
  %v213 = vld [vmem:[%s1 + $0x90] sm:$0xff]
  %v214 = vld [vmem:[%s1 + $0x98] sm:$0xff]
  %v215 = vld [vmem:[%s1 + $0xa0] sm:$0xff]
  %v216 = vld [vmem:[%s1 + $0xa8] sm:$0xff]
  %v217 = vld [vmem:[%s1 + $0xb0] sm:$0xff]
  %v218 = vld [vmem:[%s1 + $0xb8] sm:$0xff]
  %v219 = vld [vmem:[%s1 + $0xc0] sm:$0xff]
  %v220 = vld [vmem:[%s1 + $0xc8] sm:$0xff]
  %v221 = vld [vmem:[%s1 + $0xd0] sm:$0xff]
  %v222 = vld [vmem:[%s1 + $0xd8] sm:$0xff]
  %v223 = vld [vmem:[%s1 + $0xe0] sm:$0xff]
  %v224 = vld [vmem:[%s1 + $0xe8] sm:$0xff]
  %v225 = vld [vmem:[%s1 + $0xf0] sm:$0xff]
  %v226 = vld [vmem:[%s1 + $0xf8] sm:$0xff]
  %v227 = vld [vmem:[%s1 + $0x100] sm:$0xff]
  %v228 = vld [vmem:[%s1 + $0x108] sm:$0xff]
  %v229 = vld [vmem:[%s1 + $0x110] sm:$0xff]
  %v230 = vld [vmem:[%s1 + $0x118] sm:$0xff]
  %v231 = vld [vmem:[%s1 + $0x120] sm:$0xff]
  %v232 = vld [vmem:[%s1 + $0x128] sm:$0xff]
  %v233 = vld [vmem:[%s1 + $0x130] sm:$0xff]
  %v234 = vld [vmem:[%s1 + $0x138] sm:$0xff]
  %v235 = vld [vmem:[%s1 + $0x140] sm:$0xff]
  %v236 = vld [vmem:[%s1 + $0x148] sm:$0xff]
  %v237 = vld [vmem:[%s1 + $0x150] sm:$0xff]
  %v238 = vld [vmem:[%s1 + $0x158] sm:$0xff]
  %v239 = vld [vmem:[%s1 + $0x160] sm:$0xff]
  %v240 = vld [vmem:[%s1 + $0x168] sm:$0xff]
  %v241 = vld [vmem:[%s1 + $0x170] sm:$0xff]
  %v242 = vld [vmem:[%s1 + $0x178] sm:$0xff]
  %v243 = vld [vmem:[%s1 + $0x180] sm:$0xff]
  %v244 = vld [vmem:[%s1 + $0x188] sm:$0xff]
  %v245 = vld [vmem:[%s1 + $0x190] sm:$0xff]
  %v246 = vld [vmem:[%s1 + $0x198] sm:$0xff]
  %v247 = vld [vmem:[%s1 + $0x1a0] sm:$0xff]
  %v248 = vld [vmem:[%s1 + $0x1a8] sm:$0xff]
  %v249 = vld [vmem:[%s1 + $0x1b0] sm:$0xff]
  %v250 = vld [vmem:[%s1 + $0x1b8] sm:$0xff]
  %v251 = vld [vmem:[%s1 + $0x1c0] sm:$0xff]
  %v252 = vld [vmem:[%s1 + $0x1c8] sm:$0xff]
  %v253 = vld [vmem:[%s1 + $0x1d0] sm:$0xff]
  %v254 = vld [vmem:[%s1 + $0x1d8] sm:$0xff]
  %v255 = vld [vmem:[%s1 + $0x1e0] sm:$0xff]
  %v256 = vld [vmem:[%s1 + $0x1e8] sm:$0xff]
  %v257 = vld [vmem:[%s1 + $0x1f0] sm:$0xff]
  %v258 = vld [vmem:[%s1 + $0x1f8] sm:$0xff]
  %v259 = vld [vmem:[%s1 + $0x200] sm:$0xff]
  %v260 = vld [vmem:[%s1 + $0x208] sm:$0xff]
  %v261 = vld [vmem:[%s1 + $0x210] sm:$0xff]
  %v262 = vld [vmem:[%s1 + $0x218] sm:$0xff]
  %v263 = vld [vmem:[%s1 + $0x220] sm:$0xff]
  %v264 = vld [vmem:[%s1 + $0x228] sm:$0xff]
  %v265 = vld [vmem:[%s1 + $0x230] sm:$0xff]
  %v266 = vld [vmem:[%s1 + $0x238] sm:$0xff]
  %v267 = vld [vmem:[%s1 + $0x240] sm:$0xff]
  %v268 = vld [vmem:[%s1 + $0x248] sm:$0xff]
  %v269 = vld [vmem:[%s1 + $0x250] sm:$0xff]
  %v270 = vld [vmem:[%s1 + $0x258] sm:$0xff]
  %v271 = vld [vmem:[%s1 + $0x260] sm:$0xff]
  %v272 = vld [vmem:[%s1 + $0x268] sm:$0xff]
  %v273 = vld [vmem:[%s1 + $0x270] sm:$0xff]
  %v274 = vld [vmem:[%s1 + $0x278] sm:$0xff]
  %v275 = vld [vmem:[%s1 + $0x280] sm:$0xff]
  %v276 = vld [vmem:[%s1 + $0x288] sm:$0xff]
  %v277 = vld [vmem:[%s1 + $0x290] sm:$0xff]
  %v278 = vld [vmem:[%s1 + $0x298] sm:$0xff]
  %v279 = vld [vmem:[%s1 + $0x2a0] sm:$0xff]
  %v280 = vld [vmem:[%s1 + $0x2a8] sm:$0xff]
  %v281 = vld [vmem:[%s1 + $0x2b0] sm:$0xff]
  %v282 = vld [vmem:[%s1 + $0x2b8] sm:$0xff]
  %v283 = vld [vmem:[%s1 + $0x2c0] sm:$0xff]
  %v284 = vld [vmem:[%s1 + $0x2c8] sm:$0xff]
  %v285 = vld [vmem:[%s1 + $0x2d0] sm:$0xff]
  %v286 = vld [vmem:[%s1 + $0x2d8] sm:$0xff]
  %v287 = vld [vmem:[%s1 + $0x2e0] sm:$0xff]
  %v288 = vld [vmem:[%s1 + $0x2e8] sm:$0xff]
  %v289 = vld [vmem:[%s1 + $0x2f0] sm:$0xff]
  %v290 = vld [vmem:[%s1 + $0x2f8] sm:$0xff]
  %v291 = vld [vmem:[%s1 + $0x300] sm:$0xff]
  %v292 = vld [vmem:[%s1 + $0x308] sm:$0xff]
  %v293 = vld [vmem:[%s1 + $0x310] sm:$0xff]
  %v294 = vld [vmem:[%s1 + $0x318] sm:$0xff]
  %v295 = vld [vmem:[%s1 + $0x320] sm:$0xff]
  %v296 = vld [vmem:[%s1 + $0x328] sm:$0xff]
  %v297 = vld [vmem:[%s1 + $0x330] sm:$0xff]
  %v298 = vld [vmem:[%s1 + $0x338] sm:$0xff]
  %v299 = vld [vmem:[%s1 + $0x340] sm:$0xff]
  %v300 = vld [vmem:[%s1 + $0x348] sm:$0xff]
  %v301 = vld [vmem:[%s1 + $0x350] sm:$0xff]
  %v302 = vld [vmem:[%s1 + $0x358] sm:$0xff]
  %v303 = vld [vmem:[%s1 + $0x360] sm:$0xff]
  %v304 = vld [vmem:[%s1 + $0x368] sm:$0xff]
  %v305 = vld [vmem:[%s1 + $0x370] sm:$0xff]
  %v306 = vld [vmem:[%s1 + $0x378] sm:$0xff]
  %v307 = vld [vmem:[%s1 + $0x380] sm:$0xff]
  %v308 = vld [vmem:[%s1 + $0x388] sm:$0xff]
  %v309 = vld [vmem:[%s1 + $0x390] sm:$0xff]
  %v310 = vld [vmem:[%s1 + $0x398] sm:$0xff]
  %v311 = vld [vmem:[%s1 + $0x3a0] sm:$0xff]
  %v312 = vld [vmem:[%s1 + $0x3a8] sm:$0xff]
  %v313 = vld [vmem:[%s1 + $0x3b0] sm:$0xff]
  %v314 = vld [vmem:[%s1 + $0x3b8] sm:$0xff]
  %v315 = vld [vmem:[%s1 + $0x3c0] sm:$0xff]
  %v316 = vld [vmem:[%s1 + $0x3c8] sm:$0xff]
  %v317 = vld [vmem:[%s1 + $0x3d0] sm:$0xff]
  %v318 = vld [vmem:[%s1 + $0x3d8] sm:$0xff]
  %v319 = vld [vmem:[%s1 + $0x3e0] sm:$0xff]
  %v320 = vld [vmem:[%s1 + $0x3e8] sm:$0xff]
  %v321 = vld [vmem:[%s1 + $0x3f0] sm:$0xff]
  %v322 = vld [vmem:[%s1 + $0x3f8] sm:$0xff]
  %v323 = vld [vmem:[%s1 + $0x400] sm:$0xff]
  %v324 = vld [vmem:[%s1 + $0x408] sm:$0xff]
  %v325 = vld [vmem:[%s1 + $0x410] sm:$0xff]
  %v326 = vld [vmem:[%s1 + $0x418] sm:$0xff]
  %v327 = vld [vmem:[%s1 + $0x420] sm:$0xff]
  %v328 = vld [vmem:[%s1 + $0x428] sm:$0xff]
  %v329 = vld [vmem:[%s1 + $0x430] sm:$0xff]
  %v330 = vld [vmem:[%s1 + $0x438] sm:$0xff]
  %v331 = vld [vmem:[%s1 + $0x440] sm:$0xff]
  %v332 = vld [vmem:[%s1 + $0x448] sm:$0xff]
  %v333 = vld [vmem:[%s1 + $0x450] sm:$0xff]
  %v334 = vld [vmem:[%s1 + $0x458] sm:$0xff]
  %v335 = vld [vmem:[%s1 + $0x460] sm:$0xff]
  %v336 = vld [vmem:[%s1 + $0x468] sm:$0xff]
  %v337 = vld [vmem:[%s1 + $0x470] sm:$0xff]
  %v338 = vld [vmem:[%s1 + $0x478] sm:$0xff]
  %v339 = vld [vmem:[%s1 + $0x480] sm:$0xff]
  %v340 = vld [vmem:[%s1 + $0x488] sm:$0xff]
  %v341 = vld [vmem:[%s1 + $0x490] sm:$0xff]
  %v342 = vld [vmem:[%s1 + $0x498] sm:$0xff]
  %v343 = vld [vmem:[%s1 + $0x4a0] sm:$0xff]
  %v344 = vld [vmem:[%s1 + $0x4a8] sm:$0xff]
  %v345 = vld [vmem:[%s1 + $0x4b0] sm:$0xff]
  %v346 = vld [vmem:[%s1 + $0x4b8] sm:$0xff]
  %v347 = vld [vmem:[%s1 + $0x4c0] sm:$0xff]
  %v348 = vld [vmem:[%s1 + $0x4c8] sm:$0xff]
  %v349 = vld [vmem:[%s1 + $0x4d0] sm:$0xff]
  %v350 = vld [vmem:[%s1 + $0x4d8] sm:$0xff]
  %v351 = vld [vmem:[%s1 + $0x4e0] sm:$0xff]
  %v352 = vld [vmem:[%s1 + $0x4e8] sm:$0xff]
  %v353 = vld [vmem:[%s1 + $0x4f0] sm:$0xff]
  %v354 = vld [vmem:[%s1 + $0x4f8] sm:$0xff]
  %v355 = vld [vmem:[%s1 + $0x500] sm:$0xff]
  %v356 = vld [vmem:[%s1 + $0x508] sm:$0xff]
  %v357 = vld [vmem:[%s1 + $0x510] sm:$0xff]
  %v358 = vld [vmem:[%s1 + $0x518] sm:$0xff]
  %v359 = vld [vmem:[%s1 + $0x520] sm:$0xff]
  %v360 = vld [vmem:[%s1 + $0x528] sm:$0xff]
  %v361 = vld [vmem:[%s1 + $0x530] sm:$0xff]
  %v362 = vld [vmem:[%s1 + $0x538] sm:$0xff]
  %v363 = vld [vmem:[%s1 + $0x540] sm:$0xff]
  %v364 = vld [vmem:[%s1 + $0x548] sm:$0xff]
  %v365 = vld [vmem:[%s1 + $0x550] sm:$0xff]
  %v366 = vld [vmem:[%s1 + $0x558] sm:$0xff]
  %v367 = vld [vmem:[%s1 + $0x560] sm:$0xff]
  %v368 = vld [vmem:[%s1 + $0x568] sm:$0xff]
  %v369 = vld [vmem:[%s1 + $0x570] sm:$0xff]
  %v370 = vld [vmem:[%s1 + $0x578] sm:$0xff]
  %v371 = vld [vmem:[%s1 + $0x580] sm:$0xff]
  %v372 = vld [vmem:[%s1 + $0x588] sm:$0xff]
  %v373 = vld [vmem:[%s1 + $0x590] sm:$0xff]
  %v374 = vld [vmem:[%s1 + $0x598] sm:$0xff]
  %v375 = vld [vmem:[%s1 + $0x5a0] sm:$0xff]
  %v376 = vld [vmem:[%s1 + $0x5a8] sm:$0xff]
  %v377 = vld [vmem:[%s1 + $0x5b0] sm:$0xff]
  %v378 = vld [vmem:[%s1 + $0x5b8] sm:$0xff]
  %v379 = vld [vmem:[%s1 + $0x5c0] sm:$0xff]
  %v380 = vld [vmem:[%s1 + $0x5c8] sm:$0xff]
  %v381 = vld [vmem:[%s1 + $0x5d0] sm:$0xff]
  %v382 = vld [vmem:[%s1 + $0x5d8] sm:$0xff]
  %v383 = vld [vmem:[%s1 + $0x5e0] sm:$0xff]
  %v384 = vld [vmem:[%s1 + $0x5e8] sm:$0xff]
  %v385 = vld [vmem:[%s1 + $0x5f0] sm:$0xff]
  %v386 = vld [vmem:[%s1 + $0x5f8] sm:$0xff]
  %v387 = vld [vmem:[%s1 + $0x600] sm:$0xff]
  %v388 = vld [vmem:[%s1 + $0x608] sm:$0xff]
  %v389 = vld [vmem:[%s1 + $0x610] sm:$0xff]
  %v390 = vld [vmem:[%s1 + $0x618] sm:$0xff]
  %v587 = vunpack.c.l.b16 %v195
  %v588 = vunpack.c.h.b16 %v195
  %v589 = vunpack.c.l.b16 %v196
  %v590 = vunpack.c.h.b16 %v196
  %v591 = vunpack.c.l.b16 %v197
  %v592 = vunpack.c.h.b16 %v197
  %v593 = vunpack.c.l.b16 %v198
  %v594 = vunpack.c.h.b16 %v198
  %v595 = vunpack.c.l.b16 %v199
  %v596 = vunpack.c.h.b16 %v199
  %v597 = vunpack.c.l.b16 %v200
  %v598 = vunpack.c.h.b16 %v200
  %v599 = vunpack.c.l.b16 %v201
  %v600 = vunpack.c.h.b16 %v201
  %v601 = vunpack.c.l.b16 %v202
  %v602 = vunpack.c.h.b16 %v202
  %v603 = vunpack.c.l.b16 %v203
  %v604 = vunpack.c.h.b16 %v203
  %v605 = vunpack.c.l.b16 %v204
  %v606 = vunpack.c.h.b16 %v204
  %v607 = vunpack.c.l.b16 %v205
  %v608 = vunpack.c.h.b16 %v205
  %v609 = vunpack.c.l.b16 %v206
  %v610 = vunpack.c.h.b16 %v206
  %v611 = vunpack.c.l.b16 %v207
  %v612 = vunpack.c.h.b16 %v207
  %v613 = vunpack.c.l.b16 %v208
  %v614 = vunpack.c.h.b16 %v208
  %v615 = vunpack.c.l.b16 %v209
  %v616 = vunpack.c.h.b16 %v209
  %v617 = vunpack.c.l.b16 %v210
  %v618 = vunpack.c.h.b16 %v210
  %v619 = vunpack.c.l.b16 %v211
  %v620 = vunpack.c.h.b16 %v211
  %v621 = vunpack.c.l.b16 %v212
  %v622 = vunpack.c.h.b16 %v212
  %v623 = vunpack.c.l.b16 %v213
  %v624 = vunpack.c.h.b16 %v213
  %v625 = vunpack.c.l.b16 %v214
  %v626 = vunpack.c.h.b16 %v214
  %v627 = vunpack.c.l.b16 %v215
  %v628 = vunpack.c.h.b16 %v215
  %v629 = vunpack.c.l.b16 %v216
  %v630 = vunpack.c.h.b16 %v216
  %v631 = vunpack.c.l.b16 %v217
  %v632 = vunpack.c.h.b16 %v217
  %v633 = vunpack.c.l.b16 %v218
  %v634 = vunpack.c.h.b16 %v218
  %v635 = vunpack.c.l.b16 %v219
  %v636 = vunpack.c.h.b16 %v219
  %v637 = vunpack.c.l.b16 %v220
  %v638 = vunpack.c.h.b16 %v220
  %v639 = vunpack.c.l.b16 %v221
  %v640 = vunpack.c.h.b16 %v221
  %v641 = vunpack.c.l.b16 %v222
  %v642 = vunpack.c.h.b16 %v222
  %v643 = vunpack.c.l.b16 %v223
  %v644 = vunpack.c.h.b16 %v223
  %v645 = vunpack.c.l.b16 %v224
  %v646 = vunpack.c.h.b16 %v224
  %v647 = vunpack.c.l.b16 %v225
  %v648 = vunpack.c.h.b16 %v225
  %v649 = vunpack.c.l.b16 %v226
  %v650 = vunpack.c.h.b16 %v226
  %v651 = vunpack.c.l.b16 %v227
  %v652 = vunpack.c.h.b16 %v227
  %v653 = vunpack.c.l.b16 %v228
  %v654 = vunpack.c.h.b16 %v228
  %v655 = vunpack.c.l.b16 %v229
  %v656 = vunpack.c.h.b16 %v229
  %v657 = vunpack.c.l.b16 %v230
  %v658 = vunpack.c.h.b16 %v230
  %v659 = vunpack.c.l.b16 %v231
  %v660 = vunpack.c.h.b16 %v231
  %v661 = vunpack.c.l.b16 %v232
  %v662 = vunpack.c.h.b16 %v232
  %v663 = vunpack.c.l.b16 %v233
  %v664 = vunpack.c.h.b16 %v233
  %v665 = vunpack.c.l.b16 %v234
  %v666 = vunpack.c.h.b16 %v234
  %v667 = vunpack.c.l.b16 %v235
  %v668 = vunpack.c.h.b16 %v235
  %v669 = vunpack.c.l.b16 %v236
  %v670 = vunpack.c.h.b16 %v236
  %v671 = vunpack.c.l.b16 %v237
  %v672 = vunpack.c.h.b16 %v237
  %v673 = vunpack.c.l.b16 %v238
  %v674 = vunpack.c.h.b16 %v238
  %v675 = vunpack.c.l.b16 %v239
  %v676 = vunpack.c.h.b16 %v239
  %v677 = vunpack.c.l.b16 %v240
  %v678 = vunpack.c.h.b16 %v240
  %v679 = vunpack.c.l.b16 %v241
  %v680 = vunpack.c.h.b16 %v241
  %v681 = vunpack.c.l.b16 %v242
  %v682 = vunpack.c.h.b16 %v242
  %v683 = vunpack.c.l.b16 %v243
  %v684 = vunpack.c.h.b16 %v243
  %v685 = vunpack.c.l.b16 %v244
  %v686 = vunpack.c.h.b16 %v244
  %v687 = vunpack.c.l.b16 %v245
  %v688 = vunpack.c.h.b16 %v245
  %v689 = vunpack.c.l.b16 %v246
  %v690 = vunpack.c.h.b16 %v246
  %v691 = vunpack.c.l.b16 %v247
  %v692 = vunpack.c.h.b16 %v247
  %v693 = vunpack.c.l.b16 %v248
  %v694 = vunpack.c.h.b16 %v248
  %v695 = vunpack.c.l.b16 %v249
  %v696 = vunpack.c.h.b16 %v249
  %v697 = vunpack.c.l.b16 %v250
  %v698 = vunpack.c.h.b16 %v250
  %v699 = vunpack.c.l.b16 %v251
  %v700 = vunpack.c.h.b16 %v251
  %v701 = vunpack.c.l.b16 %v252
  %v702 = vunpack.c.h.b16 %v252
  %v703 = vunpack.c.l.b16 %v253
  %v704 = vunpack.c.h.b16 %v253
  %v705 = vunpack.c.l.b16 %v254
  %v706 = vunpack.c.h.b16 %v254
  %v707 = vunpack.c.l.b16 %v255
  %v708 = vunpack.c.h.b16 %v255
  %v709 = vunpack.c.l.b16 %v256
  %v710 = vunpack.c.h.b16 %v256
  %v711 = vunpack.c.l.b16 %v257
  %v712 = vunpack.c.h.b16 %v257
  %v713 = vunpack.c.l.b16 %v258
  %v714 = vunpack.c.h.b16 %v258
  %v715 = vunpack.c.l.b16 %v259
  %v716 = vunpack.c.h.b16 %v259
  %v717 = vunpack.c.l.b16 %v260
  %v718 = vunpack.c.h.b16 %v260
  %v719 = vunpack.c.l.b16 %v261
  %v720 = vunpack.c.h.b16 %v261
  %v721 = vunpack.c.l.b16 %v262
  %v722 = vunpack.c.h.b16 %v262
  %v723 = vunpack.c.l.b16 %v263
  %v724 = vunpack.c.h.b16 %v263
  %v725 = vunpack.c.l.b16 %v264
  %v726 = vunpack.c.h.b16 %v264
  %v727 = vunpack.c.l.b16 %v265
  %v728 = vunpack.c.h.b16 %v265
  %v729 = vunpack.c.l.b16 %v266
  %v730 = vunpack.c.h.b16 %v266
  %v731 = vunpack.c.l.b16 %v267
  %v732 = vunpack.c.h.b16 %v267
  %v733 = vunpack.c.l.b16 %v268
  %v734 = vunpack.c.h.b16 %v268
  %v735 = vunpack.c.l.b16 %v269
  %v736 = vunpack.c.h.b16 %v269
  %v737 = vunpack.c.l.b16 %v270
  %v738 = vunpack.c.h.b16 %v270
  %v739 = vunpack.c.l.b16 %v271
  %v740 = vunpack.c.h.b16 %v271
  %v741 = vunpack.c.l.b16 %v272
  %v742 = vunpack.c.h.b16 %v272
  %v743 = vunpack.c.l.b16 %v273
  %v744 = vunpack.c.h.b16 %v273
  %v745 = vunpack.c.l.b16 %v274
  %v746 = vunpack.c.h.b16 %v274
  %v747 = vunpack.c.l.b16 %v275
  %v748 = vunpack.c.h.b16 %v275
  %v749 = vunpack.c.l.b16 %v276
  %v750 = vunpack.c.h.b16 %v276
  %v751 = vunpack.c.l.b16 %v277
  %v752 = vunpack.c.h.b16 %v277
  %v753 = vunpack.c.l.b16 %v278
  %v754 = vunpack.c.h.b16 %v278
  %v755 = vunpack.c.l.b16 %v279
  %v756 = vunpack.c.h.b16 %v279
  %v757 = vunpack.c.l.b16 %v280
  %v758 = vunpack.c.h.b16 %v280
  %v759 = vunpack.c.l.b16 %v281
  %v760 = vunpack.c.h.b16 %v281
  %v761 = vunpack.c.l.b16 %v282
  %v762 = vunpack.c.h.b16 %v282
  %v763 = vunpack.c.l.b16 %v283
  %v764 = vunpack.c.h.b16 %v283
  %v765 = vunpack.c.l.b16 %v284
  %v766 = vunpack.c.h.b16 %v284
  %v767 = vunpack.c.l.b16 %v285
  %v768 = vunpack.c.h.b16 %v285
  %v769 = vunpack.c.l.b16 %v286
  %v770 = vunpack.c.h.b16 %v286
  %v771 = vunpack.c.l.b16 %v287
  %v772 = vunpack.c.h.b16 %v287
  %v773 = vunpack.c.l.b16 %v288
  %v774 = vunpack.c.h.b16 %v288
  %v775 = vunpack.c.l.b16 %v289
  %v776 = vunpack.c.h.b16 %v289
  %v777 = vunpack.c.l.b16 %v290
  %v778 = vunpack.c.h.b16 %v290
  %v779 = vunpack.c.l.b16 %v291
  %v780 = vunpack.c.h.b16 %v291
  %v781 = vunpack.c.l.b16 %v292
  %v782 = vunpack.c.h.b16 %v292
  %v783 = vunpack.c.l.b16 %v293
  %v784 = vunpack.c.h.b16 %v293
  %v785 = vunpack.c.l.b16 %v294
  %v786 = vunpack.c.h.b16 %v294
  %v787 = vunpack.c.l.b16 %v295
  %v788 = vunpack.c.h.b16 %v295
  %v789 = vunpack.c.l.b16 %v296
  %v790 = vunpack.c.h.b16 %v296
  %v791 = vunpack.c.l.b16 %v297
  %v792 = vunpack.c.h.b16 %v297
  %v793 = vunpack.c.l.b16 %v298
  %v794 = vunpack.c.h.b16 %v298
  %v795 = vunpack.c.l.b16 %v299
  %v796 = vunpack.c.h.b16 %v299
  %v797 = vunpack.c.l.b16 %v300
  %v798 = vunpack.c.h.b16 %v300
  %v799 = vunpack.c.l.b16 %v301
  %v800 = vunpack.c.h.b16 %v301
  %v801 = vunpack.c.l.b16 %v302
  %v802 = vunpack.c.h.b16 %v302
  %v803 = vunpack.c.l.b16 %v303
  %v804 = vunpack.c.h.b16 %v303
  %v805 = vunpack.c.l.b16 %v304
  %v806 = vunpack.c.h.b16 %v304
  %v807 = vunpack.c.l.b16 %v305
  %v808 = vunpack.c.h.b16 %v305
  %v809 = vunpack.c.l.b16 %v306
  %v810 = vunpack.c.h.b16 %v306
  %v811 = vunpack.c.l.b16 %v307
  %v812 = vunpack.c.h.b16 %v307
  %v813 = vunpack.c.l.b16 %v308
  %v814 = vunpack.c.h.b16 %v308
  %v815 = vunpack.c.l.b16 %v309
  %v816 = vunpack.c.h.b16 %v309
  %v817 = vunpack.c.l.b16 %v310
  %v818 = vunpack.c.h.b16 %v310
  %v819 = vunpack.c.l.b16 %v311
  %v820 = vunpack.c.h.b16 %v311
  %v821 = vunpack.c.l.b16 %v312
  %v822 = vunpack.c.h.b16 %v312
  %v823 = vunpack.c.l.b16 %v313
  %v824 = vunpack.c.h.b16 %v313
  %v825 = vunpack.c.l.b16 %v314
  %v826 = vunpack.c.h.b16 %v314
  %v827 = vunpack.c.l.b16 %v315
  %v828 = vunpack.c.h.b16 %v315
  %v829 = vunpack.c.l.b16 %v316
  %v830 = vunpack.c.h.b16 %v316
  %v831 = vunpack.c.l.b16 %v317
  %v832 = vunpack.c.h.b16 %v317
  %v833 = vunpack.c.l.b16 %v318
  %v834 = vunpack.c.h.b16 %v318
  %v835 = vunpack.c.l.b16 %v319
  %v836 = vunpack.c.h.b16 %v319
  %v837 = vunpack.c.l.b16 %v320
  %v838 = vunpack.c.h.b16 %v320
  %v839 = vunpack.c.l.b16 %v321
  %v840 = vunpack.c.h.b16 %v321
  %v841 = vunpack.c.l.b16 %v322
  %v842 = vunpack.c.h.b16 %v322
  %v843 = vunpack.c.l.b16 %v323
  %v844 = vunpack.c.h.b16 %v323
  %v845 = vunpack.c.l.b16 %v324
  %v846 = vunpack.c.h.b16 %v324
  %v847 = vunpack.c.l.b16 %v325
  %v848 = vunpack.c.h.b16 %v325
  %v849 = vunpack.c.l.b16 %v326
  %v850 = vunpack.c.h.b16 %v326
  %v851 = vunpack.c.l.b16 %v327
  %v852 = vunpack.c.h.b16 %v327
  %v853 = vunpack.c.l.b16 %v328
  %v854 = vunpack.c.h.b16 %v328
  %v855 = vunpack.c.l.b16 %v329
  %v856 = vunpack.c.h.b16 %v329
  %v857 = vunpack.c.l.b16 %v330
  %v858 = vunpack.c.h.b16 %v330
  %v859 = vunpack.c.l.b16 %v331
  %v860 = vunpack.c.h.b16 %v331
  %v861 = vunpack.c.l.b16 %v332
  %v862 = vunpack.c.h.b16 %v332
  %v863 = vunpack.c.l.b16 %v333
  %v864 = vunpack.c.h.b16 %v333
  %v865 = vunpack.c.l.b16 %v334
  %v866 = vunpack.c.h.b16 %v334
  %v867 = vunpack.c.l.b16 %v335
  %v868 = vunpack.c.h.b16 %v335
  %v869 = vunpack.c.l.b16 %v336
  %v870 = vunpack.c.h.b16 %v336
  %v871 = vunpack.c.l.b16 %v337
  %v872 = vunpack.c.h.b16 %v337
  %v873 = vunpack.c.l.b16 %v338
  %v874 = vunpack.c.h.b16 %v338
  %v875 = vunpack.c.l.b16 %v339
  %v876 = vunpack.c.h.b16 %v339
  %v877 = vunpack.c.l.b16 %v340
  %v878 = vunpack.c.h.b16 %v340
  %v879 = vunpack.c.l.b16 %v341
  %v880 = vunpack.c.h.b16 %v341
  %v881 = vunpack.c.l.b16 %v342
  %v882 = vunpack.c.h.b16 %v342
  %v883 = vunpack.c.l.b16 %v343
  %v884 = vunpack.c.h.b16 %v343
  %v885 = vunpack.c.l.b16 %v344
  %v886 = vunpack.c.h.b16 %v344
  %v887 = vunpack.c.l.b16 %v345
  %v888 = vunpack.c.h.b16 %v345
  %v889 = vunpack.c.l.b16 %v346
  %v890 = vunpack.c.h.b16 %v346
  %v891 = vunpack.c.l.b16 %v347
  %v892 = vunpack.c.h.b16 %v347
  %v893 = vunpack.c.l.b16 %v348
  %v894 = vunpack.c.h.b16 %v348
  %v895 = vunpack.c.l.b16 %v349
  %v896 = vunpack.c.h.b16 %v349
  %v897 = vunpack.c.l.b16 %v350
  %v898 = vunpack.c.h.b16 %v350
  %v899 = vunpack.c.l.b16 %v351
  %v900 = vunpack.c.h.b16 %v351
  %v901 = vunpack.c.l.b16 %v352
  %v902 = vunpack.c.h.b16 %v352
  %v903 = vunpack.c.l.b16 %v353
  %v904 = vunpack.c.h.b16 %v353
  %v905 = vunpack.c.l.b16 %v354
  %v906 = vunpack.c.h.b16 %v354
  %v907 = vunpack.c.l.b16 %v355
  %v908 = vunpack.c.h.b16 %v355
  %v909 = vunpack.c.l.b16 %v356
  %v910 = vunpack.c.h.b16 %v356
  %v911 = vunpack.c.l.b16 %v357
  %v912 = vunpack.c.h.b16 %v357
  %v913 = vunpack.c.l.b16 %v358
  %v914 = vunpack.c.h.b16 %v358
  %v915 = vunpack.c.l.b16 %v359
  %v916 = vunpack.c.h.b16 %v359
  %v917 = vunpack.c.l.b16 %v360
  %v918 = vunpack.c.h.b16 %v360
  %v919 = vunpack.c.l.b16 %v361
  %v920 = vunpack.c.h.b16 %v361
  %v921 = vunpack.c.l.b16 %v362
  %v922 = vunpack.c.h.b16 %v362
  %v923 = vunpack.c.l.b16 %v363
  %v924 = vunpack.c.h.b16 %v363
  %v925 = vunpack.c.l.b16 %v364
  %v926 = vunpack.c.h.b16 %v364
  %v927 = vunpack.c.l.b16 %v365
  %v928 = vunpack.c.h.b16 %v365
  %v929 = vunpack.c.l.b16 %v366
  %v930 = vunpack.c.h.b16 %v366
  %v931 = vunpack.c.l.b16 %v367
  %v932 = vunpack.c.h.b16 %v367
  %v933 = vunpack.c.l.b16 %v368
  %v934 = vunpack.c.h.b16 %v368
  %v935 = vunpack.c.l.b16 %v369
  %v936 = vunpack.c.h.b16 %v369
  %v937 = vunpack.c.l.b16 %v370
  %v938 = vunpack.c.h.b16 %v370
  %v939 = vunpack.c.l.b16 %v371
  %v940 = vunpack.c.h.b16 %v371
  %v941 = vunpack.c.l.b16 %v372
  %v942 = vunpack.c.h.b16 %v372
  %v943 = vunpack.c.l.b16 %v373
  %v944 = vunpack.c.h.b16 %v373
  %v945 = vunpack.c.l.b16 %v374
  %v946 = vunpack.c.h.b16 %v374
  %v947 = vunpack.c.l.b16 %v375
  %v948 = vunpack.c.h.b16 %v375
  %v949 = vunpack.c.l.b16 %v376
  %v950 = vunpack.c.h.b16 %v376
  %v951 = vunpack.c.l.b16 %v377
  %v952 = vunpack.c.h.b16 %v377
  %v953 = vunpack.c.l.b16 %v378
  %v954 = vunpack.c.h.b16 %v378
  %v955 = vunpack.c.l.b16 %v379
  %v956 = vunpack.c.h.b16 %v379
  %v957 = vunpack.c.l.b16 %v380
  %v958 = vunpack.c.h.b16 %v380
  %v959 = vunpack.c.l.b16 %v381
  %v960 = vunpack.c.h.b16 %v381
  %v961 = vunpack.c.l.b16 %v382
  %v962 = vunpack.c.h.b16 %v382
  %v963 = vunpack.c.l.b16 %v383
  %v964 = vunpack.c.h.b16 %v383
  %v965 = vunpack.c.l.b16 %v384
  %v966 = vunpack.c.h.b16 %v384
  %v967 = vunpack.c.l.b16 %v385
  %v968 = vunpack.c.h.b16 %v385
  %v969 = vunpack.c.l.b16 %v386
  %v970 = vunpack.c.h.b16 %v386
  %v971 = vunpack.c.l.b16 %v387
  %v972 = vunpack.c.h.b16 %v387
  %v973 = vunpack.c.l.b16 %v388
  %v974 = vunpack.c.h.b16 %v388
  %v975 = vunpack.c.l.b16 %v389
  %v976 = vunpack.c.h.b16 %v389
  %v977 = vunpack.c.l.b16 %v390
  %v978 = vunpack.c.h.b16 %v390
  %v979 = vpack.c.b16 %v591, %v587
  %v980 = vpack.c.b16 %v592, %v588
  %v981 = vpack.c.b16 %v593, %v589
  %v982 = vpack.c.b16 %v594, %v590
  %v983 = vpack.c.b16 %v599, %v595
  %v984 = vpack.c.b16 %v600, %v596
  %v985 = vpack.c.b16 %v601, %v597
  %v986 = vpack.c.b16 %v602, %v598
  %v987 = vpack.c.b16 %v607, %v603
  %v988 = vpack.c.b16 %v608, %v604
  %v989 = vpack.c.b16 %v609, %v605
  %v990 = vpack.c.b16 %v610, %v606
  %v991 = vpack.c.b16 %v615, %v611
  %v992 = vpack.c.b16 %v616, %v612
  %v993 = vpack.c.b16 %v617, %v613
  %v994 = vpack.c.b16 %v618, %v614
  %v995 = vpack.c.b16 %v623, %v619
  %v996 = vpack.c.b16 %v624, %v620
  %v997 = vpack.c.b16 %v625, %v621
  %v998 = vpack.c.b16 %v626, %v622
  %v999 = vpack.c.b16 %v631, %v627
  %v1000 = vpack.c.b16 %v632, %v628
  %v1001 = vpack.c.b16 %v633, %v629
  %v1002 = vpack.c.b16 %v634, %v630
  %v1003 = vpack.c.b16 %v639, %v635
  %v1004 = vpack.c.b16 %v640, %v636
  %v1005 = vpack.c.b16 %v641, %v637
  %v1006 = vpack.c.b16 %v642, %v638
  %v1007 = vpack.c.b16 %v647, %v643
  %v1008 = vpack.c.b16 %v648, %v644
  %v1009 = vpack.c.b16 %v649, %v645
  %v1010 = vpack.c.b16 %v650, %v646
  %v1011 = vpack.c.b16 %v655, %v651
  %v1012 = vpack.c.b16 %v656, %v652
  %v1013 = vpack.c.b16 %v657, %v653
  %v1014 = vpack.c.b16 %v658, %v654
  %v1015 = vpack.c.b16 %v663, %v659
  %v1016 = vpack.c.b16 %v664, %v660
  %v1017 = vpack.c.b16 %v665, %v661
  %v1018 = vpack.c.b16 %v666, %v662
  %v1019 = vpack.c.b16 %v671, %v667
  %v1020 = vpack.c.b16 %v672, %v668
  %v1021 = vpack.c.b16 %v673, %v669
  %v1022 = vpack.c.b16 %v674, %v670
  %v1023 = vpack.c.b16 %v679, %v675
  %v1024 = vpack.c.b16 %v680, %v676
  %v1025 = vpack.c.b16 %v681, %v677
  %v1026 = vpack.c.b16 %v682, %v678
  %v1027 = vpack.c.b16 %v687, %v683
  %v1028 = vpack.c.b16 %v688, %v684
  %v1029 = vpack.c.b16 %v689, %v685
  %v1030 = vpack.c.b16 %v690, %v686
  %v1031 = vpack.c.b16 %v695, %v691
  %v1032 = vpack.c.b16 %v696, %v692
  %v1033 = vpack.c.b16 %v697, %v693
  %v1034 = vpack.c.b16 %v698, %v694
  %v1035 = vpack.c.b16 %v703, %v699
  %v1036 = vpack.c.b16 %v704, %v700
  %v1037 = vpack.c.b16 %v705, %v701
  %v1038 = vpack.c.b16 %v706, %v702
  %v1039 = vpack.c.b16 %v711, %v707
  %v1040 = vpack.c.b16 %v712, %v708
  %v1041 = vpack.c.b16 %v713, %v709
  %v1042 = vpack.c.b16 %v714, %v710
  %v1043 = vpack.c.b16 %v719, %v715
  %v1044 = vpack.c.b16 %v720, %v716
  %v1045 = vpack.c.b16 %v721, %v717
  %v1046 = vpack.c.b16 %v722, %v718
  %v1047 = vpack.c.b16 %v727, %v723
  %v1048 = vpack.c.b16 %v728, %v724
  %v1049 = vpack.c.b16 %v729, %v725
  %v1050 = vpack.c.b16 %v730, %v726
  %v1051 = vpack.c.b16 %v735, %v731
  %v1052 = vpack.c.b16 %v736, %v732
  %v1053 = vpack.c.b16 %v737, %v733
  %v1054 = vpack.c.b16 %v738, %v734
  %v1055 = vpack.c.b16 %v743, %v739
  %v1056 = vpack.c.b16 %v744, %v740
  %v1057 = vpack.c.b16 %v745, %v741
  %v1058 = vpack.c.b16 %v746, %v742
  %v1059 = vpack.c.b16 %v751, %v747
  %v1060 = vpack.c.b16 %v752, %v748
  %v1061 = vpack.c.b16 %v753, %v749
  %v1062 = vpack.c.b16 %v754, %v750
  %v1063 = vpack.c.b16 %v759, %v755
  %v1064 = vpack.c.b16 %v760, %v756
  %v1065 = vpack.c.b16 %v761, %v757
  %v1066 = vpack.c.b16 %v762, %v758
  %v1067 = vpack.c.b16 %v767, %v763
  %v1068 = vpack.c.b16 %v768, %v764
  %v1069 = vpack.c.b16 %v769, %v765
  %v1070 = vpack.c.b16 %v770, %v766
  %v1071 = vpack.c.b16 %v775, %v771
  %v1072 = vpack.c.b16 %v776, %v772
  %v1073 = vpack.c.b16 %v777, %v773
  %v1074 = vpack.c.b16 %v778, %v774
  %v1075 = vpack.c.b16 %v783, %v779
  %v1076 = vpack.c.b16 %v784, %v780
  %v1077 = vpack.c.b16 %v785, %v781
  %v1078 = vpack.c.b16 %v786, %v782
  %v1079 = vpack.c.b16 %v791, %v787
  %v1080 = vpack.c.b16 %v792, %v788
  %v1081 = vpack.c.b16 %v793, %v789
  %v1082 = vpack.c.b16 %v794, %v790
  %v1083 = vpack.c.b16 %v799, %v795
  %v1084 = vpack.c.b16 %v800, %v796
  %v1085 = vpack.c.b16 %v801, %v797
  %v1086 = vpack.c.b16 %v802, %v798
  %v1087 = vpack.c.b16 %v807, %v803
  %v1088 = vpack.c.b16 %v808, %v804
  %v1089 = vpack.c.b16 %v809, %v805
  %v1090 = vpack.c.b16 %v810, %v806
  %v1091 = vpack.c.b16 %v815, %v811
  %v1092 = vpack.c.b16 %v816, %v812
  %v1093 = vpack.c.b16 %v817, %v813
  %v1094 = vpack.c.b16 %v818, %v814
  %v1095 = vpack.c.b16 %v823, %v819
  %v1096 = vpack.c.b16 %v824, %v820
  %v1097 = vpack.c.b16 %v825, %v821
  %v1098 = vpack.c.b16 %v826, %v822
  %v1099 = vpack.c.b16 %v831, %v827
  %v1100 = vpack.c.b16 %v832, %v828
  %v1101 = vpack.c.b16 %v833, %v829
  %v1102 = vpack.c.b16 %v834, %v830
  %v1103 = vpack.c.b16 %v839, %v835
  %v1104 = vpack.c.b16 %v840, %v836
  %v1105 = vpack.c.b16 %v841, %v837
  %v1106 = vpack.c.b16 %v842, %v838
  %v1107 = vpack.c.b16 %v847, %v843
  %v1108 = vpack.c.b16 %v848, %v844
  %v1109 = vpack.c.b16 %v849, %v845
  %v1110 = vpack.c.b16 %v850, %v846
  %v1111 = vpack.c.b16 %v855, %v851
  %v1112 = vpack.c.b16 %v856, %v852
  %v1113 = vpack.c.b16 %v857, %v853
  %v1114 = vpack.c.b16 %v858, %v854
  %v1115 = vpack.c.b16 %v863, %v859
  %v1116 = vpack.c.b16 %v864, %v860
  %v1117 = vpack.c.b16 %v865, %v861
  %v1118 = vpack.c.b16 %v866, %v862
  %v1119 = vpack.c.b16 %v871, %v867
  %v1120 = vpack.c.b16 %v872, %v868
  %v1121 = vpack.c.b16 %v873, %v869
  %v1122 = vpack.c.b16 %v874, %v870
  %v1123 = vpack.c.b16 %v879, %v875
  %v1124 = vpack.c.b16 %v880, %v876
  %v1125 = vpack.c.b16 %v881, %v877
  %v1126 = vpack.c.b16 %v882, %v878
  %v1127 = vpack.c.b16 %v887, %v883
  %v1128 = vpack.c.b16 %v888, %v884
  %v1129 = vpack.c.b16 %v889, %v885
  %v1130 = vpack.c.b16 %v890, %v886
  %v1131 = vpack.c.b16 %v895, %v891
  %v1132 = vpack.c.b16 %v896, %v892
  %v1133 = vpack.c.b16 %v897, %v893
  %v1134 = vpack.c.b16 %v898, %v894
  %v1135 = vpack.c.b16 %v903, %v899
  %v1136 = vpack.c.b16 %v904, %v900
  %v1137 = vpack.c.b16 %v905, %v901
  %v1138 = vpack.c.b16 %v906, %v902
  %v1139 = vpack.c.b16 %v911, %v907
  %v1140 = vpack.c.b16 %v912, %v908
  %v1141 = vpack.c.b16 %v913, %v909
  %v1142 = vpack.c.b16 %v914, %v910
  %v1143 = vpack.c.b16 %v919, %v915
  %v1144 = vpack.c.b16 %v920, %v916
  %v1145 = vpack.c.b16 %v921, %v917
  %v1146 = vpack.c.b16 %v922, %v918
  %v1147 = vpack.c.b16 %v927, %v923
  %v1148 = vpack.c.b16 %v928, %v924
  %v1149 = vpack.c.b16 %v929, %v925
  %v1150 = vpack.c.b16 %v930, %v926
  %v1151 = vpack.c.b16 %v935, %v931
  %v1152 = vpack.c.b16 %v936, %v932
  %v1153 = vpack.c.b16 %v937, %v933
  %v1154 = vpack.c.b16 %v938, %v934
  %v1155 = vpack.c.b16 %v943, %v939
  %v1156 = vpack.c.b16 %v944, %v940
  %v1157 = vpack.c.b16 %v945, %v941
  %v1158 = vpack.c.b16 %v946, %v942
  %v1159 = vpack.c.b16 %v951, %v947
  %v1160 = vpack.c.b16 %v952, %v948
  %v1161 = vpack.c.b16 %v953, %v949
  %v1162 = vpack.c.b16 %v954, %v950
  %v1163 = vpack.c.b16 %v959, %v955
  %v1164 = vpack.c.b16 %v960, %v956
  %v1165 = vpack.c.b16 %v961, %v957
  %v1166 = vpack.c.b16 %v962, %v958
  %v1167 = vpack.c.b16 %v967, %v963
  %v1168 = vpack.c.b16 %v968, %v964
  %v1169 = vpack.c.b16 %v969, %v965
  %v1170 = vpack.c.b16 %v970, %v966
  %v1171 = vpack.c.b16 %v975, %v971
  %v1172 = vpack.c.b16 %v976, %v972
  %v1173 = vpack.c.b16 %v977, %v973
  %v1174 = vpack.c.b16 %v978, %v974
  %vm1371 = vcmask 130048
  %v1373 = vsel %vm1371, %v145, 0
  %v1376 = vsel %vm1371, %v152, 0
  %v1379 = vsel %vm1371, %v159, 0
  %v1382 = vsel %vm1371, %v166, 0
  %v1385 = vsel %vm1371, %v173, 0
  %v1388 = vsel %vm1371, %v180, 0
  %v1391 = vsel %vm1371, %v187, 0
  %v1394 = vsel %vm1371, %v194, 0
  %1396 = vmatprep.subr.bf16.mxu0 %v980
  %1397 = vmatpush1.bf16.msra.mxu0 %v979
  %1398 = vmatprep.subr.bf16.mxu0 %v984
  %1399 = vmatpush1.bf16.msra.mxu0 %v983
  %1400 = vmatprep.subr.bf16.mxu0 %v988
  %1401 = vmatpush1.bf16.msra.mxu0 %v987
  %1402 = vmatprep.subr.bf16.mxu0 %v992
  %1403 = vmatpush1.bf16.msra.mxu0 %v991
  %1404 = vmatprep.subr.bf16.mxu0 %v996
  %1405 = vmatpush1.bf16.msra.mxu0 %v995
  %1406 = vmatprep.subr.bf16.mxu0 %v1000
  %1407 = vmatpush1.bf16.msra.mxu0 %v999
  %1408 = vmatprep.subr.bf16.mxu0 %v1004
  %1409 = vmatpush1.bf16.msra.mxu0 %v1003
  %1410 = vmatprep.subr.bf16.mxu0 %v1008
  %1411 = vmatpush1.bf16.msra.mxu0 %v1007
  %1412 = vmatprep.subr.bf16.mxu0 %v1012
  %1413 = vmatpush1.bf16.msra.mxu0 %v1011
  %1414 = vmatprep.subr.bf16.mxu0 %v1016
  %1415 = vmatpush1.bf16.msra.mxu0 %v1015
  %1416 = vmatprep.subr.bf16.mxu0 %v1020
  %1417 = vmatpush1.bf16.msra.mxu0 %v1019
  %1418 = vmatprep.subr.bf16.mxu0 %v1024
  %1419 = vmatpush1.bf16.msra.mxu0 %v1023
  %1420 = vmatprep.subr.bf16.mxu0 %v1028
  %1421 = vmatpush1.bf16.msra.mxu0 %v1027
  %1422 = vmatprep.subr.bf16.mxu0 %v1032
  %1423 = vmatpush1.bf16.msra.mxu0 %v1031
  %1424 = vmatprep.subr.bf16.mxu0 %v1036
  %1425 = vmatpush1.bf16.msra.mxu0 %v1035
  %1426 = vmatprep.subr.bf16.mxu0 %v1040
  %1427 = vmatpush1.bf16.msra.mxu0 %v1039
  %1428 = vmatprep.mubr.bf16.mxu0 %v140
  %1429 = vmatmul.mubr.bf16.gmra.mrb[0].mxu0 %v139
  %v1430 = vpop.f32.mrb[0].mxu0
  %v1431 = vadd.f32 0.0, %v1430
  %v1432 = vpop.f32.mrb[0].mxu0
  %v1433 = vadd.f32 0.0, %v1432
  %v1434 = vpop.f32.mrb[0].mxu0
  %v1435 = vadd.f32 0.0, %v1434
  %v1436 = vpop.f32.mrb[0].mxu0
  %v1437 = vadd.f32 0.0, %v1436
  %1438 = vmatprep.mubr.bf16.mxu0 %v147
  %1439 = vmatmul.mubr.bf16.gmra.mrb[0].mxu0 %v146
  %v1440 = vpop.f32.mrb[0].mxu0
  %v1441 = vadd.f32 0.0, %v1440
  %v1442 = vpop.f32.mrb[0].mxu0
  %v1443 = vadd.f32 0.0, %v1442
  %v1444 = vpop.f32.mrb[0].mxu0
  %v1445 = vadd.f32 0.0, %v1444
  %v1446 = vpop.f32.mrb[0].mxu0
  %v1447 = vadd.f32 0.0, %v1446
  %1448 = vmatprep.mubr.bf16.mxu0 %v154
  %1449 = vmatmul.mubr.bf16.gmra.mrb[0].mxu0 %v153
  %v1450 = vpop.f32.mrb[0].mxu0
  %v1451 = vadd.f32 0.0, %v1450
  %v1452 = vpop.f32.mrb[0].mxu0
  %v1453 = vadd.f32 0.0, %v1452
  %v1454 = vpop.f32.mrb[0].mxu0
  %v1455 = vadd.f32 0.0, %v1454
  %v1456 = vpop.f32.mrb[0].mxu0
  %v1457 = vadd.f32 0.0, %v1456
  %1458 = vmatprep.mubr.bf16.mxu0 %v161
  %1459 = vmatmul.mubr.bf16.gmra.mrb[0].mxu0 %v160
  %v1460 = vpop.f32.mrb[0].mxu0
  %v1461 = vadd.f32 0.0, %v1460
  %v1462 = vpop.f32.mrb[0].mxu0
  %v1463 = vadd.f32 0.0, %v1462
  %v1464 = vpop.f32.mrb[0].mxu0
  %v1465 = vadd.f32 0.0, %v1464
  %v1466 = vpop.f32.mrb[0].mxu0
  %v1467 = vadd.f32 0.0, %v1466
  %1468 = vmatprep.mubr.bf16.mxu0 %v168
  %1469 = vmatmul.mubr.bf16.gmra.mrb[0].mxu0 %v167
  %v1470 = vpop.f32.mrb[0].mxu0
  %v1471 = vadd.f32 0.0, %v1470
  %v1472 = vpop.f32.mrb[0].mxu0
  %v1473 = vadd.f32 0.0, %v1472
  %v1474 = vpop.f32.mrb[0].mxu0
  %v1475 = vadd.f32 0.0, %v1474
  %v1476 = vpop.f32.mrb[0].mxu0
  %v1477 = vadd.f32 0.0, %v1476
  %1478 = vmatprep.mubr.bf16.mxu0 %v175
  %1479 = vmatmul.mubr.bf16.gmra.mrb[0].mxu0 %v174
  %v1480 = vpop.f32.mrb[0].mxu0
  %v1481 = vadd.f32 0.0, %v1480
  %v1482 = vpop.f32.mrb[0].mxu0
  %v1483 = vadd.f32 0.0, %v1482
  %v1484 = vpop.f32.mrb[0].mxu0
  %v1485 = vadd.f32 0.0, %v1484
  %v1486 = vpop.f32.mrb[0].mxu0
  %v1487 = vadd.f32 0.0, %v1486
  %1488 = vmatprep.mubr.bf16.mxu0 %v182
  %1489 = vmatmul.mubr.bf16.gmra.mrb[0].mxu0 %v181
  %v1490 = vpop.f32.mrb[0].mxu0
  %v1491 = vadd.f32 0.0, %v1490
  %v1492 = vpop.f32.mrb[0].mxu0
  %v1493 = vadd.f32 0.0, %v1492
  %v1494 = vpop.f32.mrb[0].mxu0
  %v1495 = vadd.f32 0.0, %v1494
  %v1496 = vpop.f32.mrb[0].mxu0
  %v1497 = vadd.f32 0.0, %v1496
  %1498 = vmatprep.mubr.bf16.mxu0 %v189
  %1499 = vmatmul.mubr.bf16.gmra.mrb[0].mxu0 %v188
  %v1500 = vpop.f32.mrb[0].mxu0
  %v1501 = vadd.f32 0.0, %v1500
  %v1502 = vpop.f32.mrb[0].mxu0
  %v1503 = vadd.f32 0.0, %v1502
  %v1504 = vpop.f32.mrb[0].mxu0
  %v1505 = vadd.f32 0.0, %v1504
  %v1506 = vpop.f32.mrb[0].mxu0
  %v1507 = vadd.f32 0.0, %v1506
  %1508 = vdwg.mxu0
  %1509 = vmatprep.subr.bf16.mxu0 %v1044
  %1510 = vmatpush1.bf16.msra.mxu0 %v1043
  %1511 = vmatprep.subr.bf16.mxu0 %v1048
  %1512 = vmatpush1.bf16.msra.mxu0 %v1047
  %1513 = vmatprep.subr.bf16.mxu0 %v1052
  %1514 = vmatpush1.bf16.msra.mxu0 %v1051
  %1515 = vmatprep.subr.bf16.mxu0 %v1056
  %1516 = vmatpush1.bf16.msra.mxu0 %v1055
  %1517 = vmatprep.subr.bf16.mxu0 %v1060
  %1518 = vmatpush1.bf16.msra.mxu0 %v1059
  %1519 = vmatprep.subr.bf16.mxu0 %v1064
  %1520 = vmatpush1.bf16.msra.mxu0 %v1063
  %1521 = vmatprep.subr.bf16.mxu0 %v1068
  %1522 = vmatpush1.bf16.msra.mxu0 %v1067
  %1523 = vmatprep.subr.bf16.mxu0 %v1072
  %1524 = vmatpush1.bf16.msra.mxu0 %v1071
  %1525 = vmatprep.subr.bf16.mxu0 %v1076
  %1526 = vmatpush1.bf16.msra.mxu0 %v1075
  %1527 = vmatprep.subr.bf16.mxu0 %v1080
  %1528 = vmatpush1.bf16.msra.mxu0 %v1079
  %1529 = vmatprep.subr.bf16.mxu0 %v1084
  %1530 = vmatpush1.bf16.msra.mxu0 %v1083
  %1531 = vmatprep.subr.bf16.mxu0 %v1088
  %1532 = vmatpush1.bf16.msra.mxu0 %v1087
  %1533 = vmatprep.subr.bf16.mxu0 %v1092
  %1534 = vmatpush1.bf16.msra.mxu0 %v1091
  %1535 = vmatprep.subr.bf16.mxu0 %v1096
  %1536 = vmatpush1.bf16.msra.mxu0 %v1095
  %1537 = vmatprep.subr.bf16.mxu0 %v1100
  %1538 = vmatpush1.bf16.msra.mxu0 %v1099
  %1539 = vmatprep.subr.bf16.mxu0 %v1104
  %1540 = vmatpush1.bf16.msra.mxu0 %v1103
  %1541 = vmatprep.mubr.bf16.mxu0 %v142
  %1542 = vmatmul.mubr.bf16.gmra.mrb[0].mxu0 %v141
  %v1543 = vpop.f32.mrb[0].mxu0
  %v1544 = vadd.f32 %v1431, %v1543
  %v1545 = vpop.f32.mrb[0].mxu0
  %v1546 = vadd.f32 %v1433, %v1545
  %v1547 = vpop.f32.mrb[0].mxu0
  %v1548 = vadd.f32 %v1435, %v1547
  %v1549 = vpop.f32.mrb[0].mxu0
  %v1550 = vadd.f32 %v1437, %v1549
  %1551 = vmatprep.mubr.bf16.mxu0 %v149
  %1552 = vmatmul.mubr.bf16.gmra.mrb[0].mxu0 %v148
  %v1553 = vpop.f32.mrb[0].mxu0
  %v1554 = vadd.f32 %v1441, %v1553
  %v1555 = vpop.f32.mrb[0].mxu0
  %v1556 = vadd.f32 %v1443, %v1555
  %v1557 = vpop.f32.mrb[0].mxu0
  %v1558 = vadd.f32 %v1445, %v1557
  %v1559 = vpop.f32.mrb[0].mxu0
  %v1560 = vadd.f32 %v1447, %v1559
  %1561 = vmatprep.mubr.bf16.mxu0 %v156
  %1562 = vmatmul.mubr.bf16.gmra.mrb[0].mxu0 %v155
  %v1563 = vpop.f32.mrb[0].mxu0
  %v1564 = vadd.f32 %v1451, %v1563
  %v1565 = vpop.f32.mrb[0].mxu0
  %v1566 = vadd.f32 %v1453, %v1565
  %v1567 = vpop.f32.mrb[0].mxu0
  %v1568 = vadd.f32 %v1455, %v1567
  %v1569 = vpop.f32.mrb[0].mxu0
  %v1570 = vadd.f32 %v1457, %v1569
  %1571 = vmatprep.mubr.bf16.mxu0 %v163
  %1572 = vmatmul.mubr.bf16.gmra.mrb[0].mxu0 %v162
  %v1573 = vpop.f32.mrb[0].mxu0
  %v1574 = vadd.f32 %v1461, %v1573
  %v1575 = vpop.f32.mrb[0].mxu0
  %v1576 = vadd.f32 %v1463, %v1575
  %v1577 = vpop.f32.mrb[0].mxu0
  %v1578 = vadd.f32 %v1465, %v1577
  %v1579 = vpop.f32.mrb[0].mxu0
  %v1580 = vadd.f32 %v1467, %v1579
  %1581 = vmatprep.mubr.bf16.mxu0 %v170
  %1582 = vmatmul.mubr.bf16.gmra.mrb[0].mxu0 %v169
  %v1583 = vpop.f32.mrb[0].mxu0
  %v1584 = vadd.f32 %v1471, %v1583
  %v1585 = vpop.f32.mrb[0].mxu0
  %v1586 = vadd.f32 %v1473, %v1585
  %v1587 = vpop.f32.mrb[0].mxu0
  %v1588 = vadd.f32 %v1475, %v1587
  %v1589 = vpop.f32.mrb[0].mxu0
  %v1590 = vadd.f32 %v1477, %v1589
  %1591 = vmatprep.mubr.bf16.mxu0 %v177
  %1592 = vmatmul.mubr.bf16.gmra.mrb[0].mxu0 %v176
  %v1593 = vpop.f32.mrb[0].mxu0
  %v1594 = vadd.f32 %v1481, %v1593
  %v1595 = vpop.f32.mrb[0].mxu0
  %v1596 = vadd.f32 %v1483, %v1595
  %v1597 = vpop.f32.mrb[0].mxu0
  %v1598 = vadd.f32 %v1485, %v1597
  %v1599 = vpop.f32.mrb[0].mxu0
  %v1600 = vadd.f32 %v1487, %v1599
  %1601 = vmatprep.mubr.bf16.mxu0 %v184
  %1602 = vmatmul.mubr.bf16.gmra.mrb[0].mxu0 %v183
  %v1603 = vpop.f32.mrb[0].mxu0
  %v1604 = vadd.f32 %v1491, %v1603
  %v1605 = vpop.f32.mrb[0].mxu0
  %v1606 = vadd.f32 %v1493, %v1605
  %v1607 = vpop.f32.mrb[0].mxu0
  %v1608 = vadd.f32 %v1495, %v1607
  %v1609 = vpop.f32.mrb[0].mxu0
  %v1610 = vadd.f32 %v1497, %v1609
  %1611 = vmatprep.mubr.bf16.mxu0 %v191
  %1612 = vmatmul.mubr.bf16.gmra.mrb[0].mxu0 %v190
  %v1613 = vpop.f32.mrb[0].mxu0
  %v1614 = vadd.f32 %v1501, %v1613
  %v1615 = vpop.f32.mrb[0].mxu0
  %v1616 = vadd.f32 %v1503, %v1615
  %v1617 = vpop.f32.mrb[0].mxu0
  %v1618 = vadd.f32 %v1505, %v1617
  %v1619 = vpop.f32.mrb[0].mxu0
  %v1620 = vadd.f32 %v1507, %v1619
  %1621 = vdwg.mxu0
  %1622 = vmatprep.subr.bf16.mxu0 %v1108
  %1623 = vmatpush1.bf16.msra.mxu0 %v1107
  %1624 = vmatprep.subr.bf16.mxu0 %v1112
  %1625 = vmatpush1.bf16.msra.mxu0 %v1111
  %1626 = vmatprep.subr.bf16.mxu0 %v1116
  %1627 = vmatpush1.bf16.msra.mxu0 %v1115
  %1628 = vmatprep.subr.bf16.mxu0 %v1120
  %1629 = vmatpush1.bf16.msra.mxu0 %v1119
  %1630 = vmatprep.subr.bf16.mxu0 %v1124
  %1631 = vmatpush1.bf16.msra.mxu0 %v1123
  %1632 = vmatprep.subr.bf16.mxu0 %v1128
  %1633 = vmatpush1.bf16.msra.mxu0 %v1127
  %1634 = vmatprep.subr.bf16.mxu0 %v1132
  %1635 = vmatpush1.bf16.msra.mxu0 %v1131
  %1636 = vmatprep.subr.bf16.mxu0 %v1136
  %1637 = vmatpush1.bf16.msra.mxu0 %v1135
  %1638 = vmatprep.subr.bf16.mxu0 %v1140
  %1639 = vmatpush1.bf16.msra.mxu0 %v1139
  %1640 = vmatprep.subr.bf16.mxu0 %v1144
  %1641 = vmatpush1.bf16.msra.mxu0 %v1143
  %1642 = vmatprep.subr.bf16.mxu0 %v1148
  %1643 = vmatpush1.bf16.msra.mxu0 %v1147
  %1644 = vmatprep.subr.bf16.mxu0 %v1152
  %1645 = vmatpush1.bf16.msra.mxu0 %v1151
  %1646 = vmatprep.subr.bf16.mxu0 %v1156
  %1647 = vmatpush1.bf16.msra.mxu0 %v1155
  %1648 = vmatprep.subr.bf16.mxu0 %v1160
  %1649 = vmatpush1.bf16.msra.mxu0 %v1159
  %1650 = vmatprep.subr.bf16.mxu0 %v1164
  %1651 = vmatpush1.bf16.msra.mxu0 %v1163
  %1652 = vmatprep.subr.bf16.mxu0 %v1168
  %1653 = vmatpush1.bf16.msra.mxu0 %v1167
  %1654 = vmatprep.mubr.bf16.mxu0 %v144
  %1655 = vmatmul.mubr.bf16.gmra.mrb[0].mxu0 %v143
  %v1656 = vpop.f32.mrb[0].mxu0
  %v1657 = vadd.f32 %v1544, %v1656
  %v1658 = vpop.f32.mrb[0].mxu0
  %v1659 = vadd.f32 %v1546, %v1658
  %v1660 = vpop.f32.mrb[0].mxu0
  %v1661 = vadd.f32 %v1548, %v1660
  %v1662 = vpop.f32.mrb[0].mxu0
  %v1663 = vadd.f32 %v1550, %v1662
  %1664 = vmatprep.mubr.bf16.mxu0 %v151
  %1665 = vmatmul.mubr.bf16.gmra.mrb[0].mxu0 %v150
  %v1666 = vpop.f32.mrb[0].mxu0
  %v1667 = vadd.f32 %v1554, %v1666
  %v1668 = vpop.f32.mrb[0].mxu0
  %v1669 = vadd.f32 %v1556, %v1668
  %v1670 = vpop.f32.mrb[0].mxu0
  %v1671 = vadd.f32 %v1558, %v1670
  %v1672 = vpop.f32.mrb[0].mxu0
  %v1673 = vadd.f32 %v1560, %v1672
  %1674 = vmatprep.mubr.bf16.mxu0 %v158
  %1675 = vmatmul.mubr.bf16.gmra.mrb[0].mxu0 %v157
  %v1676 = vpop.f32.mrb[0].mxu0
  %v1677 = vadd.f32 %v1564, %v1676
  %v1678 = vpop.f32.mrb[0].mxu0
  %v1679 = vadd.f32 %v1566, %v1678
  %v1680 = vpop.f32.mrb[0].mxu0
  %v1681 = vadd.f32 %v1568, %v1680
  %v1682 = vpop.f32.mrb[0].mxu0
  %v1683 = vadd.f32 %v1570, %v1682
  %1684 = vmatprep.mubr.bf16.mxu0 %v165
  %1685 = vmatmul.mubr.bf16.gmra.mrb[0].mxu0 %v164
  %v1686 = vpop.f32.mrb[0].mxu0
  %v1687 = vadd.f32 %v1574, %v1686
  %v1688 = vpop.f32.mrb[0].mxu0
  %v1689 = vadd.f32 %v1576, %v1688
  %v1690 = vpop.f32.mrb[0].mxu0
  %v1691 = vadd.f32 %v1578, %v1690
  %v1692 = vpop.f32.mrb[0].mxu0
  %v1693 = vadd.f32 %v1580, %v1692
  %1694 = vmatprep.mubr.bf16.mxu0 %v172
  %1695 = vmatmul.mubr.bf16.gmra.mrb[0].mxu0 %v171
  %v1696 = vpop.f32.mrb[0].mxu0
  %v1697 = vadd.f32 %v1584, %v1696
  %v1698 = vpop.f32.mrb[0].mxu0
  %v1699 = vadd.f32 %v1586, %v1698
  %v1700 = vpop.f32.mrb[0].mxu0
  %v1701 = vadd.f32 %v1588, %v1700
  %v1702 = vpop.f32.mrb[0].mxu0
  %v1703 = vadd.f32 %v1590, %v1702
  %1704 = vmatprep.mubr.bf16.mxu0 %v179
  %1705 = vmatmul.mubr.bf16.gmra.mrb[0].mxu0 %v178
  %v1706 = vpop.f32.mrb[0].mxu0
  %v1707 = vadd.f32 %v1594, %v1706
  %v1708 = vpop.f32.mrb[0].mxu0
  %v1709 = vadd.f32 %v1596, %v1708
  %v1710 = vpop.f32.mrb[0].mxu0
  %v1711 = vadd.f32 %v1598, %v1710
  %v1712 = vpop.f32.mrb[0].mxu0
  %v1713 = vadd.f32 %v1600, %v1712
  %1714 = vmatprep.mubr.bf16.mxu0 %v186
  %1715 = vmatmul.mubr.bf16.gmra.mrb[0].mxu0 %v185
  %v1716 = vpop.f32.mrb[0].mxu0
  %v1717 = vadd.f32 %v1604, %v1716
  %v1718 = vpop.f32.mrb[0].mxu0
  %v1719 = vadd.f32 %v1606, %v1718
  %v1720 = vpop.f32.mrb[0].mxu0
  %v1721 = vadd.f32 %v1608, %v1720
  %v1722 = vpop.f32.mrb[0].mxu0
  %v1723 = vadd.f32 %v1610, %v1722
  %1724 = vmatprep.mubr.bf16.mxu0 %v193
  %1725 = vmatmul.mubr.bf16.gmra.mrb[0].mxu0 %v192
  %v1726 = vpop.f32.mrb[0].mxu0
  %v1727 = vadd.f32 %v1614, %v1726
  %v1728 = vpop.f32.mrb[0].mxu0
  %v1729 = vadd.f32 %v1616, %v1728
  %v1730 = vpop.f32.mrb[0].mxu0
  %v1731 = vadd.f32 %v1618, %v1730
  %v1732 = vpop.f32.mrb[0].mxu0
  %v1733 = vadd.f32 %v1620, %v1732
  %1734 = vdwg.mxu0
  %1735 = vmatprep.subr.bf16.mxu0 %v1172
  %1736 = vmatpush1.bf16.msra.mxu0 %v1171
  %1737 = vmatprep.subr.bf16.mxu0 0
  %1738 = vmatpush1.bf16.msra.mxu0 0
  %1739 = vmatprep.subr.bf16.mxu0 0
  %1740 = vmatpush1.bf16.msra.mxu0 0
  %1741 = vmatprep.subr.bf16.mxu0 0
  %1742 = vmatpush1.bf16.msra.mxu0 0
  %1743 = vmatprep.subr.bf16.mxu0 0
  %1744 = vmatpush1.bf16.msra.mxu0 0
  %1745 = vmatprep.subr.bf16.mxu0 0
  %1746 = vmatpush1.bf16.msra.mxu0 0
  %1747 = vmatprep.subr.bf16.mxu0 0
  %1748 = vmatpush1.bf16.msra.mxu0 0
  %1749 = vmatprep.subr.bf16.mxu0 0
  %1750 = vmatpush1.bf16.msra.mxu0 0
  %1751 = vmatprep.subr.bf16.mxu0 0
  %1752 = vmatpush1.bf16.msra.mxu0 0
  %1753 = vmatprep.subr.bf16.mxu0 0
  %1754 = vmatpush1.bf16.msra.mxu0 0
  %1755 = vmatprep.subr.bf16.mxu0 0
  %1756 = vmatpush1.bf16.msra.mxu0 0
  %1757 = vmatprep.subr.bf16.mxu0 0
  %1758 = vmatpush1.bf16.msra.mxu0 0
  %1759 = vmatprep.subr.bf16.mxu0 0
  %1760 = vmatpush1.bf16.msra.mxu0 0
  %1761 = vmatprep.subr.bf16.mxu0 0
  %1762 = vmatpush1.bf16.msra.mxu0 0
  %1763 = vmatprep.subr.bf16.mxu0 0
  %1764 = vmatpush1.bf16.msra.mxu0 0
  %1765 = vmatprep.subr.bf16.mxu0 0
  %1766 = vmatpush1.bf16.msra.mxu0 0
  %1767 = vmatprep.mubr.bf16.mxu0 0
  %1768 = vmatmul.mubr.bf16.gmra.mrb[0].mxu0 %v1373
  %v1769 = vpop.f32.mrb[0].mxu0
  %v1770 = vadd.f32 %v1657, %v1769
  %v1771 = vpop.f32.mrb[0].mxu0
  %v1772 = vadd.f32 %v1659, %v1771
  %v1773 = vpop.f32.mrb[0].mxu0
  %v1774 = vadd.f32 %v1661, %v1773
  %v1775 = vpop.f32.mrb[0].mxu0
  %v1776 = vadd.f32 %v1663, %v1775
  %1777 = vmatprep.mubr.bf16.mxu0 0
  %1778 = vmatmul.mubr.bf16.gmra.mrb[0].mxu0 %v1376
  %v1779 = vpop.f32.mrb[0].mxu0
  %v1780 = vadd.f32 %v1667, %v1779
  %v1781 = vpop.f32.mrb[0].mxu0
  %v1782 = vadd.f32 %v1669, %v1781
  %v1783 = vpop.f32.mrb[0].mxu0
  %v1784 = vadd.f32 %v1671, %v1783
  %v1785 = vpop.f32.mrb[0].mxu0
  %v1786 = vadd.f32 %v1673, %v1785
  %1787 = vmatprep.mubr.bf16.mxu0 0
  %1788 = vmatmul.mubr.bf16.gmra.mrb[0].mxu0 %v1379
  %v1789 = vpop.f32.mrb[0].mxu0
  %v1790 = vadd.f32 %v1677, %v1789
  %v1791 = vpop.f32.mrb[0].mxu0
  %v1792 = vadd.f32 %v1679, %v1791
  %v1793 = vpop.f32.mrb[0].mxu0
  %v1794 = vadd.f32 %v1681, %v1793
  %v1795 = vpop.f32.mrb[0].mxu0
  %v1796 = vadd.f32 %v1683, %v1795
  %1797 = vmatprep.mubr.bf16.mxu0 0
  %1798 = vmatmul.mubr.bf16.gmra.mrb[0].mxu0 %v1382
  %v1799 = vpop.f32.mrb[0].mxu0
  %v1800 = vadd.f32 %v1687, %v1799
  %v1801 = vpop.f32.mrb[0].mxu0
  %v1802 = vadd.f32 %v1689, %v1801
  %v1803 = vpop.f32.mrb[0].mxu0
  %v1804 = vadd.f32 %v1691, %v1803
  %v1805 = vpop.f32.mrb[0].mxu0
  %v1806 = vadd.f32 %v1693, %v1805
  %1807 = vmatprep.mubr.bf16.mxu0 0
  %1808 = vmatmul.mubr.bf16.gmra.mrb[0].mxu0 %v1385
  %v1809 = vpop.f32.mrb[0].mxu0
  %v1810 = vadd.f32 %v1697, %v1809
  %v1811 = vpop.f32.mrb[0].mxu0
  %v1812 = vadd.f32 %v1699, %v1811
  %v1813 = vpop.f32.mrb[0].mxu0
  %v1814 = vadd.f32 %v1701, %v1813
  %v1815 = vpop.f32.mrb[0].mxu0
  %v1816 = vadd.f32 %v1703, %v1815
  %1817 = vmatprep.mubr.bf16.mxu0 0
  %1818 = vmatmul.mubr.bf16.gmra.mrb[0].mxu0 %v1388
  %v1819 = vpop.f32.mrb[0].mxu0
  %v1820 = vadd.f32 %v1707, %v1819
  %v1821 = vpop.f32.mrb[0].mxu0
  %v1822 = vadd.f32 %v1709, %v1821
  %v1823 = vpop.f32.mrb[0].mxu0
  %v1824 = vadd.f32 %v1711, %v1823
  %v1825 = vpop.f32.mrb[0].mxu0
  %v1826 = vadd.f32 %v1713, %v1825
  %1827 = vmatprep.mubr.bf16.mxu0 0
  %1828 = vmatmul.mubr.bf16.gmra.mrb[0].mxu0 %v1391
  %v1829 = vpop.f32.mrb[0].mxu0
  %v1830 = vadd.f32 %v1717, %v1829
  %v1831 = vpop.f32.mrb[0].mxu0
  %v1832 = vadd.f32 %v1719, %v1831
  %v1833 = vpop.f32.mrb[0].mxu0
  %v1834 = vadd.f32 %v1721, %v1833
  %v1835 = vpop.f32.mrb[0].mxu0
  %v1836 = vadd.f32 %v1723, %v1835
  %1837 = vmatprep.mubr.bf16.mxu0 0
  %1838 = vmatmul.mubr.bf16.gmra.mrb[0].mxu0 %v1394
  %v1839 = vpop.f32.mrb[0].mxu0
  %v1840 = vadd.f32 %v1727, %v1839
  %v1841 = vpop.f32.mrb[0].mxu0
  %v1842 = vadd.f32 %v1729, %v1841
  %v1843 = vpop.f32.mrb[0].mxu0
  %v1844 = vadd.f32 %v1731, %v1843
  %v1845 = vpop.f32.mrb[0].mxu0
  %v1846 = vadd.f32 %v1733, %v1845
  %1847 = vdwg.mxu0
  %1848 = vmatprep.subr.bf16.mxu0 %v982
  %1849 = vmatpush1.bf16.msra.mxu0 %v981
  %1850 = vmatprep.subr.bf16.mxu0 %v986
  %1851 = vmatpush1.bf16.msra.mxu0 %v985
  %1852 = vmatprep.subr.bf16.mxu0 %v990
  %1853 = vmatpush1.bf16.msra.mxu0 %v989
  %1854 = vmatprep.subr.bf16.mxu0 %v994
  %1855 = vmatpush1.bf16.msra.mxu0 %v993
  %1856 = vmatprep.subr.bf16.mxu0 %v998
  %1857 = vmatpush1.bf16.msra.mxu0 %v997
  %1858 = vmatprep.subr.bf16.mxu0 %v1002
  %1859 = vmatpush1.bf16.msra.mxu0 %v1001
  %1860 = vmatprep.subr.bf16.mxu0 %v1006
  %1861 = vmatpush1.bf16.msra.mxu0 %v1005
  %1862 = vmatprep.subr.bf16.mxu0 %v1010
  %1863 = vmatpush1.bf16.msra.mxu0 %v1009
  %1864 = vmatprep.subr.bf16.mxu0 %v1014
  %1865 = vmatpush1.bf16.msra.mxu0 %v1013
  %1866 = vmatprep.subr.bf16.mxu0 %v1018
  %1867 = vmatpush1.bf16.msra.mxu0 %v1017
  %1868 = vmatprep.subr.bf16.mxu0 %v1022
  %1869 = vmatpush1.bf16.msra.mxu0 %v1021
  %1870 = vmatprep.subr.bf16.mxu0 %v1026
  %1871 = vmatpush1.bf16.msra.mxu0 %v1025
  %1872 = vmatprep.subr.bf16.mxu0 %v1030
  %1873 = vmatpush1.bf16.msra.mxu0 %v1029
  %1874 = vmatprep.subr.bf16.mxu0 %v1034
  %1875 = vmatpush1.bf16.msra.mxu0 %v1033
  %1876 = vmatprep.subr.bf16.mxu0 %v1038
  %1877 = vmatpush1.bf16.msra.mxu0 %v1037
  %1878 = vmatprep.subr.bf16.mxu0 %v1042
  %1879 = vmatpush1.bf16.msra.mxu0 %v1041
  %1880 = vmatprep.mubr.bf16.mxu0 %v140
  %1881 = vmatmul.mubr.bf16.gmra.mrb[0].mxu0 %v139
  %v1882 = vpop.f32.mrb[0].mxu0
  %v1883 = vadd.f32 0.0, %v1882
  %v1884 = vpop.f32.mrb[0].mxu0
  %v1885 = vadd.f32 0.0, %v1884
  %v1886 = vpop.f32.mrb[0].mxu0
  %v1887 = vadd.f32 0.0, %v1886
  %v1888 = vpop.f32.mrb[0].mxu0
  %v1889 = vadd.f32 0.0, %v1888
  %1890 = vmatprep.mubr.bf16.mxu0 %v147
  %1891 = vmatmul.mubr.bf16.gmra.mrb[0].mxu0 %v146
  %v1892 = vpop.f32.mrb[0].mxu0
  %v1893 = vadd.f32 0.0, %v1892
  %v1894 = vpop.f32.mrb[0].mxu0
  %v1895 = vadd.f32 0.0, %v1894
  %v1896 = vpop.f32.mrb[0].mxu0
  %v1897 = vadd.f32 0.0, %v1896
  %v1898 = vpop.f32.mrb[0].mxu0
  %v1899 = vadd.f32 0.0, %v1898
  %1900 = vmatprep.mubr.bf16.mxu0 %v154
  %1901 = vmatmul.mubr.bf16.gmra.mrb[0].mxu0 %v153
  %v1902 = vpop.f32.mrb[0].mxu0
  %v1903 = vadd.f32 0.0, %v1902
  %v1904 = vpop.f32.mrb[0].mxu0
  %v1905 = vadd.f32 0.0, %v1904
  %v1906 = vpop.f32.mrb[0].mxu0
  %v1907 = vadd.f32 0.0, %v1906
  %v1908 = vpop.f32.mrb[0].mxu0
  %v1909 = vadd.f32 0.0, %v1908
  %1910 = vmatprep.mubr.bf16.mxu0 %v161
  %1911 = vmatmul.mubr.bf16.gmra.mrb[0].mxu0 %v160
  %v1912 = vpop.f32.mrb[0].mxu0
  %v1913 = vadd.f32 0.0, %v1912
  %v1914 = vpop.f32.mrb[0].mxu0
  %v1915 = vadd.f32 0.0, %v1914
  %v1916 = vpop.f32.mrb[0].mxu0
  %v1917 = vadd.f32 0.0, %v1916
  %v1918 = vpop.f32.mrb[0].mxu0
  %v1919 = vadd.f32 0.0, %v1918
  %1920 = vmatprep.mubr.bf16.mxu0 %v168
  %1921 = vmatmul.mubr.bf16.gmra.mrb[0].mxu0 %v167
  %v1922 = vpop.f32.mrb[0].mxu0
  %v1923 = vadd.f32 0.0, %v1922
  %v1924 = vpop.f32.mrb[0].mxu0
  %v1925 = vadd.f32 0.0, %v1924
  %v1926 = vpop.f32.mrb[0].mxu0
  %v1927 = vadd.f32 0.0, %v1926
  %v1928 = vpop.f32.mrb[0].mxu0
  %v1929 = vadd.f32 0.0, %v1928
  %1930 = vmatprep.mubr.bf16.mxu0 %v175
  %1931 = vmatmul.mubr.bf16.gmra.mrb[0].mxu0 %v174
  %v1932 = vpop.f32.mrb[0].mxu0
  %v1933 = vadd.f32 0.0, %v1932
  %v1934 = vpop.f32.mrb[0].mxu0
  %v1935 = vadd.f32 0.0, %v1934
  %v1936 = vpop.f32.mrb[0].mxu0
  %v1937 = vadd.f32 0.0, %v1936
  %v1938 = vpop.f32.mrb[0].mxu0
  %v1939 = vadd.f32 0.0, %v1938
  %1940 = vmatprep.mubr.bf16.mxu0 %v182
  %1941 = vmatmul.mubr.bf16.gmra.mrb[0].mxu0 %v181
  %v1942 = vpop.f32.mrb[0].mxu0
  %v1943 = vadd.f32 0.0, %v1942
  %v1944 = vpop.f32.mrb[0].mxu0
  %v1945 = vadd.f32 0.0, %v1944
  %v1946 = vpop.f32.mrb[0].mxu0
  %v1947 = vadd.f32 0.0, %v1946
  %v1948 = vpop.f32.mrb[0].mxu0
  %v1949 = vadd.f32 0.0, %v1948
  %1950 = vmatprep.mubr.bf16.mxu0 %v189
  %1951 = vmatmul.mubr.bf16.gmra.mrb[0].mxu0 %v188
  %v1952 = vpop.f32.mrb[0].mxu0
  %v1953 = vadd.f32 0.0, %v1952
  %v1954 = vpop.f32.mrb[0].mxu0
  %v1955 = vadd.f32 0.0, %v1954
  %v1956 = vpop.f32.mrb[0].mxu0
  %v1957 = vadd.f32 0.0, %v1956
  %v1958 = vpop.f32.mrb[0].mxu0
  %v1959 = vadd.f32 0.0, %v1958
  %1960 = vdwg.mxu0
  %1961 = vmatprep.subr.bf16.mxu0 %v1046
  %1962 = vmatpush1.bf16.msra.mxu0 %v1045
  %1963 = vmatprep.subr.bf16.mxu0 %v1050
  %1964 = vmatpush1.bf16.msra.mxu0 %v1049
  %1965 = vmatprep.subr.bf16.mxu0 %v1054
  %1966 = vmatpush1.bf16.msra.mxu0 %v1053
  %1967 = vmatprep.subr.bf16.mxu0 %v1058
  %1968 = vmatpush1.bf16.msra.mxu0 %v1057
  %1969 = vmatprep.subr.bf16.mxu0 %v1062
  %1970 = vmatpush1.bf16.msra.mxu0 %v1061
  %1971 = vmatprep.subr.bf16.mxu0 %v1066
  %1972 = vmatpush1.bf16.msra.mxu0 %v1065
  %1973 = vmatprep.subr.bf16.mxu0 %v1070
  %1974 = vmatpush1.bf16.msra.mxu0 %v1069
  %1975 = vmatprep.subr.bf16.mxu0 %v1074
  %1976 = vmatpush1.bf16.msra.mxu0 %v1073
  %1977 = vmatprep.subr.bf16.mxu0 %v1078
  %1978 = vmatpush1.bf16.msra.mxu0 %v1077
  %1979 = vmatprep.subr.bf16.mxu0 %v1082
  %1980 = vmatpush1.bf16.msra.mxu0 %v1081
  %1981 = vmatprep.subr.bf16.mxu0 %v1086
  %1982 = vmatpush1.bf16.msra.mxu0 %v1085
  %1983 = vmatprep.subr.bf16.mxu0 %v1090
  %1984 = vmatpush1.bf16.msra.mxu0 %v1089
  %1985 = vmatprep.subr.bf16.mxu0 %v1094
  %1986 = vmatpush1.bf16.msra.mxu0 %v1093
  %1987 = vmatprep.subr.bf16.mxu0 %v1098
  %1988 = vmatpush1.bf16.msra.mxu0 %v1097
  %1989 = vmatprep.subr.bf16.mxu0 %v1102
  %1990 = vmatpush1.bf16.msra.mxu0 %v1101
  %1991 = vmatprep.subr.bf16.mxu0 %v1106
  %1992 = vmatpush1.bf16.msra.mxu0 %v1105
  %1993 = vmatprep.mubr.bf16.mxu0 %v142
  %1994 = vmatmul.mubr.bf16.gmra.mrb[0].mxu0 %v141
  %v1995 = vpop.f32.mrb[0].mxu0
  %v1996 = vadd.f32 %v1883, %v1995
  %v1997 = vpop.f32.mrb[0].mxu0
  %v1998 = vadd.f32 %v1885, %v1997
  %v1999 = vpop.f32.mrb[0].mxu0
  %v2000 = vadd.f32 %v1887, %v1999
  %v2001 = vpop.f32.mrb[0].mxu0
  %v2002 = vadd.f32 %v1889, %v2001
  %2003 = vmatprep.mubr.bf16.mxu0 %v149
  %2004 = vmatmul.mubr.bf16.gmra.mrb[0].mxu0 %v148
  %v2005 = vpop.f32.mrb[0].mxu0
  %v2006 = vadd.f32 %v1893, %v2005
  %v2007 = vpop.f32.mrb[0].mxu0
  %v2008 = vadd.f32 %v1895, %v2007
  %v2009 = vpop.f32.mrb[0].mxu0
  %v2010 = vadd.f32 %v1897, %v2009
  %v2011 = vpop.f32.mrb[0].mxu0
  %v2012 = vadd.f32 %v1899, %v2011
  %2013 = vmatprep.mubr.bf16.mxu0 %v156
  %2014 = vmatmul.mubr.bf16.gmra.mrb[0].mxu0 %v155
  %v2015 = vpop.f32.mrb[0].mxu0
  %v2016 = vadd.f32 %v1903, %v2015
  %v2017 = vpop.f32.mrb[0].mxu0
  %v2018 = vadd.f32 %v1905, %v2017
  %v2019 = vpop.f32.mrb[0].mxu0
  %v2020 = vadd.f32 %v1907, %v2019
  %v2021 = vpop.f32.mrb[0].mxu0
  %v2022 = vadd.f32 %v1909, %v2021
  %2023 = vmatprep.mubr.bf16.mxu0 %v163
  %2024 = vmatmul.mubr.bf16.gmra.mrb[0].mxu0 %v162
  %v2025 = vpop.f32.mrb[0].mxu0
  %v2026 = vadd.f32 %v1913, %v2025
  %v2027 = vpop.f32.mrb[0].mxu0
  %v2028 = vadd.f32 %v1915, %v2027
  %v2029 = vpop.f32.mrb[0].mxu0
  %v2030 = vadd.f32 %v1917, %v2029
  %v2031 = vpop.f32.mrb[0].mxu0
  %v2032 = vadd.f32 %v1919, %v2031
  %2033 = vmatprep.mubr.bf16.mxu0 %v170
  %2034 = vmatmul.mubr.bf16.gmra.mrb[0].mxu0 %v169
  %v2035 = vpop.f32.mrb[0].mxu0
  %v2036 = vadd.f32 %v1923, %v2035
  %v2037 = vpop.f32.mrb[0].mxu0
  %v2038 = vadd.f32 %v1925, %v2037
  %v2039 = vpop.f32.mrb[0].mxu0
  %v2040 = vadd.f32 %v1927, %v2039
  %v2041 = vpop.f32.mrb[0].mxu0
  %v2042 = vadd.f32 %v1929, %v2041
  %2043 = vmatprep.mubr.bf16.mxu0 %v177
  %2044 = vmatmul.mubr.bf16.gmra.mrb[0].mxu0 %v176
  %v2045 = vpop.f32.mrb[0].mxu0
  %v2046 = vadd.f32 %v1933, %v2045
  %v2047 = vpop.f32.mrb[0].mxu0
  %v2048 = vadd.f32 %v1935, %v2047
  %v2049 = vpop.f32.mrb[0].mxu0
  %v2050 = vadd.f32 %v1937, %v2049
  %v2051 = vpop.f32.mrb[0].mxu0
  %v2052 = vadd.f32 %v1939, %v2051
  %2053 = vmatprep.mubr.bf16.mxu0 %v184
  %2054 = vmatmul.mubr.bf16.gmra.mrb[0].mxu0 %v183
  %v2055 = vpop.f32.mrb[0].mxu0
  %v2056 = vadd.f32 %v1943, %v2055
  %v2057 = vpop.f32.mrb[0].mxu0
  %v2058 = vadd.f32 %v1945, %v2057
  %v2059 = vpop.f32.mrb[0].mxu0
  %v2060 = vadd.f32 %v1947, %v2059
  %v2061 = vpop.f32.mrb[0].mxu0
  %v2062 = vadd.f32 %v1949, %v2061
  %2063 = vmatprep.mubr.bf16.mxu0 %v191
  %2064 = vmatmul.mubr.bf16.gmra.mrb[0].mxu0 %v190
  %v2065 = vpop.f32.mrb[0].mxu0
  %v2066 = vadd.f32 %v1953, %v2065
  %v2067 = vpop.f32.mrb[0].mxu0
  %v2068 = vadd.f32 %v1955, %v2067
  %v2069 = vpop.f32.mrb[0].mxu0
  %v2070 = vadd.f32 %v1957, %v2069
  %v2071 = vpop.f32.mrb[0].mxu0
  %v2072 = vadd.f32 %v1959, %v2071
  %2073 = vdwg.mxu0
  %2074 = vmatprep.subr.bf16.mxu0 %v1110
  %2075 = vmatpush1.bf16.msra.mxu0 %v1109
  %2076 = vmatprep.subr.bf16.mxu0 %v1114
  %2077 = vmatpush1.bf16.msra.mxu0 %v1113
  %2078 = vmatprep.subr.bf16.mxu0 %v1118
  %2079 = vmatpush1.bf16.msra.mxu0 %v1117
  %2080 = vmatprep.subr.bf16.mxu0 %v1122
  %2081 = vmatpush1.bf16.msra.mxu0 %v1121
  %2082 = vmatprep.subr.bf16.mxu0 %v1126
  %2083 = vmatpush1.bf16.msra.mxu0 %v1125
  %2084 = vmatprep.subr.bf16.mxu0 %v1130
  %2085 = vmatpush1.bf16.msra.mxu0 %v1129
  %2086 = vmatprep.subr.bf16.mxu0 %v1134
  %2087 = vmatpush1.bf16.msra.mxu0 %v1133
  %2088 = vmatprep.subr.bf16.mxu0 %v1138
  %2089 = vmatpush1.bf16.msra.mxu0 %v1137
  %2090 = vmatprep.subr.bf16.mxu0 %v1142
  %2091 = vmatpush1.bf16.msra.mxu0 %v1141
  %2092 = vmatprep.subr.bf16.mxu0 %v1146
  %2093 = vmatpush1.bf16.msra.mxu0 %v1145
  %2094 = vmatprep.subr.bf16.mxu0 %v1150
  %2095 = vmatpush1.bf16.msra.mxu0 %v1149
  %2096 = vmatprep.subr.bf16.mxu0 %v1154
  %2097 = vmatpush1.bf16.msra.mxu0 %v1153
  %2098 = vmatprep.subr.bf16.mxu0 %v1158
  %2099 = vmatpush1.bf16.msra.mxu0 %v1157
  %2100 = vmatprep.subr.bf16.mxu0 %v1162
  %2101 = vmatpush1.bf16.msra.mxu0 %v1161
  %2102 = vmatprep.subr.bf16.mxu0 %v1166
  %2103 = vmatpush1.bf16.msra.mxu0 %v1165
  %2104 = vmatprep.subr.bf16.mxu0 %v1170
  %2105 = vmatpush1.bf16.msra.mxu0 %v1169
  %2106 = vmatprep.mubr.bf16.mxu0 %v144
  %2107 = vmatmul.mubr.bf16.gmra.mrb[0].mxu0 %v143
  %v2108 = vpop.f32.mrb[0].mxu0
  %v2109 = vadd.f32 %v1996, %v2108
  %v2110 = vpop.f32.mrb[0].mxu0
  %v2111 = vadd.f32 %v1998, %v2110
  %v2112 = vpop.f32.mrb[0].mxu0
  %v2113 = vadd.f32 %v2000, %v2112
  %v2114 = vpop.f32.mrb[0].mxu0
  %v2115 = vadd.f32 %v2002, %v2114
  %2116 = vmatprep.mubr.bf16.mxu0 %v151
  %2117 = vmatmul.mubr.bf16.gmra.mrb[0].mxu0 %v150
  %v2118 = vpop.f32.mrb[0].mxu0
  %v2119 = vadd.f32 %v2006, %v2118
  %v2120 = vpop.f32.mrb[0].mxu0
  %v2121 = vadd.f32 %v2008, %v2120
  %v2122 = vpop.f32.mrb[0].mxu0
  %v2123 = vadd.f32 %v2010, %v2122
  %v2124 = vpop.f32.mrb[0].mxu0
  %v2125 = vadd.f32 %v2012, %v2124
  %2126 = vmatprep.mubr.bf16.mxu0 %v158
  %2127 = vmatmul.mubr.bf16.gmra.mrb[0].mxu0 %v157
  %v2128 = vpop.f32.mrb[0].mxu0
  %v2129 = vadd.f32 %v2016, %v2128
  %v2130 = vpop.f32.mrb[0].mxu0
  %v2131 = vadd.f32 %v2018, %v2130
  %v2132 = vpop.f32.mrb[0].mxu0
  %v2133 = vadd.f32 %v2020, %v2132
  %v2134 = vpop.f32.mrb[0].mxu0
  %v2135 = vadd.f32 %v2022, %v2134
  %2136 = vmatprep.mubr.bf16.mxu0 %v165
  %2137 = vmatmul.mubr.bf16.gmra.mrb[0].mxu0 %v164
  %v2138 = vpop.f32.mrb[0].mxu0
  %v2139 = vadd.f32 %v2026, %v2138
  %v2140 = vpop.f32.mrb[0].mxu0
  %v2141 = vadd.f32 %v2028, %v2140
  %v2142 = vpop.f32.mrb[0].mxu0
  %v2143 = vadd.f32 %v2030, %v2142
  %v2144 = vpop.f32.mrb[0].mxu0
  %v2145 = vadd.f32 %v2032, %v2144
  %2146 = vmatprep.mubr.bf16.mxu0 %v172
  %2147 = vmatmul.mubr.bf16.gmra.mrb[0].mxu0 %v171
  %v2148 = vpop.f32.mrb[0].mxu0
  %v2149 = vadd.f32 %v2036, %v2148
  %v2150 = vpop.f32.mrb[0].mxu0
  %v2151 = vadd.f32 %v2038, %v2150
  %v2152 = vpop.f32.mrb[0].mxu0
  %v2153 = vadd.f32 %v2040, %v2152
  %v2154 = vpop.f32.mrb[0].mxu0
  %v2155 = vadd.f32 %v2042, %v2154
  %2156 = vmatprep.mubr.bf16.mxu0 %v179
  %2157 = vmatmul.mubr.bf16.gmra.mrb[0].mxu0 %v178
  %v2158 = vpop.f32.mrb[0].mxu0
  %v2159 = vadd.f32 %v2046, %v2158
  %v2160 = vpop.f32.mrb[0].mxu0
  %v2161 = vadd.f32 %v2048, %v2160
  %v2162 = vpop.f32.mrb[0].mxu0
  %v2163 = vadd.f32 %v2050, %v2162
  %v2164 = vpop.f32.mrb[0].mxu0
  %v2165 = vadd.f32 %v2052, %v2164
  %2166 = vmatprep.mubr.bf16.mxu0 %v186
  %2167 = vmatmul.mubr.bf16.gmra.mrb[0].mxu0 %v185
  %v2168 = vpop.f32.mrb[0].mxu0
  %v2169 = vadd.f32 %v2056, %v2168
  %v2170 = vpop.f32.mrb[0].mxu0
  %v2171 = vadd.f32 %v2058, %v2170
  %v2172 = vpop.f32.mrb[0].mxu0
  %v2173 = vadd.f32 %v2060, %v2172
  %v2174 = vpop.f32.mrb[0].mxu0
  %v2175 = vadd.f32 %v2062, %v2174
  %2176 = vmatprep.mubr.bf16.mxu0 %v193
  %2177 = vmatmul.mubr.bf16.gmra.mrb[0].mxu0 %v192
  %v2178 = vpop.f32.mrb[0].mxu0
  %v2179 = vadd.f32 %v2066, %v2178
  %v2180 = vpop.f32.mrb[0].mxu0
  %v2181 = vadd.f32 %v2068, %v2180
  %v2182 = vpop.f32.mrb[0].mxu0
  %v2183 = vadd.f32 %v2070, %v2182
  %v2184 = vpop.f32.mrb[0].mxu0
  %v2185 = vadd.f32 %v2072, %v2184
  %2186 = vdwg.mxu0
  %2187 = vmatprep.subr.bf16.mxu0 %v1174
  %2188 = vmatpush1.bf16.msra.mxu0 %v1173
  %2189 = vmatprep.subr.bf16.mxu0 0
  %2190 = vmatpush1.bf16.msra.mxu0 0
  %2191 = vmatprep.subr.bf16.mxu0 0
  %2192 = vmatpush1.bf16.msra.mxu0 0
  %2193 = vmatprep.subr.bf16.mxu0 0
  %2194 = vmatpush1.bf16.msra.mxu0 0
  %2195 = vmatprep.subr.bf16.mxu0 0
  %2196 = vmatpush1.bf16.msra.mxu0 0
  %2197 = vmatprep.subr.bf16.mxu0 0
  %2198 = vmatpush1.bf16.msra.mxu0 0
  %2199 = vmatprep.subr.bf16.mxu0 0
  %2200 = vmatpush1.bf16.msra.mxu0 0
  %2201 = vmatprep.subr.bf16.mxu0 0
  %2202 = vmatpush1.bf16.msra.mxu0 0
  %2203 = vmatprep.subr.bf16.mxu0 0
  %2204 = vmatpush1.bf16.msra.mxu0 0
  %2205 = vmatprep.subr.bf16.mxu0 0
  %2206 = vmatpush1.bf16.msra.mxu0 0
  %2207 = vmatprep.subr.bf16.mxu0 0
  %2208 = vmatpush1.bf16.msra.mxu0 0
  %2209 = vmatprep.subr.bf16.mxu0 0
  %2210 = vmatpush1.bf16.msra.mxu0 0
  %2211 = vmatprep.subr.bf16.mxu0 0
  %2212 = vmatpush1.bf16.msra.mxu0 0
  %2213 = vmatprep.subr.bf16.mxu0 0
  %2214 = vmatpush1.bf16.msra.mxu0 0
  %2215 = vmatprep.subr.bf16.mxu0 0
  %2216 = vmatpush1.bf16.msra.mxu0 0
  %2217 = vmatprep.subr.bf16.mxu0 0
  %2218 = vmatpush1.bf16.msra.mxu0 0
  %2219 = vmatprep.mubr.bf16.mxu0 0
  %2220 = vmatmul.mubr.bf16.gmra.mrb[0].mxu0 %v1373
  %v2221 = vpop.f32.mrb[0].mxu0
  %v2222 = vadd.f32 %v2109, %v2221
  %v2223 = vpop.f32.mrb[0].mxu0
  %v2224 = vadd.f32 %v2111, %v2223
  %v2225 = vpop.f32.mrb[0].mxu0
  %v2226 = vadd.f32 %v2113, %v2225
  %v2227 = vpop.f32.mrb[0].mxu0
  %v2228 = vadd.f32 %v2115, %v2227
  %2229 = vmatprep.mubr.bf16.mxu0 0
  %2230 = vmatmul.mubr.bf16.gmra.mrb[0].mxu0 %v1376
  %v2231 = vpop.f32.mrb[0].mxu0
  %v2232 = vadd.f32 %v2119, %v2231
  %v2233 = vpop.f32.mrb[0].mxu0
  %v2234 = vadd.f32 %v2121, %v2233
  %v2235 = vpop.f32.mrb[0].mxu0
  %v2236 = vadd.f32 %v2123, %v2235
  %v2237 = vpop.f32.mrb[0].mxu0
  %v2238 = vadd.f32 %v2125, %v2237
  %2239 = vmatprep.mubr.bf16.mxu0 0
  %2240 = vmatmul.mubr.bf16.gmra.mrb[0].mxu0 %v1379
  %v2241 = vpop.f32.mrb[0].mxu0
  %v2242 = vadd.f32 %v2129, %v2241
  %v2243 = vpop.f32.mrb[0].mxu0
  %v2244 = vadd.f32 %v2131, %v2243
  %v2245 = vpop.f32.mrb[0].mxu0
  %v2246 = vadd.f32 %v2133, %v2245
  %v2247 = vpop.f32.mrb[0].mxu0
  %v2248 = vadd.f32 %v2135, %v2247
  %2249 = vmatprep.mubr.bf16.mxu0 0
  %2250 = vmatmul.mubr.bf16.gmra.mrb[0].mxu0 %v1382
  %v2251 = vpop.f32.mrb[0].mxu0
  %v2252 = vadd.f32 %v2139, %v2251
  %v2253 = vpop.f32.mrb[0].mxu0
  %v2254 = vadd.f32 %v2141, %v2253
  %v2255 = vpop.f32.mrb[0].mxu0
  %v2256 = vadd.f32 %v2143, %v2255
  %v2257 = vpop.f32.mrb[0].mxu0
  %v2258 = vadd.f32 %v2145, %v2257
  %2259 = vmatprep.mubr.bf16.mxu0 0
  %2260 = vmatmul.mubr.bf16.gmra.mrb[0].mxu0 %v1385
  %v2261 = vpop.f32.mrb[0].mxu0
  %v2262 = vadd.f32 %v2149, %v2261
  %v2263 = vpop.f32.mrb[0].mxu0
  %v2264 = vadd.f32 %v2151, %v2263
  %v2265 = vpop.f32.mrb[0].mxu0
  %v2266 = vadd.f32 %v2153, %v2265
  %v2267 = vpop.f32.mrb[0].mxu0
  %v2268 = vadd.f32 %v2155, %v2267
  %2269 = vmatprep.mubr.bf16.mxu0 0
  %2270 = vmatmul.mubr.bf16.gmra.mrb[0].mxu0 %v1388
  %v2271 = vpop.f32.mrb[0].mxu0
  %v2272 = vadd.f32 %v2159, %v2271
  %v2273 = vpop.f32.mrb[0].mxu0
  %v2274 = vadd.f32 %v2161, %v2273
  %v2275 = vpop.f32.mrb[0].mxu0
  %v2276 = vadd.f32 %v2163, %v2275
  %v2277 = vpop.f32.mrb[0].mxu0
  %v2278 = vadd.f32 %v2165, %v2277
  %2279 = vmatprep.mubr.bf16.mxu0 0
  %2280 = vmatmul.mubr.bf16.gmra.mrb[0].mxu0 %v1391
  %v2281 = vpop.f32.mrb[0].mxu0
  %v2282 = vadd.f32 %v2169, %v2281
  %v2283 = vpop.f32.mrb[0].mxu0
  %v2284 = vadd.f32 %v2171, %v2283
  %v2285 = vpop.f32.mrb[0].mxu0
  %v2286 = vadd.f32 %v2173, %v2285
  %v2287 = vpop.f32.mrb[0].mxu0
  %v2288 = vadd.f32 %v2175, %v2287
  %2289 = vmatprep.mubr.bf16.mxu0 0
  %2290 = vmatmul.mubr.bf16.gmra.mrb[0].mxu0 %v1394
  %v2291 = vpop.f32.mrb[0].mxu0
  %v2292 = vadd.f32 %v2179, %v2291
  %v2293 = vpop.f32.mrb[0].mxu0
  %v2294 = vadd.f32 %v2181, %v2293
  %v2295 = vpop.f32.mrb[0].mxu0
  %v2296 = vadd.f32 %v2183, %v2295
  %v2297 = vpop.f32.mrb[0].mxu0
  %v2298 = vadd.f32 %v2185, %v2297
  %2299 = vdwg.mxu0
  %v2300 = vpack.c.bf16 %v1774, %v1770
  %v2301 = vpack.c.bf16 %v1776, %v1772
  %v2302 = vpack.c.bf16 %v2226, %v2222
  %v2303 = vpack.c.bf16 %v2228, %v2224
  %v2304 = vpack.c.bf16 %v1784, %v1780
  %v2305 = vpack.c.bf16 %v1786, %v1782
  %v2306 = vpack.c.bf16 %v2236, %v2232
  %v2307 = vpack.c.bf16 %v2238, %v2234
  %v2308 = vpack.c.bf16 %v1794, %v1790
  %v2309 = vpack.c.bf16 %v1796, %v1792
  %v2310 = vpack.c.bf16 %v2246, %v2242
  %v2311 = vpack.c.bf16 %v2248, %v2244
  %v2312 = vpack.c.bf16 %v1804, %v1800
  %v2313 = vpack.c.bf16 %v1806, %v1802
  %v2314 = vpack.c.bf16 %v2256, %v2252
  %v2315 = vpack.c.bf16 %v2258, %v2254
  %v2316 = vpack.c.bf16 %v1814, %v1810
  %v2317 = vpack.c.bf16 %v1816, %v1812
  %v2318 = vpack.c.bf16 %v2266, %v2262
  %v2319 = vpack.c.bf16 %v2268, %v2264
  %v2320 = vpack.c.bf16 %v1824, %v1820
  %v2321 = vpack.c.bf16 %v1826, %v1822
  %v2322 = vpack.c.bf16 %v2276, %v2272
  %v2323 = vpack.c.bf16 %v2278, %v2274
  %v2324 = vpack.c.bf16 %v1834, %v1830
  %v2325 = vpack.c.bf16 %v1836, %v1832
  %v2326 = vpack.c.bf16 %v2286, %v2282
  %v2327 = vpack.c.bf16 %v2288, %v2284
  %v2328 = vpack.c.bf16 %v1844, %v1840
  %v2329 = vpack.c.bf16 %v1846, %v1842
  %v2330 = vpack.c.bf16 %v2296, %v2292
  %v2331 = vpack.c.bf16 %v2298, %v2294
  %v2332 = vld [vmem:[%s2] sm:$0xf]
  %v2335 = vunpack.c.l.s4 1966171168
  %v2336 = vunpack.c.0.s8 %v2335
  %v2337 = vlaneseq
  %v2338 = vshrl.u32 %v2337, 7
  %v2339 = vsub.s32 %v2336, %v2338
  %v2340 = vrot.slane %v2332, %v2339
  %v2341 = vcombine.high %v2340, %v2340
  %v2343 = vunpack.c.l.s4 1966171168
  %v2344 = vunpack.c.0.s8 %v2343
  %v2345 = vlaneseq
  %v2346 = vshrl.u32 %v2345, 7
  %v2347 = vsub.s32 %v2344, %v2346
  %v2348 = vrot.slane %v2340, %v2347
  %v2350 = vunpack.c.l.s4 1966171168
  %v2351 = vunpack.c.0.s8 %v2350
  %v2352 = vlaneseq
  %v2353 = vshrl.u32 %v2352, 7
  %v2354 = vsub.s32 %v2351, %v2353
  %v2355 = vrot.slane %v2341, %v2354
  %v2356 = vcombine.high %v2348, %v2348
  %v2357 = vcombine.high %v2355, %v2355
  %v2359 = vpack.i.b16 %v2348, %v2348
  %v2361 = vlaneseq
  %v2362 = vshrl.u32 %v2361, 7
  %v2363 = vsub.s32 0, %v2362
  %v2364 = vrot.slane %v2359, %v2363
  %v2366 = vpack.i.b16 %v2355, %v2355
  %v2368 = vlaneseq
  %v2369 = vshrl.u32 %v2368, 7
  %v2370 = vsub.s32 0, %v2369
  %v2371 = vrot.slane %v2366, %v2370
  %v2373 = vpack.i.b16 %v2356, %v2356
  %v2375 = vlaneseq
  %v2376 = vshrl.u32 %v2375, 7
  %v2377 = vsub.s32 0, %v2376
  %v2378 = vrot.slane %v2373, %v2377
  %v2380 = vpack.i.b16 %v2357, %v2357
  %v2382 = vlaneseq
  %v2383 = vshrl.u32 %v2382, 7
  %v2384 = vsub.s32 0, %v2383
  %v2385 = vrot.slane %v2380, %v2384
  %v2386 = vadd.bf16 %v2300, %v2364
  %v2387 = vadd.bf16 %v2301, %v2371
  %v2388 = vadd.bf16 %v2302, %v2378
  %v2389 = vadd.bf16 %v2303, %v2385
  %v2390 = vadd.bf16 %v2304, %v2364
  %v2391 = vadd.bf16 %v2305, %v2371
  %v2392 = vadd.bf16 %v2306, %v2378
  %v2393 = vadd.bf16 %v2307, %v2385
  %v2394 = vadd.bf16 %v2308, %v2364
  %v2395 = vadd.bf16 %v2309, %v2371
  %v2396 = vadd.bf16 %v2310, %v2378
  %v2397 = vadd.bf16 %v2311, %v2385
  %v2398 = vadd.bf16 %v2312, %v2364
  %v2399 = vadd.bf16 %v2313, %v2371
  %v2400 = vadd.bf16 %v2314, %v2378
  %v2401 = vadd.bf16 %v2315, %v2385
  %v2402 = vadd.bf16 %v2316, %v2364
  %v2403 = vadd.bf16 %v2317, %v2371
  %v2404 = vadd.bf16 %v2318, %v2378
  %v2405 = vadd.bf16 %v2319, %v2385
  %v2406 = vadd.bf16 %v2320, %v2364
  %v2407 = vadd.bf16 %v2321, %v2371
  %v2408 = vadd.bf16 %v2322, %v2378
  %v2409 = vadd.bf16 %v2323, %v2385
  %v2410 = vadd.bf16 %v2324, %v2364
  %v2411 = vadd.bf16 %v2325, %v2371
  %v2412 = vadd.bf16 %v2326, %v2378
  %v2413 = vadd.bf16 %v2327, %v2385
  %v2414 = vadd.bf16 %v2328, %v2364
  %v2415 = vadd.bf16 %v2329, %v2371
  %v2416 = vadd.bf16 %v2330, %v2378
  %v2417 = vadd.bf16 %v2331, %v2385
  %v2418 = vmax.bf16 %v2386, 0
  %v2419 = vmax.bf16 %v2387, 0
  %v2420 = vmax.bf16 %v2388, 0
  %v2421 = vmax.bf16 %v2389, 0
  %v2422 = vmax.bf16 %v2390, 0
  %v2423 = vmax.bf16 %v2391, 0
  %v2424 = vmax.bf16 %v2392, 0
  %v2425 = vmax.bf16 %v2393, 0
  %v2426 = vmax.bf16 %v2394, 0
  %v2427 = vmax.bf16 %v2395, 0
  %v2428 = vmax.bf16 %v2396, 0
  %v2429 = vmax.bf16 %v2397, 0
  %v2430 = vmax.bf16 %v2398, 0
  %v2431 = vmax.bf16 %v2399, 0
  %v2432 = vmax.bf16 %v2400, 0
  %v2433 = vmax.bf16 %v2401, 0
  %v2434 = vmax.bf16 %v2402, 0
  %v2435 = vmax.bf16 %v2403, 0
  %v2436 = vmax.bf16 %v2404, 0
  %v2437 = vmax.bf16 %v2405, 0
  %v2438 = vmax.bf16 %v2406, 0
  %v2439 = vmax.bf16 %v2407, 0
  %v2440 = vmax.bf16 %v2408, 0
  %v2441 = vmax.bf16 %v2409, 0
  %v2442 = vmax.bf16 %v2410, 0
  %v2443 = vmax.bf16 %v2411, 0
  %v2444 = vmax.bf16 %v2412, 0
  %v2445 = vmax.bf16 %v2413, 0
  %v2446 = vmax.bf16 %v2414, 0
  %v2447 = vmax.bf16 %v2415, 0
  %v2448 = vmax.bf16 %v2416, 0
  %v2449 = vmax.bf16 %v2417, 0
  %v2450 = vld [vmem:[%s3] sm:$0xff]
  %v2451 = vld [vmem:[%s3 + $0x8] sm:$0xff]
  %v2452 = vld [vmem:[%s3 + $0x10] sm:$0xff]
  %v2453 = vld [vmem:[%s3 + $0x18] sm:$0xff]
  %v2454 = vld [vmem:[%s3 + $0x20] sm:$0xff]
  %v2455 = vld [vmem:[%s3 + $0x28] sm:$0xff]
  %v2456 = vld [vmem:[%s3 + $0x30] sm:$0xff]
  %v2457 = vld [vmem:[%s3 + $0x38] sm:$0xff]
  %v2458 = vld [vmem:[%s3 + $0x40] sm:$0xff]
  %v2459 = vld [vmem:[%s3 + $0x48] sm:$0xff]
  %v2460 = vld [vmem:[%s3 + $0x50] sm:$0xff]
  %v2461 = vld [vmem:[%s3 + $0x58] sm:$0xff]
  %v2462 = vld [vmem:[%s3 + $0x60] sm:$0xff]
  %v2463 = vld [vmem:[%s3 + $0x68] sm:$0xff]
  %v2464 = vld [vmem:[%s3 + $0x70] sm:$0xff]
  %v2465 = vld [vmem:[%s3 + $0x78] sm:$0xff]
  %v2466 = vld [vmem:[%s3 + $0x80] sm:$0xff]
  %v2467 = vld [vmem:[%s3 + $0x88] sm:$0xff]
  %v2468 = vld [vmem:[%s3 + $0x90] sm:$0xff]
  %v2469 = vld [vmem:[%s3 + $0x98] sm:$0xff]
  %v2470 = vld [vmem:[%s3 + $0xa0] sm:$0xff]
  %v2471 = vld [vmem:[%s3 + $0xa8] sm:$0xff]
  %v2472 = vld [vmem:[%s3 + $0xb0] sm:$0xff]
  %v2473 = vld [vmem:[%s3 + $0xb8] sm:$0xff]
  %v2474 = vld [vmem:[%s3 + $0xc0] sm:$0xff]
  %v2475 = vld [vmem:[%s3 + $0xc8] sm:$0xff]
  %v2476 = vld [vmem:[%s3 + $0xd0] sm:$0xff]
  %v2477 = vld [vmem:[%s3 + $0xd8] sm:$0xff]
  %v2478 = vld [vmem:[%s3 + $0xe0] sm:$0xff]
  %v2479 = vld [vmem:[%s3 + $0xe8] sm:$0xff]
  %v2480 = vld [vmem:[%s3 + $0xf0] sm:$0xff]
  %v2481 = vld [vmem:[%s3 + $0xf8] sm:$0xff]
  %v2482 = vld [vmem:[%s3 + $0x100] sm:$0xff]
  %v2483 = vld [vmem:[%s3 + $0x108] sm:$0xff]
  %v2484 = vld [vmem:[%s3 + $0x110] sm:$0xff]
  %v2485 = vld [vmem:[%s3 + $0x118] sm:$0xff]
  %v2486 = vld [vmem:[%s3 + $0x120] sm:$0xff]
  %v2487 = vld [vmem:[%s3 + $0x128] sm:$0xff]
  %v2488 = vld [vmem:[%s3 + $0x130] sm:$0xff]
  %v2489 = vld [vmem:[%s3 + $0x138] sm:$0xff]
  %v2490 = vld [vmem:[%s3 + $0x140] sm:$0xff]
  %v2491 = vld [vmem:[%s3 + $0x148] sm:$0xff]
  %v2492 = vld [vmem:[%s3 + $0x150] sm:$0xff]
  %v2493 = vld [vmem:[%s3 + $0x158] sm:$0xff]
  %v2494 = vld [vmem:[%s3 + $0x160] sm:$0xff]
  %v2495 = vld [vmem:[%s3 + $0x168] sm:$0xff]
  %v2496 = vld [vmem:[%s3 + $0x170] sm:$0xff]
  %v2497 = vld [vmem:[%s3 + $0x178] sm:$0xff]
  %v2498 = vld [vmem:[%s3 + $0x180] sm:$0xff]
  %v2499 = vld [vmem:[%s3 + $0x188] sm:$0xff]
  %v2500 = vld [vmem:[%s3 + $0x190] sm:$0xff]
  %v2501 = vld [vmem:[%s3 + $0x198] sm:$0xff]
  %v2502 = vld [vmem:[%s3 + $0x1a0] sm:$0xff]
  %v2503 = vld [vmem:[%s3 + $0x1a8] sm:$0xff]
  %v2504 = vld [vmem:[%s3 + $0x1b0] sm:$0xff]
  %v2505 = vld [vmem:[%s3 + $0x1b8] sm:$0xff]
  %v2506 = vld [vmem:[%s3 + $0x1c0] sm:$0xff]
  %v2507 = vld [vmem:[%s3 + $0x1c8] sm:$0xff]
  %v2508 = vld [vmem:[%s3 + $0x1d0] sm:$0xff]
  %v2509 = vld [vmem:[%s3 + $0x1d8] sm:$0xff]
  %v2510 = vld [vmem:[%s3 + $0x1e0] sm:$0xff]
  %v2511 = vld [vmem:[%s3 + $0x1e8] sm:$0xff]
  %v2512 = vld [vmem:[%s3 + $0x1f0] sm:$0xff]
  %v2513 = vld [vmem:[%s3 + $0x1f8] sm:$0xff]
  %v2514 = vld [vmem:[%s3 + $0x200] sm:$0xff]
  %v2515 = vld [vmem:[%s3 + $0x208] sm:$0xff]
  %v2516 = vld [vmem:[%s3 + $0x210] sm:$0xff]
  %v2517 = vld [vmem:[%s3 + $0x218] sm:$0xff]
  %v2518 = vld [vmem:[%s3 + $0x220] sm:$0xff]
  %v2519 = vld [vmem:[%s3 + $0x228] sm:$0xff]
  %v2520 = vld [vmem:[%s3 + $0x230] sm:$0xff]
  %v2521 = vld [vmem:[%s3 + $0x238] sm:$0xff]
  %v2522 = vld [vmem:[%s3 + $0x240] sm:$0xff]
  %v2523 = vld [vmem:[%s3 + $0x248] sm:$0xff]
  %v2524 = vld [vmem:[%s3 + $0x250] sm:$0xff]
  %v2525 = vld [vmem:[%s3 + $0x258] sm:$0xff]
  %v2526 = vld [vmem:[%s3 + $0x260] sm:$0xff]
  %v2527 = vld [vmem:[%s3 + $0x268] sm:$0xff]
  %v2528 = vld [vmem:[%s3 + $0x270] sm:$0xff]
  %v2529 = vld [vmem:[%s3 + $0x278] sm:$0xff]
  %v2530 = vld [vmem:[%s3 + $0x280] sm:$0xff]
  %v2531 = vld [vmem:[%s3 + $0x288] sm:$0xff]
  %v2532 = vld [vmem:[%s3 + $0x290] sm:$0xff]
  %v2533 = vld [vmem:[%s3 + $0x298] sm:$0xff]
  %v2534 = vld [vmem:[%s3 + $0x2a0] sm:$0xff]
  %v2535 = vld [vmem:[%s3 + $0x2a8] sm:$0xff]
  %v2536 = vld [vmem:[%s3 + $0x2b0] sm:$0xff]
  %v2537 = vld [vmem:[%s3 + $0x2b8] sm:$0xff]
  %v2538 = vld [vmem:[%s3 + $0x2c0] sm:$0xff]
  %v2539 = vld [vmem:[%s3 + $0x2c8] sm:$0xff]
  %v2540 = vld [vmem:[%s3 + $0x2d0] sm:$0xff]
  %v2541 = vld [vmem:[%s3 + $0x2d8] sm:$0xff]
  %v2542 = vld [vmem:[%s3 + $0x2e0] sm:$0xff]
  %v2543 = vld [vmem:[%s3 + $0x2e8] sm:$0xff]
  %v2544 = vld [vmem:[%s3 + $0x2f0] sm:$0xff]
  %v2545 = vld [vmem:[%s3 + $0x2f8] sm:$0xff]
  %v2546 = vld [vmem:[%s3 + $0x300] sm:$0xff]
  %v2547 = vld [vmem:[%s3 + $0x308] sm:$0xff]
  %v2548 = vld [vmem:[%s3 + $0x310] sm:$0xff]
  %v2549 = vld [vmem:[%s3 + $0x318] sm:$0xff]
  %v2550 = vld [vmem:[%s3 + $0x320] sm:$0xff]
  %v2551 = vld [vmem:[%s3 + $0x328] sm:$0xff]
  %v2552 = vld [vmem:[%s3 + $0x330] sm:$0xff]
  %v2553 = vld [vmem:[%s3 + $0x338] sm:$0xff]
  %v2554 = vld [vmem:[%s3 + $0x340] sm:$0xff]
  %v2555 = vld [vmem:[%s3 + $0x348] sm:$0xff]
  %v2556 = vld [vmem:[%s3 + $0x350] sm:$0xff]
  %v2557 = vld [vmem:[%s3 + $0x358] sm:$0xff]
  %v2558 = vld [vmem:[%s3 + $0x360] sm:$0xff]
  %v2559 = vld [vmem:[%s3 + $0x368] sm:$0xff]
  %v2560 = vld [vmem:[%s3 + $0x370] sm:$0xff]
  %v2561 = vld [vmem:[%s3 + $0x378] sm:$0xff]
  %v2562 = vld [vmem:[%s3 + $0x380] sm:$0xff]
  %v2563 = vld [vmem:[%s3 + $0x388] sm:$0xff]
  %v2564 = vld [vmem:[%s3 + $0x390] sm:$0xff]
  %v2565 = vld [vmem:[%s3 + $0x398] sm:$0xff]
  %v2566 = vld [vmem:[%s3 + $0x3a0] sm:$0xff]
  %v2567 = vld [vmem:[%s3 + $0x3a8] sm:$0xff]
  %v2568 = vld [vmem:[%s3 + $0x3b0] sm:$0xff]
  %v2569 = vld [vmem:[%s3 + $0x3b8] sm:$0xff]
  %v2570 = vld [vmem:[%s3 + $0x3c0] sm:$0xff]
  %v2571 = vld [vmem:[%s3 + $0x3c8] sm:$0xff]
  %v2572 = vld [vmem:[%s3 + $0x3d0] sm:$0xff]
  %v2573 = vld [vmem:[%s3 + $0x3d8] sm:$0xff]
  %v2574 = vld [vmem:[%s3 + $0x3e0] sm:$0xff]
  %v2575 = vld [vmem:[%s3 + $0x3e8] sm:$0xff]
  %v2576 = vld [vmem:[%s3 + $0x3f0] sm:$0xff]
  %v2577 = vld [vmem:[%s3 + $0x3f8] sm:$0xff]
  %v2706 = vunpack.c.l.b16 %v2450
  %v2707 = vunpack.c.h.b16 %v2450
  %v2708 = vunpack.c.l.b16 %v2451
  %v2709 = vunpack.c.h.b16 %v2451
  %v2710 = vunpack.c.l.b16 %v2452
  %v2711 = vunpack.c.h.b16 %v2452
  %v2712 = vunpack.c.l.b16 %v2453
  %v2713 = vunpack.c.h.b16 %v2453
  %v2714 = vunpack.c.l.b16 %v2454
  %v2715 = vunpack.c.h.b16 %v2454
  %v2716 = vunpack.c.l.b16 %v2455
  %v2717 = vunpack.c.h.b16 %v2455
  %v2718 = vunpack.c.l.b16 %v2456
  %v2719 = vunpack.c.h.b16 %v2456
  %v2720 = vunpack.c.l.b16 %v2457
  %v2721 = vunpack.c.h.b16 %v2457
  %v2722 = vunpack.c.l.b16 %v2458
  %v2723 = vunpack.c.h.b16 %v2458
  %v2724 = vunpack.c.l.b16 %v2459
  %v2725 = vunpack.c.h.b16 %v2459
  %v2726 = vunpack.c.l.b16 %v2460
  %v2727 = vunpack.c.h.b16 %v2460
  %v2728 = vunpack.c.l.b16 %v2461
  %v2729 = vunpack.c.h.b16 %v2461
  %v2730 = vunpack.c.l.b16 %v2462
  %v2731 = vunpack.c.h.b16 %v2462
  %v2732 = vunpack.c.l.b16 %v2463
  %v2733 = vunpack.c.h.b16 %v2463
  %v2734 = vunpack.c.l.b16 %v2464
  %v2735 = vunpack.c.h.b16 %v2464
  %v2736 = vunpack.c.l.b16 %v2465
  %v2737 = vunpack.c.h.b16 %v2465
  %v2738 = vunpack.c.l.b16 %v2466
  %v2739 = vunpack.c.h.b16 %v2466
  %v2740 = vunpack.c.l.b16 %v2467
  %v2741 = vunpack.c.h.b16 %v2467
  %v2742 = vunpack.c.l.b16 %v2468
  %v2743 = vunpack.c.h.b16 %v2468
  %v2744 = vunpack.c.l.b16 %v2469
  %v2745 = vunpack.c.h.b16 %v2469
  %v2746 = vunpack.c.l.b16 %v2470
  %v2747 = vunpack.c.h.b16 %v2470
  %v2748 = vunpack.c.l.b16 %v2471
  %v2749 = vunpack.c.h.b16 %v2471
  %v2750 = vunpack.c.l.b16 %v2472
  %v2751 = vunpack.c.h.b16 %v2472
  %v2752 = vunpack.c.l.b16 %v2473
  %v2753 = vunpack.c.h.b16 %v2473
  %v2754 = vunpack.c.l.b16 %v2474
  %v2755 = vunpack.c.h.b16 %v2474
  %v2756 = vunpack.c.l.b16 %v2475
  %v2757 = vunpack.c.h.b16 %v2475
  %v2758 = vunpack.c.l.b16 %v2476
  %v2759 = vunpack.c.h.b16 %v2476
  %v2760 = vunpack.c.l.b16 %v2477
  %v2761 = vunpack.c.h.b16 %v2477
  %v2762 = vunpack.c.l.b16 %v2478
  %v2763 = vunpack.c.h.b16 %v2478
  %v2764 = vunpack.c.l.b16 %v2479
  %v2765 = vunpack.c.h.b16 %v2479
  %v2766 = vunpack.c.l.b16 %v2480
  %v2767 = vunpack.c.h.b16 %v2480
  %v2768 = vunpack.c.l.b16 %v2481
  %v2769 = vunpack.c.h.b16 %v2481
  %v2770 = vunpack.c.l.b16 %v2482
  %v2771 = vunpack.c.h.b16 %v2482
  %v2772 = vunpack.c.l.b16 %v2483
  %v2773 = vunpack.c.h.b16 %v2483
  %v2774 = vunpack.c.l.b16 %v2484
  %v2775 = vunpack.c.h.b16 %v2484
  %v2776 = vunpack.c.l.b16 %v2485
  %v2777 = vunpack.c.h.b16 %v2485
  %v2778 = vunpack.c.l.b16 %v2486
  %v2779 = vunpack.c.h.b16 %v2486
  %v2780 = vunpack.c.l.b16 %v2487
  %v2781 = vunpack.c.h.b16 %v2487
  %v2782 = vunpack.c.l.b16 %v2488
  %v2783 = vunpack.c.h.b16 %v2488
  %v2784 = vunpack.c.l.b16 %v2489
  %v2785 = vunpack.c.h.b16 %v2489
  %v2786 = vunpack.c.l.b16 %v2490
  %v2787 = vunpack.c.h.b16 %v2490
  %v2788 = vunpack.c.l.b16 %v2491
  %v2789 = vunpack.c.h.b16 %v2491
  %v2790 = vunpack.c.l.b16 %v2492
  %v2791 = vunpack.c.h.b16 %v2492
  %v2792 = vunpack.c.l.b16 %v2493
  %v2793 = vunpack.c.h.b16 %v2493
  %v2794 = vunpack.c.l.b16 %v2494
  %v2795 = vunpack.c.h.b16 %v2494
  %v2796 = vunpack.c.l.b16 %v2495
  %v2797 = vunpack.c.h.b16 %v2495
  %v2798 = vunpack.c.l.b16 %v2496
  %v2799 = vunpack.c.h.b16 %v2496
  %v2800 = vunpack.c.l.b16 %v2497
  %v2801 = vunpack.c.h.b16 %v2497
  %v2802 = vunpack.c.l.b16 %v2498
  %v2803 = vunpack.c.h.b16 %v2498
  %v2804 = vunpack.c.l.b16 %v2499
  %v2805 = vunpack.c.h.b16 %v2499
  %v2806 = vunpack.c.l.b16 %v2500
  %v2807 = vunpack.c.h.b16 %v2500
  %v2808 = vunpack.c.l.b16 %v2501
  %v2809 = vunpack.c.h.b16 %v2501
  %v2810 = vunpack.c.l.b16 %v2502
  %v2811 = vunpack.c.h.b16 %v2502
  %v2812 = vunpack.c.l.b16 %v2503
  %v2813 = vunpack.c.h.b16 %v2503
  %v2814 = vunpack.c.l.b16 %v2504
  %v2815 = vunpack.c.h.b16 %v2504
  %v2816 = vunpack.c.l.b16 %v2505
  %v2817 = vunpack.c.h.b16 %v2505
  %v2818 = vunpack.c.l.b16 %v2506
  %v2819 = vunpack.c.h.b16 %v2506
  %v2820 = vunpack.c.l.b16 %v2507
  %v2821 = vunpack.c.h.b16 %v2507
  %v2822 = vunpack.c.l.b16 %v2508
  %v2823 = vunpack.c.h.b16 %v2508
  %v2824 = vunpack.c.l.b16 %v2509
  %v2825 = vunpack.c.h.b16 %v2509
  %v2826 = vunpack.c.l.b16 %v2510
  %v2827 = vunpack.c.h.b16 %v2510
  %v2828 = vunpack.c.l.b16 %v2511
  %v2829 = vunpack.c.h.b16 %v2511
  %v2830 = vunpack.c.l.b16 %v2512
  %v2831 = vunpack.c.h.b16 %v2512
  %v2832 = vunpack.c.l.b16 %v2513
  %v2833 = vunpack.c.h.b16 %v2513
  %v2834 = vunpack.c.l.b16 %v2514
  %v2835 = vunpack.c.h.b16 %v2514
  %v2836 = vunpack.c.l.b16 %v2515
  %v2837 = vunpack.c.h.b16 %v2515
  %v2838 = vunpack.c.l.b16 %v2516
  %v2839 = vunpack.c.h.b16 %v2516
  %v2840 = vunpack.c.l.b16 %v2517
  %v2841 = vunpack.c.h.b16 %v2517
  %v2842 = vunpack.c.l.b16 %v2518
  %v2843 = vunpack.c.h.b16 %v2518
  %v2844 = vunpack.c.l.b16 %v2519
  %v2845 = vunpack.c.h.b16 %v2519
  %v2846 = vunpack.c.l.b16 %v2520
  %v2847 = vunpack.c.h.b16 %v2520
  %v2848 = vunpack.c.l.b16 %v2521
  %v2849 = vunpack.c.h.b16 %v2521
  %v2850 = vunpack.c.l.b16 %v2522
  %v2851 = vunpack.c.h.b16 %v2522
  %v2852 = vunpack.c.l.b16 %v2523
  %v2853 = vunpack.c.h.b16 %v2523
  %v2854 = vunpack.c.l.b16 %v2524
  %v2855 = vunpack.c.h.b16 %v2524
  %v2856 = vunpack.c.l.b16 %v2525
  %v2857 = vunpack.c.h.b16 %v2525
  %v2858 = vunpack.c.l.b16 %v2526
  %v2859 = vunpack.c.h.b16 %v2526
  %v2860 = vunpack.c.l.b16 %v2527
  %v2861 = vunpack.c.h.b16 %v2527
  %v2862 = vunpack.c.l.b16 %v2528
  %v2863 = vunpack.c.h.b16 %v2528
  %v2864 = vunpack.c.l.b16 %v2529
  %v2865 = vunpack.c.h.b16 %v2529
  %v2866 = vunpack.c.l.b16 %v2530
  %v2867 = vunpack.c.h.b16 %v2530
  %v2868 = vunpack.c.l.b16 %v2531
  %v2869 = vunpack.c.h.b16 %v2531
  %v2870 = vunpack.c.l.b16 %v2532
  %v2871 = vunpack.c.h.b16 %v2532
  %v2872 = vunpack.c.l.b16 %v2533
  %v2873 = vunpack.c.h.b16 %v2533
  %v2874 = vunpack.c.l.b16 %v2534
  %v2875 = vunpack.c.h.b16 %v2534
  %v2876 = vunpack.c.l.b16 %v2535
  %v2877 = vunpack.c.h.b16 %v2535
  %v2878 = vunpack.c.l.b16 %v2536
  %v2879 = vunpack.c.h.b16 %v2536
  %v2880 = vunpack.c.l.b16 %v2537
  %v2881 = vunpack.c.h.b16 %v2537
  %v2882 = vunpack.c.l.b16 %v2538
  %v2883 = vunpack.c.h.b16 %v2538
  %v2884 = vunpack.c.l.b16 %v2539
  %v2885 = vunpack.c.h.b16 %v2539
  %v2886 = vunpack.c.l.b16 %v2540
  %v2887 = vunpack.c.h.b16 %v2540
  %v2888 = vunpack.c.l.b16 %v2541
  %v2889 = vunpack.c.h.b16 %v2541
  %v2890 = vunpack.c.l.b16 %v2542
  %v2891 = vunpack.c.h.b16 %v2542
  %v2892 = vunpack.c.l.b16 %v2543
  %v2893 = vunpack.c.h.b16 %v2543
  %v2894 = vunpack.c.l.b16 %v2544
  %v2895 = vunpack.c.h.b16 %v2544
  %v2896 = vunpack.c.l.b16 %v2545
  %v2897 = vunpack.c.h.b16 %v2545
  %v2898 = vunpack.c.l.b16 %v2546
  %v2899 = vunpack.c.h.b16 %v2546
  %v2900 = vunpack.c.l.b16 %v2547
  %v2901 = vunpack.c.h.b16 %v2547
  %v2902 = vunpack.c.l.b16 %v2548
  %v2903 = vunpack.c.h.b16 %v2548
  %v2904 = vunpack.c.l.b16 %v2549
  %v2905 = vunpack.c.h.b16 %v2549
  %v2906 = vunpack.c.l.b16 %v2550
  %v2907 = vunpack.c.h.b16 %v2550
  %v2908 = vunpack.c.l.b16 %v2551
  %v2909 = vunpack.c.h.b16 %v2551
  %v2910 = vunpack.c.l.b16 %v2552
  %v2911 = vunpack.c.h.b16 %v2552
  %v2912 = vunpack.c.l.b16 %v2553
  %v2913 = vunpack.c.h.b16 %v2553
  %v2914 = vunpack.c.l.b16 %v2554
  %v2915 = vunpack.c.h.b16 %v2554
  %v2916 = vunpack.c.l.b16 %v2555
  %v2917 = vunpack.c.h.b16 %v2555
  %v2918 = vunpack.c.l.b16 %v2556
  %v2919 = vunpack.c.h.b16 %v2556
  %v2920 = vunpack.c.l.b16 %v2557
  %v2921 = vunpack.c.h.b16 %v2557
  %v2922 = vunpack.c.l.b16 %v2558
  %v2923 = vunpack.c.h.b16 %v2558
  %v2924 = vunpack.c.l.b16 %v2559
  %v2925 = vunpack.c.h.b16 %v2559
  %v2926 = vunpack.c.l.b16 %v2560
  %v2927 = vunpack.c.h.b16 %v2560
  %v2928 = vunpack.c.l.b16 %v2561
  %v2929 = vunpack.c.h.b16 %v2561
  %v2930 = vunpack.c.l.b16 %v2562
  %v2931 = vunpack.c.h.b16 %v2562
  %v2932 = vunpack.c.l.b16 %v2563
  %v2933 = vunpack.c.h.b16 %v2563
  %v2934 = vunpack.c.l.b16 %v2564
  %v2935 = vunpack.c.h.b16 %v2564
  %v2936 = vunpack.c.l.b16 %v2565
  %v2937 = vunpack.c.h.b16 %v2565
  %v2938 = vunpack.c.l.b16 %v2566
  %v2939 = vunpack.c.h.b16 %v2566
  %v2940 = vunpack.c.l.b16 %v2567
  %v2941 = vunpack.c.h.b16 %v2567
  %v2942 = vunpack.c.l.b16 %v2568
  %v2943 = vunpack.c.h.b16 %v2568
  %v2944 = vunpack.c.l.b16 %v2569
  %v2945 = vunpack.c.h.b16 %v2569
  %v2946 = vunpack.c.l.b16 %v2570
  %v2947 = vunpack.c.h.b16 %v2570
  %v2948 = vunpack.c.l.b16 %v2571
  %v2949 = vunpack.c.h.b16 %v2571
  %v2950 = vunpack.c.l.b16 %v2572
  %v2951 = vunpack.c.h.b16 %v2572
  %v2952 = vunpack.c.l.b16 %v2573
  %v2953 = vunpack.c.h.b16 %v2573
  %v2954 = vunpack.c.l.b16 %v2574
  %v2955 = vunpack.c.h.b16 %v2574
  %v2956 = vunpack.c.l.b16 %v2575
  %v2957 = vunpack.c.h.b16 %v2575
  %v2958 = vunpack.c.l.b16 %v2576
  %v2959 = vunpack.c.h.b16 %v2576
  %v2960 = vunpack.c.l.b16 %v2577
  %v2961 = vunpack.c.h.b16 %v2577
  %v2962 = vpack.c.b16 %v2710, %v2706
  %v2963 = vpack.c.b16 %v2711, %v2707
  %v2964 = vpack.c.b16 %v2712, %v2708
  %v2965 = vpack.c.b16 %v2713, %v2709
  %v2966 = vpack.c.b16 %v2718, %v2714
  %v2967 = vpack.c.b16 %v2719, %v2715
  %v2968 = vpack.c.b16 %v2720, %v2716
  %v2969 = vpack.c.b16 %v2721, %v2717
  %v2970 = vpack.c.b16 %v2726, %v2722
  %v2971 = vpack.c.b16 %v2727, %v2723
  %v2972 = vpack.c.b16 %v2728, %v2724
  %v2973 = vpack.c.b16 %v2729, %v2725
  %v2974 = vpack.c.b16 %v2734, %v2730
  %v2975 = vpack.c.b16 %v2735, %v2731
  %v2976 = vpack.c.b16 %v2736, %v2732
  %v2977 = vpack.c.b16 %v2737, %v2733
  %v2978 = vpack.c.b16 %v2742, %v2738
  %v2979 = vpack.c.b16 %v2743, %v2739
  %v2980 = vpack.c.b16 %v2744, %v2740
  %v2981 = vpack.c.b16 %v2745, %v2741
  %v2982 = vpack.c.b16 %v2750, %v2746
  %v2983 = vpack.c.b16 %v2751, %v2747
  %v2984 = vpack.c.b16 %v2752, %v2748
  %v2985 = vpack.c.b16 %v2753, %v2749
  %v2986 = vpack.c.b16 %v2758, %v2754
  %v2987 = vpack.c.b16 %v2759, %v2755
  %v2988 = vpack.c.b16 %v2760, %v2756
  %v2989 = vpack.c.b16 %v2761, %v2757
  %v2990 = vpack.c.b16 %v2766, %v2762
  %v2991 = vpack.c.b16 %v2767, %v2763
  %v2992 = vpack.c.b16 %v2768, %v2764
  %v2993 = vpack.c.b16 %v2769, %v2765
  %v2994 = vpack.c.b16 %v2774, %v2770
  %v2995 = vpack.c.b16 %v2775, %v2771
  %v2996 = vpack.c.b16 %v2776, %v2772
  %v2997 = vpack.c.b16 %v2777, %v2773
  %v2998 = vpack.c.b16 %v2782, %v2778
  %v2999 = vpack.c.b16 %v2783, %v2779
  %v3000 = vpack.c.b16 %v2784, %v2780
  %v3001 = vpack.c.b16 %v2785, %v2781
  %v3002 = vpack.c.b16 %v2790, %v2786
  %v3003 = vpack.c.b16 %v2791, %v2787
  %v3004 = vpack.c.b16 %v2792, %v2788
  %v3005 = vpack.c.b16 %v2793, %v2789
  %v3006 = vpack.c.b16 %v2798, %v2794
  %v3007 = vpack.c.b16 %v2799, %v2795
  %v3008 = vpack.c.b16 %v2800, %v2796
  %v3009 = vpack.c.b16 %v2801, %v2797
  %v3010 = vpack.c.b16 %v2806, %v2802
  %v3011 = vpack.c.b16 %v2807, %v2803
  %v3012 = vpack.c.b16 %v2808, %v2804
  %v3013 = vpack.c.b16 %v2809, %v2805
  %v3014 = vpack.c.b16 %v2814, %v2810
  %v3015 = vpack.c.b16 %v2815, %v2811
  %v3016 = vpack.c.b16 %v2816, %v2812
  %v3017 = vpack.c.b16 %v2817, %v2813
  %v3018 = vpack.c.b16 %v2822, %v2818
  %v3019 = vpack.c.b16 %v2823, %v2819
  %v3020 = vpack.c.b16 %v2824, %v2820
  %v3021 = vpack.c.b16 %v2825, %v2821
  %v3022 = vpack.c.b16 %v2830, %v2826
  %v3023 = vpack.c.b16 %v2831, %v2827
  %v3024 = vpack.c.b16 %v2832, %v2828
  %v3025 = vpack.c.b16 %v2833, %v2829
  %v3026 = vpack.c.b16 %v2838, %v2834
  %v3027 = vpack.c.b16 %v2839, %v2835
  %v3028 = vpack.c.b16 %v2840, %v2836
  %v3029 = vpack.c.b16 %v2841, %v2837
  %v3030 = vpack.c.b16 %v2846, %v2842
  %v3031 = vpack.c.b16 %v2847, %v2843
  %v3032 = vpack.c.b16 %v2848, %v2844
  %v3033 = vpack.c.b16 %v2849, %v2845
  %v3034 = vpack.c.b16 %v2854, %v2850
  %v3035 = vpack.c.b16 %v2855, %v2851
  %v3036 = vpack.c.b16 %v2856, %v2852
  %v3037 = vpack.c.b16 %v2857, %v2853
  %v3038 = vpack.c.b16 %v2862, %v2858
  %v3039 = vpack.c.b16 %v2863, %v2859
  %v3040 = vpack.c.b16 %v2864, %v2860
  %v3041 = vpack.c.b16 %v2865, %v2861
  %v3042 = vpack.c.b16 %v2870, %v2866
  %v3043 = vpack.c.b16 %v2871, %v2867
  %v3044 = vpack.c.b16 %v2872, %v2868
  %v3045 = vpack.c.b16 %v2873, %v2869
  %v3046 = vpack.c.b16 %v2878, %v2874
  %v3047 = vpack.c.b16 %v2879, %v2875
  %v3048 = vpack.c.b16 %v2880, %v2876
  %v3049 = vpack.c.b16 %v2881, %v2877
  %v3050 = vpack.c.b16 %v2886, %v2882
  %v3051 = vpack.c.b16 %v2887, %v2883
  %v3052 = vpack.c.b16 %v2888, %v2884
  %v3053 = vpack.c.b16 %v2889, %v2885
  %v3054 = vpack.c.b16 %v2894, %v2890
  %v3055 = vpack.c.b16 %v2895, %v2891
  %v3056 = vpack.c.b16 %v2896, %v2892
  %v3057 = vpack.c.b16 %v2897, %v2893
  %v3058 = vpack.c.b16 %v2902, %v2898
  %v3059 = vpack.c.b16 %v2903, %v2899
  %v3060 = vpack.c.b16 %v2904, %v2900
  %v3061 = vpack.c.b16 %v2905, %v2901
  %v3062 = vpack.c.b16 %v2910, %v2906
  %v3063 = vpack.c.b16 %v2911, %v2907
  %v3064 = vpack.c.b16 %v2912, %v2908
  %v3065 = vpack.c.b16 %v2913, %v2909
  %v3066 = vpack.c.b16 %v2918, %v2914
  %v3067 = vpack.c.b16 %v2919, %v2915
  %v3068 = vpack.c.b16 %v2920, %v2916
  %v3069 = vpack.c.b16 %v2921, %v2917
  %v3070 = vpack.c.b16 %v2926, %v2922
  %v3071 = vpack.c.b16 %v2927, %v2923
  %v3072 = vpack.c.b16 %v2928, %v2924
  %v3073 = vpack.c.b16 %v2929, %v2925
  %v3074 = vpack.c.b16 %v2934, %v2930
  %v3075 = vpack.c.b16 %v2935, %v2931
  %v3076 = vpack.c.b16 %v2936, %v2932
  %v3077 = vpack.c.b16 %v2937, %v2933
  %v3078 = vpack.c.b16 %v2942, %v2938
  %v3079 = vpack.c.b16 %v2943, %v2939
  %v3080 = vpack.c.b16 %v2944, %v2940
  %v3081 = vpack.c.b16 %v2945, %v2941
  %v3082 = vpack.c.b16 %v2950, %v2946
  %v3083 = vpack.c.b16 %v2951, %v2947
  %v3084 = vpack.c.b16 %v2952, %v2948
  %v3085 = vpack.c.b16 %v2953, %v2949
  %v3086 = vpack.c.b16 %v2958, %v2954
  %v3087 = vpack.c.b16 %v2959, %v2955
  %v3088 = vpack.c.b16 %v2960, %v2956
  %v3089 = vpack.c.b16 %v2961, %v2957
  %3218 = vmatprep.subr.bf16.mxu0 %v2963
  %3219 = vmatpush1.bf16.msra.mxu0 %v2962
  %3220 = vmatprep.subr.bf16.mxu0 %v2967
  %3221 = vmatpush1.bf16.msra.mxu0 %v2966
  %3222 = vmatprep.subr.bf16.mxu0 %v2971
  %3223 = vmatpush1.bf16.msra.mxu0 %v2970
  %3224 = vmatprep.subr.bf16.mxu0 %v2975
  %3225 = vmatpush1.bf16.msra.mxu0 %v2974
  %3226 = vmatprep.subr.bf16.mxu0 %v2979
  %3227 = vmatpush1.bf16.msra.mxu0 %v2978
  %3228 = vmatprep.subr.bf16.mxu0 %v2983
  %3229 = vmatpush1.bf16.msra.mxu0 %v2982
  %3230 = vmatprep.subr.bf16.mxu0 %v2987
  %3231 = vmatpush1.bf16.msra.mxu0 %v2986
  %3232 = vmatprep.subr.bf16.mxu0 %v2991
  %3233 = vmatpush1.bf16.msra.mxu0 %v2990
  %3234 = vmatprep.subr.bf16.mxu0 %v2995
  %3235 = vmatpush1.bf16.msra.mxu0 %v2994
  %3236 = vmatprep.subr.bf16.mxu0 %v2999
  %3237 = vmatpush1.bf16.msra.mxu0 %v2998
  %3238 = vmatprep.subr.bf16.mxu0 %v3003
  %3239 = vmatpush1.bf16.msra.mxu0 %v3002
  %3240 = vmatprep.subr.bf16.mxu0 %v3007
  %3241 = vmatpush1.bf16.msra.mxu0 %v3006
  %3242 = vmatprep.subr.bf16.mxu0 %v3011
  %3243 = vmatpush1.bf16.msra.mxu0 %v3010
  %3244 = vmatprep.subr.bf16.mxu0 %v3015
  %3245 = vmatpush1.bf16.msra.mxu0 %v3014
  %3246 = vmatprep.subr.bf16.mxu0 %v3019
  %3247 = vmatpush1.bf16.msra.mxu0 %v3018
  %3248 = vmatprep.subr.bf16.mxu0 %v3023
  %3249 = vmatpush1.bf16.msra.mxu0 %v3022
  %3250 = vmatprep.mubr.bf16.mxu0 %v2419
  %3251 = vmatmul.mubr.bf16.gmra.mrb[0].mxu0 %v2418
  %v3252 = vpop.f32.mrb[0].mxu0
  %v3253 = vadd.f32 0.0, %v3252
  %v3254 = vpop.f32.mrb[0].mxu0
  %v3255 = vadd.f32 0.0, %v3254
  %v3256 = vpop.f32.mrb[0].mxu0
  %v3257 = vadd.f32 0.0, %v3256
  %v3258 = vpop.f32.mrb[0].mxu0
  %v3259 = vadd.f32 0.0, %v3258
  %3260 = vmatprep.mubr.bf16.mxu0 %v2423
  %3261 = vmatmul.mubr.bf16.gmra.mrb[0].mxu0 %v2422
  %v3262 = vpop.f32.mrb[0].mxu0
  %v3263 = vadd.f32 0.0, %v3262
  %v3264 = vpop.f32.mrb[0].mxu0
  %v3265 = vadd.f32 0.0, %v3264
  %v3266 = vpop.f32.mrb[0].mxu0
  %v3267 = vadd.f32 0.0, %v3266
  %v3268 = vpop.f32.mrb[0].mxu0
  %v3269 = vadd.f32 0.0, %v3268
  %3270 = vmatprep.mubr.bf16.mxu0 %v2427
  %3271 = vmatmul.mubr.bf16.gmra.mrb[0].mxu0 %v2426
  %v3272 = vpop.f32.mrb[0].mxu0
  %v3273 = vadd.f32 0.0, %v3272
  %v3274 = vpop.f32.mrb[0].mxu0
  %v3275 = vadd.f32 0.0, %v3274
  %v3276 = vpop.f32.mrb[0].mxu0
  %v3277 = vadd.f32 0.0, %v3276
  %v3278 = vpop.f32.mrb[0].mxu0
  %v3279 = vadd.f32 0.0, %v3278
  %3280 = vmatprep.mubr.bf16.mxu0 %v2431
  %3281 = vmatmul.mubr.bf16.gmra.mrb[0].mxu0 %v2430
  %v3282 = vpop.f32.mrb[0].mxu0
  %v3283 = vadd.f32 0.0, %v3282
  %v3284 = vpop.f32.mrb[0].mxu0
  %v3285 = vadd.f32 0.0, %v3284
  %v3286 = vpop.f32.mrb[0].mxu0
  %v3287 = vadd.f32 0.0, %v3286
  %v3288 = vpop.f32.mrb[0].mxu0
  %v3289 = vadd.f32 0.0, %v3288
  %3290 = vmatprep.mubr.bf16.mxu0 %v2435
  %3291 = vmatmul.mubr.bf16.gmra.mrb[0].mxu0 %v2434
  %v3292 = vpop.f32.mrb[0].mxu0
  %v3293 = vadd.f32 0.0, %v3292
  %v3294 = vpop.f32.mrb[0].mxu0
  %v3295 = vadd.f32 0.0, %v3294
  %v3296 = vpop.f32.mrb[0].mxu0
  %v3297 = vadd.f32 0.0, %v3296
  %v3298 = vpop.f32.mrb[0].mxu0
  %v3299 = vadd.f32 0.0, %v3298
  %3300 = vmatprep.mubr.bf16.mxu0 %v2439
  %3301 = vmatmul.mubr.bf16.gmra.mrb[0].mxu0 %v2438
  %v3302 = vpop.f32.mrb[0].mxu0
  %v3303 = vadd.f32 0.0, %v3302
  %v3304 = vpop.f32.mrb[0].mxu0
  %v3305 = vadd.f32 0.0, %v3304
  %v3306 = vpop.f32.mrb[0].mxu0
  %v3307 = vadd.f32 0.0, %v3306
  %v3308 = vpop.f32.mrb[0].mxu0
  %v3309 = vadd.f32 0.0, %v3308
  %3310 = vmatprep.mubr.bf16.mxu0 %v2443
  %3311 = vmatmul.mubr.bf16.gmra.mrb[0].mxu0 %v2442
  %v3312 = vpop.f32.mrb[0].mxu0
  %v3313 = vadd.f32 0.0, %v3312
  %v3314 = vpop.f32.mrb[0].mxu0
  %v3315 = vadd.f32 0.0, %v3314
  %v3316 = vpop.f32.mrb[0].mxu0
  %v3317 = vadd.f32 0.0, %v3316
  %v3318 = vpop.f32.mrb[0].mxu0
  %v3319 = vadd.f32 0.0, %v3318
  %3320 = vmatprep.mubr.bf16.mxu0 %v2447
  %3321 = vmatmul.mubr.bf16.gmra.mrb[0].mxu0 %v2446
  %v3322 = vpop.f32.mrb[0].mxu0
  %v3323 = vadd.f32 0.0, %v3322
  %v3324 = vpop.f32.mrb[0].mxu0
  %v3325 = vadd.f32 0.0, %v3324
  %v3326 = vpop.f32.mrb[0].mxu0
  %v3327 = vadd.f32 0.0, %v3326
  %v3328 = vpop.f32.mrb[0].mxu0
  %v3329 = vadd.f32 0.0, %v3328
  %3330 = vdwg.mxu0
  %3331 = vmatprep.subr.bf16.mxu0 %v3027
  %3332 = vmatpush1.bf16.msra.mxu0 %v3026
  %3333 = vmatprep.subr.bf16.mxu0 %v3031
  %3334 = vmatpush1.bf16.msra.mxu0 %v3030
  %3335 = vmatprep.subr.bf16.mxu0 %v3035
  %3336 = vmatpush1.bf16.msra.mxu0 %v3034
  %3337 = vmatprep.subr.bf16.mxu0 %v3039
  %3338 = vmatpush1.bf16.msra.mxu0 %v3038
  %3339 = vmatprep.subr.bf16.mxu0 %v3043
  %3340 = vmatpush1.bf16.msra.mxu0 %v3042
  %3341 = vmatprep.subr.bf16.mxu0 %v3047
  %3342 = vmatpush1.bf16.msra.mxu0 %v3046
  %3343 = vmatprep.subr.bf16.mxu0 %v3051
  %3344 = vmatpush1.bf16.msra.mxu0 %v3050
  %3345 = vmatprep.subr.bf16.mxu0 %v3055
  %3346 = vmatpush1.bf16.msra.mxu0 %v3054
  %3347 = vmatprep.subr.bf16.mxu0 %v3059
  %3348 = vmatpush1.bf16.msra.mxu0 %v3058
  %3349 = vmatprep.subr.bf16.mxu0 %v3063
  %3350 = vmatpush1.bf16.msra.mxu0 %v3062
  %3351 = vmatprep.subr.bf16.mxu0 %v3067
  %3352 = vmatpush1.bf16.msra.mxu0 %v3066
  %3353 = vmatprep.subr.bf16.mxu0 %v3071
  %3354 = vmatpush1.bf16.msra.mxu0 %v3070
  %3355 = vmatprep.subr.bf16.mxu0 %v3075
  %3356 = vmatpush1.bf16.msra.mxu0 %v3074
  %3357 = vmatprep.subr.bf16.mxu0 %v3079
  %3358 = vmatpush1.bf16.msra.mxu0 %v3078
  %3359 = vmatprep.subr.bf16.mxu0 %v3083
  %3360 = vmatpush1.bf16.msra.mxu0 %v3082
  %3361 = vmatprep.subr.bf16.mxu0 %v3087
  %3362 = vmatpush1.bf16.msra.mxu0 %v3086
  %3363 = vmatprep.mubr.bf16.mxu0 %v2421
  %3364 = vmatmul.mubr.bf16.gmra.mrb[0].mxu0 %v2420
  %v3365 = vpop.f32.mrb[0].mxu0
  %v3366 = vadd.f32 %v3253, %v3365
  %v3367 = vpop.f32.mrb[0].mxu0
  %v3368 = vadd.f32 %v3255, %v3367
  %v3369 = vpop.f32.mrb[0].mxu0
  %v3370 = vadd.f32 %v3257, %v3369
  %v3371 = vpop.f32.mrb[0].mxu0
  %v3372 = vadd.f32 %v3259, %v3371
  %3373 = vmatprep.mubr.bf16.mxu0 %v2425
  %3374 = vmatmul.mubr.bf16.gmra.mrb[0].mxu0 %v2424
  %v3375 = vpop.f32.mrb[0].mxu0
  %v3376 = vadd.f32 %v3263, %v3375
  %v3377 = vpop.f32.mrb[0].mxu0
  %v3378 = vadd.f32 %v3265, %v3377
  %v3379 = vpop.f32.mrb[0].mxu0
  %v3380 = vadd.f32 %v3267, %v3379
  %v3381 = vpop.f32.mrb[0].mxu0
  %v3382 = vadd.f32 %v3269, %v3381
  %3383 = vmatprep.mubr.bf16.mxu0 %v2429
  %3384 = vmatmul.mubr.bf16.gmra.mrb[0].mxu0 %v2428
  %v3385 = vpop.f32.mrb[0].mxu0
  %v3386 = vadd.f32 %v3273, %v3385
  %v3387 = vpop.f32.mrb[0].mxu0
  %v3388 = vadd.f32 %v3275, %v3387
  %v3389 = vpop.f32.mrb[0].mxu0
  %v3390 = vadd.f32 %v3277, %v3389
  %v3391 = vpop.f32.mrb[0].mxu0
  %v3392 = vadd.f32 %v3279, %v3391
  %3393 = vmatprep.mubr.bf16.mxu0 %v2433
  %3394 = vmatmul.mubr.bf16.gmra.mrb[0].mxu0 %v2432
  %v3395 = vpop.f32.mrb[0].mxu0
  %v3396 = vadd.f32 %v3283, %v3395
  %v3397 = vpop.f32.mrb[0].mxu0
  %v3398 = vadd.f32 %v3285, %v3397
  %v3399 = vpop.f32.mrb[0].mxu0
  %v3400 = vadd.f32 %v3287, %v3399
  %v3401 = vpop.f32.mrb[0].mxu0
  %v3402 = vadd.f32 %v3289, %v3401
  %3403 = vmatprep.mubr.bf16.mxu0 %v2437
  %3404 = vmatmul.mubr.bf16.gmra.mrb[0].mxu0 %v2436
  %v3405 = vpop.f32.mrb[0].mxu0
  %v3406 = vadd.f32 %v3293, %v3405
  %v3407 = vpop.f32.mrb[0].mxu0
  %v3408 = vadd.f32 %v3295, %v3407
  %v3409 = vpop.f32.mrb[0].mxu0
  %v3410 = vadd.f32 %v3297, %v3409
  %v3411 = vpop.f32.mrb[0].mxu0
  %v3412 = vadd.f32 %v3299, %v3411
  %3413 = vmatprep.mubr.bf16.mxu0 %v2441
  %3414 = vmatmul.mubr.bf16.gmra.mrb[0].mxu0 %v2440
  %v3415 = vpop.f32.mrb[0].mxu0
  %v3416 = vadd.f32 %v3303, %v3415
  %v3417 = vpop.f32.mrb[0].mxu0
  %v3418 = vadd.f32 %v3305, %v3417
  %v3419 = vpop.f32.mrb[0].mxu0
  %v3420 = vadd.f32 %v3307, %v3419
  %v3421 = vpop.f32.mrb[0].mxu0
  %v3422 = vadd.f32 %v3309, %v3421
  %3423 = vmatprep.mubr.bf16.mxu0 %v2445
  %3424 = vmatmul.mubr.bf16.gmra.mrb[0].mxu0 %v2444
  %v3425 = vpop.f32.mrb[0].mxu0
  %v3426 = vadd.f32 %v3313, %v3425
  %v3427 = vpop.f32.mrb[0].mxu0
  %v3428 = vadd.f32 %v3315, %v3427
  %v3429 = vpop.f32.mrb[0].mxu0
  %v3430 = vadd.f32 %v3317, %v3429
  %v3431 = vpop.f32.mrb[0].mxu0
  %v3432 = vadd.f32 %v3319, %v3431
  %3433 = vmatprep.mubr.bf16.mxu0 %v2449
  %3434 = vmatmul.mubr.bf16.gmra.mrb[0].mxu0 %v2448
  %v3435 = vpop.f32.mrb[0].mxu0
  %v3436 = vadd.f32 %v3323, %v3435
  %v3437 = vpop.f32.mrb[0].mxu0
  %v3438 = vadd.f32 %v3325, %v3437
  %v3439 = vpop.f32.mrb[0].mxu0
  %v3440 = vadd.f32 %v3327, %v3439
  %v3441 = vpop.f32.mrb[0].mxu0
  %v3442 = vadd.f32 %v3329, %v3441
  %3443 = vdwg.mxu0
  %3444 = vmatprep.subr.bf16.mxu0 %v2965
  %3445 = vmatpush1.bf16.msra.mxu0 %v2964
  %3446 = vmatprep.subr.bf16.mxu0 %v2969
  %3447 = vmatpush1.bf16.msra.mxu0 %v2968
  %3448 = vmatprep.subr.bf16.mxu0 %v2973
  %3449 = vmatpush1.bf16.msra.mxu0 %v2972
  %3450 = vmatprep.subr.bf16.mxu0 %v2977
  %3451 = vmatpush1.bf16.msra.mxu0 %v2976
  %3452 = vmatprep.subr.bf16.mxu0 %v2981
  %3453 = vmatpush1.bf16.msra.mxu0 %v2980
  %3454 = vmatprep.subr.bf16.mxu0 %v2985
  %3455 = vmatpush1.bf16.msra.mxu0 %v2984
  %3456 = vmatprep.subr.bf16.mxu0 %v2989
  %3457 = vmatpush1.bf16.msra.mxu0 %v2988
  %3458 = vmatprep.subr.bf16.mxu0 %v2993
  %3459 = vmatpush1.bf16.msra.mxu0 %v2992
  %3460 = vmatprep.subr.bf16.mxu0 %v2997
  %3461 = vmatpush1.bf16.msra.mxu0 %v2996
  %3462 = vmatprep.subr.bf16.mxu0 %v3001
  %3463 = vmatpush1.bf16.msra.mxu0 %v3000
  %3464 = vmatprep.subr.bf16.mxu0 %v3005
  %3465 = vmatpush1.bf16.msra.mxu0 %v3004
  %3466 = vmatprep.subr.bf16.mxu0 %v3009
  %3467 = vmatpush1.bf16.msra.mxu0 %v3008
  %3468 = vmatprep.subr.bf16.mxu0 %v3013
  %3469 = vmatpush1.bf16.msra.mxu0 %v3012
  %3470 = vmatprep.subr.bf16.mxu0 %v3017
  %3471 = vmatpush1.bf16.msra.mxu0 %v3016
  %3472 = vmatprep.subr.bf16.mxu0 %v3021
  %3473 = vmatpush1.bf16.msra.mxu0 %v3020
  %3474 = vmatprep.subr.bf16.mxu0 %v3025
  %3475 = vmatpush1.bf16.msra.mxu0 %v3024
  %3476 = vmatprep.mubr.bf16.mxu0 %v2419
  %3477 = vmatmul.mubr.bf16.gmra.mrb[0].mxu0 %v2418
  %v3478 = vpop.f32.mrb[0].mxu0
  %v3479 = vadd.f32 0.0, %v3478
  %v3480 = vpop.f32.mrb[0].mxu0
  %v3481 = vadd.f32 0.0, %v3480
  %v3482 = vpop.f32.mrb[0].mxu0
  %v3483 = vadd.f32 0.0, %v3482
  %v3484 = vpop.f32.mrb[0].mxu0
  %v3485 = vadd.f32 0.0, %v3484
  %3486 = vmatprep.mubr.bf16.mxu0 %v2423
  %3487 = vmatmul.mubr.bf16.gmra.mrb[0].mxu0 %v2422
  %v3488 = vpop.f32.mrb[0].mxu0
  %v3489 = vadd.f32 0.0, %v3488
  %v3490 = vpop.f32.mrb[0].mxu0
  %v3491 = vadd.f32 0.0, %v3490
  %v3492 = vpop.f32.mrb[0].mxu0
  %v3493 = vadd.f32 0.0, %v3492
  %v3494 = vpop.f32.mrb[0].mxu0
  %v3495 = vadd.f32 0.0, %v3494
  %3496 = vmatprep.mubr.bf16.mxu0 %v2427
  %3497 = vmatmul.mubr.bf16.gmra.mrb[0].mxu0 %v2426
  %v3498 = vpop.f32.mrb[0].mxu0
  %v3499 = vadd.f32 0.0, %v3498
  %v3500 = vpop.f32.mrb[0].mxu0
  %v3501 = vadd.f32 0.0, %v3500
  %v3502 = vpop.f32.mrb[0].mxu0
  %v3503 = vadd.f32 0.0, %v3502
  %v3504 = vpop.f32.mrb[0].mxu0
  %v3505 = vadd.f32 0.0, %v3504
  %3506 = vmatprep.mubr.bf16.mxu0 %v2431
  %3507 = vmatmul.mubr.bf16.gmra.mrb[0].mxu0 %v2430
  %v3508 = vpop.f32.mrb[0].mxu0
  %v3509 = vadd.f32 0.0, %v3508
  %v3510 = vpop.f32.mrb[0].mxu0
  %v3511 = vadd.f32 0.0, %v3510
  %v3512 = vpop.f32.mrb[0].mxu0
  %v3513 = vadd.f32 0.0, %v3512
  %v3514 = vpop.f32.mrb[0].mxu0
  %v3515 = vadd.f32 0.0, %v3514
  %3516 = vmatprep.mubr.bf16.mxu0 %v2435
  %3517 = vmatmul.mubr.bf16.gmra.mrb[0].mxu0 %v2434
  %v3518 = vpop.f32.mrb[0].mxu0
  %v3519 = vadd.f32 0.0, %v3518
  %v3520 = vpop.f32.mrb[0].mxu0
  %v3521 = vadd.f32 0.0, %v3520
  %v3522 = vpop.f32.mrb[0].mxu0
  %v3523 = vadd.f32 0.0, %v3522
  %v3524 = vpop.f32.mrb[0].mxu0
  %v3525 = vadd.f32 0.0, %v3524
  %3526 = vmatprep.mubr.bf16.mxu0 %v2439
  %3527 = vmatmul.mubr.bf16.gmra.mrb[0].mxu0 %v2438
  %v3528 = vpop.f32.mrb[0].mxu0
  %v3529 = vadd.f32 0.0, %v3528
  %v3530 = vpop.f32.mrb[0].mxu0
  %v3531 = vadd.f32 0.0, %v3530
  %v3532 = vpop.f32.mrb[0].mxu0
  %v3533 = vadd.f32 0.0, %v3532
  %v3534 = vpop.f32.mrb[0].mxu0
  %v3535 = vadd.f32 0.0, %v3534
  %3536 = vmatprep.mubr.bf16.mxu0 %v2443
  %3537 = vmatmul.mubr.bf16.gmra.mrb[0].mxu0 %v2442
  %v3538 = vpop.f32.mrb[0].mxu0
  %v3539 = vadd.f32 0.0, %v3538
  %v3540 = vpop.f32.mrb[0].mxu0
  %v3541 = vadd.f32 0.0, %v3540
  %v3542 = vpop.f32.mrb[0].mxu0
  %v3543 = vadd.f32 0.0, %v3542
  %v3544 = vpop.f32.mrb[0].mxu0
  %v3545 = vadd.f32 0.0, %v3544
  %3546 = vmatprep.mubr.bf16.mxu0 %v2447
  %3547 = vmatmul.mubr.bf16.gmra.mrb[0].mxu0 %v2446
  %v3548 = vpop.f32.mrb[0].mxu0
  %v3549 = vadd.f32 0.0, %v3548
  %v3550 = vpop.f32.mrb[0].mxu0
  %v3551 = vadd.f32 0.0, %v3550
  %v3552 = vpop.f32.mrb[0].mxu0
  %v3553 = vadd.f32 0.0, %v3552
  %v3554 = vpop.f32.mrb[0].mxu0
  %v3555 = vadd.f32 0.0, %v3554
  %3556 = vdwg.mxu0
  %3557 = vmatprep.subr.bf16.mxu0 %v3029
  %3558 = vmatpush1.bf16.msra.mxu0 %v3028
  %3559 = vmatprep.subr.bf16.mxu0 %v3033
  %3560 = vmatpush1.bf16.msra.mxu0 %v3032
  %3561 = vmatprep.subr.bf16.mxu0 %v3037
  %3562 = vmatpush1.bf16.msra.mxu0 %v3036
  %3563 = vmatprep.subr.bf16.mxu0 %v3041
  %3564 = vmatpush1.bf16.msra.mxu0 %v3040
  %3565 = vmatprep.subr.bf16.mxu0 %v3045
  %3566 = vmatpush1.bf16.msra.mxu0 %v3044
  %3567 = vmatprep.subr.bf16.mxu0 %v3049
  %3568 = vmatpush1.bf16.msra.mxu0 %v3048
  %3569 = vmatprep.subr.bf16.mxu0 %v3053
  %3570 = vmatpush1.bf16.msra.mxu0 %v3052
  %3571 = vmatprep.subr.bf16.mxu0 %v3057
  %3572 = vmatpush1.bf16.msra.mxu0 %v3056
  %3573 = vmatprep.subr.bf16.mxu0 %v3061
  %3574 = vmatpush1.bf16.msra.mxu0 %v3060
  %3575 = vmatprep.subr.bf16.mxu0 %v3065
  %3576 = vmatpush1.bf16.msra.mxu0 %v3064
  %3577 = vmatprep.subr.bf16.mxu0 %v3069
  %3578 = vmatpush1.bf16.msra.mxu0 %v3068
  %3579 = vmatprep.subr.bf16.mxu0 %v3073
  %3580 = vmatpush1.bf16.msra.mxu0 %v3072
  %3581 = vmatprep.subr.bf16.mxu0 %v3077
  %3582 = vmatpush1.bf16.msra.mxu0 %v3076
  %3583 = vmatprep.subr.bf16.mxu0 %v3081
  %3584 = vmatpush1.bf16.msra.mxu0 %v3080
  %3585 = vmatprep.subr.bf16.mxu0 %v3085
  %3586 = vmatpush1.bf16.msra.mxu0 %v3084
  %3587 = vmatprep.subr.bf16.mxu0 %v3089
  %3588 = vmatpush1.bf16.msra.mxu0 %v3088
  %3589 = vmatprep.mubr.bf16.mxu0 %v2421
  %3590 = vmatmul.mubr.bf16.gmra.mrb[0].mxu0 %v2420
  %v3591 = vpop.f32.mrb[0].mxu0
  %v3592 = vadd.f32 %v3479, %v3591
  %v3593 = vpop.f32.mrb[0].mxu0
  %v3594 = vadd.f32 %v3481, %v3593
  %v3595 = vpop.f32.mrb[0].mxu0
  %v3596 = vadd.f32 %v3483, %v3595
  %v3597 = vpop.f32.mrb[0].mxu0
  %v3598 = vadd.f32 %v3485, %v3597
  %3599 = vmatprep.mubr.bf16.mxu0 %v2425
  %3600 = vmatmul.mubr.bf16.gmra.mrb[0].mxu0 %v2424
  %v3601 = vpop.f32.mrb[0].mxu0
  %v3602 = vadd.f32 %v3489, %v3601
  %v3603 = vpop.f32.mrb[0].mxu0
  %v3604 = vadd.f32 %v3491, %v3603
  %v3605 = vpop.f32.mrb[0].mxu0
  %v3606 = vadd.f32 %v3493, %v3605
  %v3607 = vpop.f32.mrb[0].mxu0
  %v3608 = vadd.f32 %v3495, %v3607
  %3609 = vmatprep.mubr.bf16.mxu0 %v2429
  %3610 = vmatmul.mubr.bf16.gmra.mrb[0].mxu0 %v2428
  %v3611 = vpop.f32.mrb[0].mxu0
  %v3612 = vadd.f32 %v3499, %v3611
  %v3613 = vpop.f32.mrb[0].mxu0
  %v3614 = vadd.f32 %v3501, %v3613
  %v3615 = vpop.f32.mrb[0].mxu0
  %v3616 = vadd.f32 %v3503, %v3615
  %v3617 = vpop.f32.mrb[0].mxu0
  %v3618 = vadd.f32 %v3505, %v3617
  %3619 = vmatprep.mubr.bf16.mxu0 %v2433
  %3620 = vmatmul.mubr.bf16.gmra.mrb[0].mxu0 %v2432
  %v3621 = vpop.f32.mrb[0].mxu0
  %v3622 = vadd.f32 %v3509, %v3621
  %v3623 = vpop.f32.mrb[0].mxu0
  %v3624 = vadd.f32 %v3511, %v3623
  %v3625 = vpop.f32.mrb[0].mxu0
  %v3626 = vadd.f32 %v3513, %v3625
  %v3627 = vpop.f32.mrb[0].mxu0
  %v3628 = vadd.f32 %v3515, %v3627
  %3629 = vmatprep.mubr.bf16.mxu0 %v2437
  %3630 = vmatmul.mubr.bf16.gmra.mrb[0].mxu0 %v2436
  %v3631 = vpop.f32.mrb[0].mxu0
  %v3632 = vadd.f32 %v3519, %v3631
  %v3633 = vpop.f32.mrb[0].mxu0
  %v3634 = vadd.f32 %v3521, %v3633
  %v3635 = vpop.f32.mrb[0].mxu0
  %v3636 = vadd.f32 %v3523, %v3635
  %v3637 = vpop.f32.mrb[0].mxu0
  %v3638 = vadd.f32 %v3525, %v3637
  %3639 = vmatprep.mubr.bf16.mxu0 %v2441
  %3640 = vmatmul.mubr.bf16.gmra.mrb[0].mxu0 %v2440
  %v3641 = vpop.f32.mrb[0].mxu0
  %v3642 = vadd.f32 %v3529, %v3641
  %v3643 = vpop.f32.mrb[0].mxu0
  %v3644 = vadd.f32 %v3531, %v3643
  %v3645 = vpop.f32.mrb[0].mxu0
  %v3646 = vadd.f32 %v3533, %v3645
  %v3647 = vpop.f32.mrb[0].mxu0
  %v3648 = vadd.f32 %v3535, %v3647
  %3649 = vmatprep.mubr.bf16.mxu0 %v2445
  %3650 = vmatmul.mubr.bf16.gmra.mrb[0].mxu0 %v2444
  %v3651 = vpop.f32.mrb[0].mxu0
  %v3652 = vadd.f32 %v3539, %v3651
  %v3653 = vpop.f32.mrb[0].mxu0
  %v3654 = vadd.f32 %v3541, %v3653
  %v3655 = vpop.f32.mrb[0].mxu0
  %v3656 = vadd.f32 %v3543, %v3655
  %v3657 = vpop.f32.mrb[0].mxu0
  %v3658 = vadd.f32 %v3545, %v3657
  %3659 = vmatprep.mubr.bf16.mxu0 %v2449
  %3660 = vmatmul.mubr.bf16.gmra.mrb[0].mxu0 %v2448
  %v3661 = vpop.f32.mrb[0].mxu0
  %v3662 = vadd.f32 %v3549, %v3661
  %v3663 = vpop.f32.mrb[0].mxu0
  %v3664 = vadd.f32 %v3551, %v3663
  %v3665 = vpop.f32.mrb[0].mxu0
  %v3666 = vadd.f32 %v3553, %v3665
  %v3667 = vpop.f32.mrb[0].mxu0
  %v3668 = vadd.f32 %v3555, %v3667
  %3669 = vdwg.mxu0
  %v3670 = vpack.c.bf16 %v3370, %v3366
  %v3671 = vpack.c.bf16 %v3372, %v3368
  %v3672 = vpack.c.bf16 %v3596, %v3592
  %v3673 = vpack.c.bf16 %v3598, %v3594
  %v3674 = vpack.c.bf16 %v3380, %v3376
  %v3675 = vpack.c.bf16 %v3382, %v3378
  %v3676 = vpack.c.bf16 %v3606, %v3602
  %v3677 = vpack.c.bf16 %v3608, %v3604
  %v3678 = vpack.c.bf16 %v3390, %v3386
  %v3679 = vpack.c.bf16 %v3392, %v3388
  %v3680 = vpack.c.bf16 %v3616, %v3612
  %v3681 = vpack.c.bf16 %v3618, %v3614
  %v3682 = vpack.c.bf16 %v3400, %v3396
  %v3683 = vpack.c.bf16 %v3402, %v3398
  %v3684 = vpack.c.bf16 %v3626, %v3622
  %v3685 = vpack.c.bf16 %v3628, %v3624
  %v3686 = vpack.c.bf16 %v3410, %v3406
  %v3687 = vpack.c.bf16 %v3412, %v3408
  %v3688 = vpack.c.bf16 %v3636, %v3632
  %v3689 = vpack.c.bf16 %v3638, %v3634
  %v3690 = vpack.c.bf16 %v3420, %v3416
  %v3691 = vpack.c.bf16 %v3422, %v3418
  %v3692 = vpack.c.bf16 %v3646, %v3642
  %v3693 = vpack.c.bf16 %v3648, %v3644
  %v3694 = vpack.c.bf16 %v3430, %v3426
  %v3695 = vpack.c.bf16 %v3432, %v3428
  %v3696 = vpack.c.bf16 %v3656, %v3652
  %v3697 = vpack.c.bf16 %v3658, %v3654
  %v3698 = vpack.c.bf16 %v3440, %v3436
  %v3699 = vpack.c.bf16 %v3442, %v3438
  %v3700 = vpack.c.bf16 %v3666, %v3662
  %v3701 = vpack.c.bf16 %v3668, %v3664
  %v3702 = vld [vmem:[%s4] sm:$0xf]
  %v3705 = vunpack.c.l.s4 1966171168
  %v3706 = vunpack.c.0.s8 %v3705
  %v3707 = vlaneseq
  %v3708 = vshrl.u32 %v3707, 7
  %v3709 = vsub.s32 %v3706, %v3708
  %v3710 = vrot.slane %v3702, %v3709
  %v3711 = vcombine.high %v3710, %v3710
  %v3713 = vunpack.c.l.s4 1966171168
  %v3714 = vunpack.c.0.s8 %v3713
  %v3715 = vlaneseq
  %v3716 = vshrl.u32 %v3715, 7
  %v3717 = vsub.s32 %v3714, %v3716
  %v3718 = vrot.slane %v3710, %v3717
  %v3720 = vunpack.c.l.s4 1966171168
  %v3721 = vunpack.c.0.s8 %v3720
  %v3722 = vlaneseq
  %v3723 = vshrl.u32 %v3722, 7
  %v3724 = vsub.s32 %v3721, %v3723
  %v3725 = vrot.slane %v3711, %v3724
  %v3726 = vcombine.high %v3718, %v3718
  %v3727 = vcombine.high %v3725, %v3725
  %v3729 = vpack.i.b16 %v3718, %v3718
  %v3731 = vlaneseq
  %v3732 = vshrl.u32 %v3731, 7
  %v3733 = vsub.s32 0, %v3732
  %v3734 = vrot.slane %v3729, %v3733
  %v3736 = vpack.i.b16 %v3725, %v3725
  %v3738 = vlaneseq
  %v3739 = vshrl.u32 %v3738, 7
  %v3740 = vsub.s32 0, %v3739
  %v3741 = vrot.slane %v3736, %v3740
  %v3743 = vpack.i.b16 %v3726, %v3726
  %v3745 = vlaneseq
  %v3746 = vshrl.u32 %v3745, 7
  %v3747 = vsub.s32 0, %v3746
  %v3748 = vrot.slane %v3743, %v3747
  %v3750 = vpack.i.b16 %v3727, %v3727
  %v3752 = vlaneseq
  %v3753 = vshrl.u32 %v3752, 7
  %v3754 = vsub.s32 0, %v3753
  %v3755 = vrot.slane %v3750, %v3754
  %v3756 = vadd.bf16 %v3670, %v3734
  %v3757 = vadd.bf16 %v3671, %v3741
  %v3758 = vadd.bf16 %v3672, %v3748
  %v3759 = vadd.bf16 %v3673, %v3755
  %v3760 = vadd.bf16 %v3674, %v3734
  %v3761 = vadd.bf16 %v3675, %v3741
  %v3762 = vadd.bf16 %v3676, %v3748
  %v3763 = vadd.bf16 %v3677, %v3755
  %v3764 = vadd.bf16 %v3678, %v3734
  %v3765 = vadd.bf16 %v3679, %v3741
  %v3766 = vadd.bf16 %v3680, %v3748
  %v3767 = vadd.bf16 %v3681, %v3755
  %v3768 = vadd.bf16 %v3682, %v3734
  %v3769 = vadd.bf16 %v3683, %v3741
  %v3770 = vadd.bf16 %v3684, %v3748
  %v3771 = vadd.bf16 %v3685, %v3755
  %v3772 = vadd.bf16 %v3686, %v3734
  %v3773 = vadd.bf16 %v3687, %v3741
  %v3774 = vadd.bf16 %v3688, %v3748
  %v3775 = vadd.bf16 %v3689, %v3755
  %v3776 = vadd.bf16 %v3690, %v3734
  %v3777 = vadd.bf16 %v3691, %v3741
  %v3778 = vadd.bf16 %v3692, %v3748
  %v3779 = vadd.bf16 %v3693, %v3755
  %v3780 = vadd.bf16 %v3694, %v3734
  %v3781 = vadd.bf16 %v3695, %v3741
  %v3782 = vadd.bf16 %v3696, %v3748
  %v3783 = vadd.bf16 %v3697, %v3755
  %v3784 = vadd.bf16 %v3698, %v3734
  %v3785 = vadd.bf16 %v3699, %v3741
  %v3786 = vadd.bf16 %v3700, %v3748
  %v3787 = vadd.bf16 %v3701, %v3755
  %v3788 = vmax.bf16 %v3756, 0
  %v3789 = vmax.bf16 %v3757, 0
  %v3790 = vmax.bf16 %v3758, 0
  %v3791 = vmax.bf16 %v3759, 0
  %v3792 = vmax.bf16 %v3760, 0
  %v3793 = vmax.bf16 %v3761, 0
  %v3794 = vmax.bf16 %v3762, 0
  %v3795 = vmax.bf16 %v3763, 0
  %v3796 = vmax.bf16 %v3764, 0
  %v3797 = vmax.bf16 %v3765, 0
  %v3798 = vmax.bf16 %v3766, 0
  %v3799 = vmax.bf16 %v3767, 0
  %v3800 = vmax.bf16 %v3768, 0
  %v3801 = vmax.bf16 %v3769, 0
  %v3802 = vmax.bf16 %v3770, 0
  %v3803 = vmax.bf16 %v3771, 0
  %v3804 = vmax.bf16 %v3772, 0
  %v3805 = vmax.bf16 %v3773, 0
  %v3806 = vmax.bf16 %v3774, 0
  %v3807 = vmax.bf16 %v3775, 0
  %v3808 = vmax.bf16 %v3776, 0
  %v3809 = vmax.bf16 %v3777, 0
  %v3810 = vmax.bf16 %v3778, 0
  %v3811 = vmax.bf16 %v3779, 0
  %v3812 = vmax.bf16 %v3780, 0
  %v3813 = vmax.bf16 %v3781, 0
  %v3814 = vmax.bf16 %v3782, 0
  %v3815 = vmax.bf16 %v3783, 0
  %v3816 = vmax.bf16 %v3784, 0
  %v3817 = vmax.bf16 %v3785, 0
  %v3818 = vmax.bf16 %v3786, 0
  %v3819 = vmax.bf16 %v3787, 0
  %v3820 = vld [vmem:[%s5] sm:$0xf]
  %v3821 = vld [vmem:[%s5 + $0x4] sm:$0xf]
  %v3822 = vld [vmem:[%s5 + $0x8] sm:$0xf]
  %v3823 = vld [vmem:[%s5 + $0xc] sm:$0xf]
  %v3824 = vld [vmem:[%s5 + $0x10] sm:$0xf]
  %v3825 = vld [vmem:[%s5 + $0x14] sm:$0xf]
  %v3826 = vld [vmem:[%s5 + $0x18] sm:$0xf]
  %v3827 = vld [vmem:[%s5 + $0x1c] sm:$0xf]
  %v3828 = vld [vmem:[%s5 + $0x20] sm:$0xf]
  %v3829 = vld [vmem:[%s5 + $0x24] sm:$0xf]
  %v3830 = vld [vmem:[%s5 + $0x28] sm:$0xf]
  %v3831 = vld [vmem:[%s5 + $0x2c] sm:$0xf]
  %v3832 = vld [vmem:[%s5 + $0x30] sm:$0xf]
  %v3833 = vld [vmem:[%s5 + $0x34] sm:$0xf]
  %v3834 = vld [vmem:[%s5 + $0x38] sm:$0xf]
  %v3835 = vld [vmem:[%s5 + $0x3c] sm:$0xf]
  %v3836 = vld [vmem:[%s5 + $0x40] sm:$0xf]
  %v3837 = vld [vmem:[%s5 + $0x44] sm:$0xf]
  %v3838 = vld [vmem:[%s5 + $0x48] sm:$0xf]
  %v3839 = vld [vmem:[%s5 + $0x4c] sm:$0xf]
  %v3840 = vld [vmem:[%s5 + $0x50] sm:$0xf]
  %v3841 = vld [vmem:[%s5 + $0x54] sm:$0xf]
  %v3842 = vld [vmem:[%s5 + $0x58] sm:$0xf]
  %v3843 = vld [vmem:[%s5 + $0x5c] sm:$0xf]
  %v3844 = vld [vmem:[%s5 + $0x60] sm:$0xf]
  %v3845 = vld [vmem:[%s5 + $0x64] sm:$0xf]
  %v3846 = vld [vmem:[%s5 + $0x68] sm:$0xf]
  %v3847 = vld [vmem:[%s5 + $0x6c] sm:$0xf]
  %v3848 = vld [vmem:[%s5 + $0x70] sm:$0xf]
  %v3849 = vld [vmem:[%s5 + $0x74] sm:$0xf]
  %v3850 = vld [vmem:[%s5 + $0x78] sm:$0xf]
  %v3851 = vld [vmem:[%s5 + $0x7c] sm:$0xf]
  %v3852 = vld [vmem:[%s5 + $0x80] sm:$0xf]
  %v3853 = vld [vmem:[%s5 + $0x84] sm:$0xf]
  %v3854 = vld [vmem:[%s5 + $0x88] sm:$0xf]
  %v3855 = vld [vmem:[%s5 + $0x8c] sm:$0xf]
  %v3856 = vld [vmem:[%s5 + $0x90] sm:$0xf]
  %v3857 = vld [vmem:[%s5 + $0x94] sm:$0xf]
  %v3858 = vld [vmem:[%s5 + $0x98] sm:$0xf]
  %v3859 = vld [vmem:[%s5 + $0x9c] sm:$0xf]
  %v3860 = vld [vmem:[%s5 + $0xa0] sm:$0xf]
  %v3861 = vld [vmem:[%s5 + $0xa4] sm:$0xf]
  %v3862 = vld [vmem:[%s5 + $0xa8] sm:$0xf]
  %v3863 = vld [vmem:[%s5 + $0xac] sm:$0xf]
  %v3864 = vld [vmem:[%s5 + $0xb0] sm:$0xf]
  %v3865 = vld [vmem:[%s5 + $0xb4] sm:$0xf]
  %v3866 = vld [vmem:[%s5 + $0xb8] sm:$0xf]
  %v3867 = vld [vmem:[%s5 + $0xbc] sm:$0xf]
  %v3868 = vld [vmem:[%s5 + $0xc0] sm:$0xf]
  %v3869 = vld [vmem:[%s5 + $0xc4] sm:$0xf]
  %v3870 = vld [vmem:[%s5 + $0xc8] sm:$0xf]
  %v3871 = vld [vmem:[%s5 + $0xcc] sm:$0xf]
  %v3872 = vld [vmem:[%s5 + $0xd0] sm:$0xf]
  %v3873 = vld [vmem:[%s5 + $0xd4] sm:$0xf]
  %v3874 = vld [vmem:[%s5 + $0xd8] sm:$0xf]
  %v3875 = vld [vmem:[%s5 + $0xdc] sm:$0xf]
  %v3876 = vld [vmem:[%s5 + $0xe0] sm:$0xf]
  %v3877 = vld [vmem:[%s5 + $0xe4] sm:$0xf]
  %v3878 = vld [vmem:[%s5 + $0xe8] sm:$0xf]
  %v3879 = vld [vmem:[%s5 + $0xec] sm:$0xf]
  %v3880 = vld [vmem:[%s5 + $0xf0] sm:$0xf]
  %v3881 = vld [vmem:[%s5 + $0xf4] sm:$0xf]
  %v3882 = vld [vmem:[%s5 + $0xf8] sm:$0xf]
  %v3883 = vld [vmem:[%s5 + $0xfc] sm:$0xf]
  %v3884 = vld [vmem:[%s6] sm:$0x1]
  %v3886 = vlaneseq
  %v3887 = vshrl.u32 %v3886, 7
  %v3888 = vsub.s32 0, %v3887
  %v3889 = vrot.slane %v3884, %v3888
  %v3955 = vunpack.c.l.b16 %v3820
  %v3956 = vunpack.c.l.b16 %v3821
  %v3957 = vunpack.c.l.b16 %v3822
  %v3958 = vunpack.c.l.b16 %v3823
  %v3959 = vunpack.c.l.b16 %v3824
  %v3960 = vunpack.c.l.b16 %v3825
  %v3961 = vunpack.c.l.b16 %v3826
  %v3962 = vunpack.c.l.b16 %v3827
  %v3963 = vunpack.c.l.b16 %v3828
  %v3964 = vunpack.c.l.b16 %v3829
  %v3965 = vunpack.c.l.b16 %v3830
  %v3966 = vunpack.c.l.b16 %v3831
  %v3967 = vunpack.c.l.b16 %v3832
  %v3968 = vunpack.c.l.b16 %v3833
  %v3969 = vunpack.c.l.b16 %v3834
  %v3970 = vunpack.c.l.b16 %v3835
  %v3971 = vunpack.c.l.b16 %v3836
  %v3972 = vunpack.c.l.b16 %v3837
  %v3973 = vunpack.c.l.b16 %v3838
  %v3974 = vunpack.c.l.b16 %v3839
  %v3975 = vunpack.c.l.b16 %v3840
  %v3976 = vunpack.c.l.b16 %v3841
  %v3977 = vunpack.c.l.b16 %v3842
  %v3978 = vunpack.c.l.b16 %v3843
  %v3979 = vunpack.c.l.b16 %v3844
  %v3980 = vunpack.c.l.b16 %v3845
  %v3981 = vunpack.c.l.b16 %v3846
  %v3982 = vunpack.c.l.b16 %v3847
  %v3983 = vunpack.c.l.b16 %v3848
  %v3984 = vunpack.c.l.b16 %v3849
  %v3985 = vunpack.c.l.b16 %v3850
  %v3986 = vunpack.c.l.b16 %v3851
  %v3987 = vunpack.c.l.b16 %v3852
  %v3988 = vunpack.c.l.b16 %v3853
  %v3989 = vunpack.c.l.b16 %v3854
  %v3990 = vunpack.c.l.b16 %v3855
  %v3991 = vunpack.c.l.b16 %v3856
  %v3992 = vunpack.c.l.b16 %v3857
  %v3993 = vunpack.c.l.b16 %v3858
  %v3994 = vunpack.c.l.b16 %v3859
  %v3995 = vunpack.c.l.b16 %v3860
  %v3996 = vunpack.c.l.b16 %v3861
  %v3997 = vunpack.c.l.b16 %v3862
  %v3998 = vunpack.c.l.b16 %v3863
  %v3999 = vunpack.c.l.b16 %v3864
  %v4000 = vunpack.c.l.b16 %v3865
  %v4001 = vunpack.c.l.b16 %v3866
  %v4002 = vunpack.c.l.b16 %v3867
  %v4003 = vunpack.c.l.b16 %v3868
  %v4004 = vunpack.c.l.b16 %v3869
  %v4005 = vunpack.c.l.b16 %v3870
  %v4006 = vunpack.c.l.b16 %v3871
  %v4007 = vunpack.c.l.b16 %v3872
  %v4008 = vunpack.c.l.b16 %v3873
  %v4009 = vunpack.c.l.b16 %v3874
  %v4010 = vunpack.c.l.b16 %v3875
  %v4011 = vunpack.c.l.b16 %v3876
  %v4012 = vunpack.c.l.b16 %v3877
  %v4013 = vunpack.c.l.b16 %v3878
  %v4014 = vunpack.c.l.b16 %v3879
  %v4015 = vunpack.c.l.b16 %v3880
  %v4016 = vunpack.c.l.b16 %v3881
  %v4017 = vunpack.c.l.b16 %v3882
  %v4018 = vunpack.c.l.b16 %v3883
  %v4019 = vpack.c.b16 %v3956, %v3955
  %v4020 = vpack.c.b16 %v3958, %v3957
  %v4021 = vpack.c.b16 %v3960, %v3959
  %v4022 = vpack.c.b16 %v3962, %v3961
  %v4023 = vpack.c.b16 %v3964, %v3963
  %v4024 = vpack.c.b16 %v3966, %v3965
  %v4025 = vpack.c.b16 %v3968, %v3967
  %v4026 = vpack.c.b16 %v3970, %v3969
  %v4027 = vpack.c.b16 %v3972, %v3971
  %v4028 = vpack.c.b16 %v3974, %v3973
  %v4029 = vpack.c.b16 %v3976, %v3975
  %v4030 = vpack.c.b16 %v3978, %v3977
  %v4031 = vpack.c.b16 %v3980, %v3979
  %v4032 = vpack.c.b16 %v3982, %v3981
  %v4033 = vpack.c.b16 %v3984, %v3983
  %v4034 = vpack.c.b16 %v3986, %v3985
  %v4035 = vpack.c.b16 %v3988, %v3987
  %v4036 = vpack.c.b16 %v3990, %v3989
  %v4037 = vpack.c.b16 %v3992, %v3991
  %v4038 = vpack.c.b16 %v3994, %v3993
  %v4039 = vpack.c.b16 %v3996, %v3995
  %v4040 = vpack.c.b16 %v3998, %v3997
  %v4041 = vpack.c.b16 %v4000, %v3999
  %v4042 = vpack.c.b16 %v4002, %v4001
  %v4043 = vpack.c.b16 %v4004, %v4003
  %v4044 = vpack.c.b16 %v4006, %v4005
  %v4045 = vpack.c.b16 %v4008, %v4007
  %v4046 = vpack.c.b16 %v4010, %v4009
  %v4047 = vpack.c.b16 %v4012, %v4011
  %v4048 = vpack.c.b16 %v4014, %v4013
  %v4049 = vpack.c.b16 %v4016, %v4015
  %v4050 = vpack.c.b16 %v4018, %v4017
  %4083 = vmatprep.subr.bf16.mxu0 0
  %4084 = vmatpush1.bf16.msra.mxu0 %v4019
  %4085 = vmatprep.subr.bf16.mxu0 0
  %4086 = vmatpush1.bf16.msra.mxu0 %v4020
  %4087 = vmatprep.subr.bf16.mxu0 0
  %4088 = vmatpush1.bf16.msra.mxu0 %v4021
  %4089 = vmatprep.subr.bf16.mxu0 0
  %4090 = vmatpush1.bf16.msra.mxu0 %v4022
  %4091 = vmatprep.subr.bf16.mxu0 0
  %4092 = vmatpush1.bf16.msra.mxu0 %v4023
  %4093 = vmatprep.subr.bf16.mxu0 0
  %4094 = vmatpush1.bf16.msra.mxu0 %v4024
  %4095 = vmatprep.subr.bf16.mxu0 0
  %4096 = vmatpush1.bf16.msra.mxu0 %v4025
  %4097 = vmatprep.subr.bf16.mxu0 0
  %4098 = vmatpush1.bf16.msra.mxu0 %v4026
  %4099 = vmatprep.subr.bf16.mxu0 0
  %4100 = vmatpush1.bf16.msra.mxu0 %v4027
  %4101 = vmatprep.subr.bf16.mxu0 0
  %4102 = vmatpush1.bf16.msra.mxu0 %v4028
  %4103 = vmatprep.subr.bf16.mxu0 0
  %4104 = vmatpush1.bf16.msra.mxu0 %v4029
  %4105 = vmatprep.subr.bf16.mxu0 0
  %4106 = vmatpush1.bf16.msra.mxu0 %v4030
  %4107 = vmatprep.subr.bf16.mxu0 0
  %4108 = vmatpush1.bf16.msra.mxu0 %v4031
  %4109 = vmatprep.subr.bf16.mxu0 0
  %4110 = vmatpush1.bf16.msra.mxu0 %v4032
  %4111 = vmatprep.subr.bf16.mxu0 0
  %4112 = vmatpush1.bf16.msra.mxu0 %v4033
  %4113 = vmatprep.subr.bf16.mxu0 0
  %4114 = vmatpush1.bf16.msra.mxu0 %v4034
  %4115 = vmatprep.mubr.bf16.mxu0 %v3789
  %4116 = vmatmul.mubr.bf16.gmra.mrb[0].mxu0 %v3788
  %v4117 = vpop.f32.mrb[0].mxu0
  %v4118 = vadd.f32 %v3889, %v4117
  %v4119 = vpop.f32.mrb[0].mxu0
  %v4120 = vpop.f32.mrb[0].mxu0
  %v4121 = vadd.f32 %v3889, %v4120
  %v4122 = vpop.f32.mrb[0].mxu0
  %4123 = vmatprep.mubr.bf16.mxu0 %v3793
  %4124 = vmatmul.mubr.bf16.gmra.mrb[0].mxu0 %v3792
  %v4125 = vpop.f32.mrb[0].mxu0
  %v4126 = vadd.f32 %v3889, %v4125
  %v4127 = vpop.f32.mrb[0].mxu0
  %v4128 = vpop.f32.mrb[0].mxu0
  %v4129 = vadd.f32 %v3889, %v4128
  %v4130 = vpop.f32.mrb[0].mxu0
  %4131 = vmatprep.mubr.bf16.mxu0 %v3797
  %4132 = vmatmul.mubr.bf16.gmra.mrb[0].mxu0 %v3796
  %v4133 = vpop.f32.mrb[0].mxu0
  %v4134 = vadd.f32 %v3889, %v4133
  %v4135 = vpop.f32.mrb[0].mxu0
  %v4136 = vpop.f32.mrb[0].mxu0
  %v4137 = vadd.f32 %v3889, %v4136
  %v4138 = vpop.f32.mrb[0].mxu0
  %4139 = vmatprep.mubr.bf16.mxu0 %v3801
  %4140 = vmatmul.mubr.bf16.gmra.mrb[0].mxu0 %v3800
  %v4141 = vpop.f32.mrb[0].mxu0
  %v4142 = vadd.f32 %v3889, %v4141
  %v4143 = vpop.f32.mrb[0].mxu0
  %v4144 = vpop.f32.mrb[0].mxu0
  %v4145 = vadd.f32 %v3889, %v4144
  %v4146 = vpop.f32.mrb[0].mxu0
  %4147 = vmatprep.mubr.bf16.mxu0 %v3805
  %4148 = vmatmul.mubr.bf16.gmra.mrb[0].mxu0 %v3804
  %v4149 = vpop.f32.mrb[0].mxu0
  %v4150 = vadd.f32 %v3889, %v4149
  %v4151 = vpop.f32.mrb[0].mxu0
  %v4152 = vpop.f32.mrb[0].mxu0
  %v4153 = vadd.f32 %v3889, %v4152
  %v4154 = vpop.f32.mrb[0].mxu0
  %4155 = vmatprep.mubr.bf16.mxu0 %v3809
  %4156 = vmatmul.mubr.bf16.gmra.mrb[0].mxu0 %v3808
  %v4157 = vpop.f32.mrb[0].mxu0
  %v4158 = vadd.f32 %v3889, %v4157
  %v4159 = vpop.f32.mrb[0].mxu0
  %v4160 = vpop.f32.mrb[0].mxu0
  %v4161 = vadd.f32 %v3889, %v4160
  %v4162 = vpop.f32.mrb[0].mxu0
  %4163 = vmatprep.mubr.bf16.mxu0 %v3813
  %4164 = vmatmul.mubr.bf16.gmra.mrb[0].mxu0 %v3812
  %v4165 = vpop.f32.mrb[0].mxu0
  %v4166 = vadd.f32 %v3889, %v4165
  %v4167 = vpop.f32.mrb[0].mxu0
  %v4168 = vpop.f32.mrb[0].mxu0
  %v4169 = vadd.f32 %v3889, %v4168
  %v4170 = vpop.f32.mrb[0].mxu0
  %4171 = vmatprep.mubr.bf16.mxu0 %v3817
  %4172 = vmatmul.mubr.bf16.gmra.mrb[0].mxu0 %v3816
  %v4173 = vpop.f32.mrb[0].mxu0
  %v4174 = vadd.f32 %v3889, %v4173
  %v4175 = vpop.f32.mrb[0].mxu0
  %v4176 = vpop.f32.mrb[0].mxu0
  %v4177 = vadd.f32 %v3889, %v4176
  %v4178 = vpop.f32.mrb[0].mxu0
  %4179 = vdwg.mxu0
  %4180 = vmatprep.subr.bf16.mxu0 0
  %4181 = vmatpush1.bf16.msra.mxu0 %v4035
  %4182 = vmatprep.subr.bf16.mxu0 0
  %4183 = vmatpush1.bf16.msra.mxu0 %v4036
  %4184 = vmatprep.subr.bf16.mxu0 0
  %4185 = vmatpush1.bf16.msra.mxu0 %v4037
  %4186 = vmatprep.subr.bf16.mxu0 0
  %4187 = vmatpush1.bf16.msra.mxu0 %v4038
  %4188 = vmatprep.subr.bf16.mxu0 0
  %4189 = vmatpush1.bf16.msra.mxu0 %v4039
  %4190 = vmatprep.subr.bf16.mxu0 0
  %4191 = vmatpush1.bf16.msra.mxu0 %v4040
  %4192 = vmatprep.subr.bf16.mxu0 0
  %4193 = vmatpush1.bf16.msra.mxu0 %v4041
  %4194 = vmatprep.subr.bf16.mxu0 0
  %4195 = vmatpush1.bf16.msra.mxu0 %v4042
  %4196 = vmatprep.subr.bf16.mxu0 0
  %4197 = vmatpush1.bf16.msra.mxu0 %v4043
  %4198 = vmatprep.subr.bf16.mxu0 0
  %4199 = vmatpush1.bf16.msra.mxu0 %v4044
  %4200 = vmatprep.subr.bf16.mxu0 0
  %4201 = vmatpush1.bf16.msra.mxu0 %v4045
  %4202 = vmatprep.subr.bf16.mxu0 0
  %4203 = vmatpush1.bf16.msra.mxu0 %v4046
  %4204 = vmatprep.subr.bf16.mxu0 0
  %4205 = vmatpush1.bf16.msra.mxu0 %v4047
  %4206 = vmatprep.subr.bf16.mxu0 0
  %4207 = vmatpush1.bf16.msra.mxu0 %v4048
  %4208 = vmatprep.subr.bf16.mxu0 0
  %4209 = vmatpush1.bf16.msra.mxu0 %v4049
  %4210 = vmatprep.subr.bf16.mxu0 0
  %4211 = vmatpush1.bf16.msra.mxu0 %v4050
  %4212 = vmatprep.mubr.bf16.mxu0 %v3791
  %4213 = vmatmul.mubr.bf16.gmra.mrb[0].mxu0 %v3790
  %v4214 = vpop.f32.mrb[0].mxu0
  %v4215 = vadd.f32 %v4118, %v4214
  %v4216 = vpop.f32.mrb[0].mxu0
  %v4217 = vpop.f32.mrb[0].mxu0
  %v4218 = vadd.f32 %v4121, %v4217
  %v4219 = vpop.f32.mrb[0].mxu0
  %4220 = vmatprep.mubr.bf16.mxu0 %v3795
  %4221 = vmatmul.mubr.bf16.gmra.mrb[0].mxu0 %v3794
  %v4222 = vpop.f32.mrb[0].mxu0
  %v4223 = vadd.f32 %v4126, %v4222
  %v4224 = vpop.f32.mrb[0].mxu0
  %v4225 = vpop.f32.mrb[0].mxu0
  %v4226 = vadd.f32 %v4129, %v4225
  %v4227 = vpop.f32.mrb[0].mxu0
  %4228 = vmatprep.mubr.bf16.mxu0 %v3799
  %4229 = vmatmul.mubr.bf16.gmra.mrb[0].mxu0 %v3798
  %v4230 = vpop.f32.mrb[0].mxu0
  %v4231 = vadd.f32 %v4134, %v4230
  %v4232 = vpop.f32.mrb[0].mxu0
  %v4233 = vpop.f32.mrb[0].mxu0
  %v4234 = vadd.f32 %v4137, %v4233
  %v4235 = vpop.f32.mrb[0].mxu0
  %4236 = vmatprep.mubr.bf16.mxu0 %v3803
  %4237 = vmatmul.mubr.bf16.gmra.mrb[0].mxu0 %v3802
  %v4238 = vpop.f32.mrb[0].mxu0
  %v4239 = vadd.f32 %v4142, %v4238
  %v4240 = vpop.f32.mrb[0].mxu0
  %v4241 = vpop.f32.mrb[0].mxu0
  %v4242 = vadd.f32 %v4145, %v4241
  %v4243 = vpop.f32.mrb[0].mxu0
  %4244 = vmatprep.mubr.bf16.mxu0 %v3807
  %4245 = vmatmul.mubr.bf16.gmra.mrb[0].mxu0 %v3806
  %v4246 = vpop.f32.mrb[0].mxu0
  %v4247 = vadd.f32 %v4150, %v4246
  %v4248 = vpop.f32.mrb[0].mxu0
  %v4249 = vpop.f32.mrb[0].mxu0
  %v4250 = vadd.f32 %v4153, %v4249
  %v4251 = vpop.f32.mrb[0].mxu0
  %4252 = vmatprep.mubr.bf16.mxu0 %v3811
  %4253 = vmatmul.mubr.bf16.gmra.mrb[0].mxu0 %v3810
  %v4254 = vpop.f32.mrb[0].mxu0
  %v4255 = vadd.f32 %v4158, %v4254
  %v4256 = vpop.f32.mrb[0].mxu0
  %v4257 = vpop.f32.mrb[0].mxu0
  %v4258 = vadd.f32 %v4161, %v4257
  %v4259 = vpop.f32.mrb[0].mxu0
  %4260 = vmatprep.mubr.bf16.mxu0 %v3815
  %4261 = vmatmul.mubr.bf16.gmra.mrb[0].mxu0 %v3814
  %v4262 = vpop.f32.mrb[0].mxu0
  %v4263 = vadd.f32 %v4166, %v4262
  %v4264 = vpop.f32.mrb[0].mxu0
  %v4265 = vpop.f32.mrb[0].mxu0
  %v4266 = vadd.f32 %v4169, %v4265
  %v4267 = vpop.f32.mrb[0].mxu0
  %4268 = vmatprep.mubr.bf16.mxu0 %v3819
  %4269 = vmatmul.mubr.bf16.gmra.mrb[0].mxu0 %v3818
  %v4270 = vpop.f32.mrb[0].mxu0
  %v4271 = vadd.f32 %v4174, %v4270
  %v4272 = vpop.f32.mrb[0].mxu0
  %v4273 = vpop.f32.mrb[0].mxu0
  %v4274 = vadd.f32 %v4177, %v4273
  %v4275 = vpop.f32.mrb[0].mxu0
  %4276 = vdwg.mxu0
  %v4277 = vmax.f32 %v4215, 0.0
  %v4278 = vmax.f32 %v4218, 0.0
  %v4279 = vmax.f32 %v4223, 0.0
  %v4280 = vmax.f32 %v4226, 0.0
  %v4281 = vmax.f32 %v4231, 0.0
  %v4282 = vmax.f32 %v4234, 0.0
  %v4283 = vmax.f32 %v4239, 0.0
  %v4284 = vmax.f32 %v4242, 0.0
  %v4285 = vmax.f32 %v4247, 0.0
  %v4286 = vmax.f32 %v4250, 0.0
  %v4287 = vmax.f32 %v4255, 0.0
  %v4288 = vmax.f32 %v4258, 0.0
  %v4289 = vmax.f32 %v4263, 0.0
  %v4290 = vmax.f32 %v4266, 0.0
  %v4291 = vmax.f32 %v4271, 0.0
  %v4292 = vmax.f32 %v4274, 0.0
  %4293 = vst [vmem:[%s7] sm:$0xff] %v4277
  %4294 = vst [vmem:[%s7 + $0x8] sm:$0xff] %v4278
  %4295 = vst [vmem:[%s7 + $0x10] sm:$0xff] %v4279
  %4296 = vst [vmem:[%s7 + $0x18] sm:$0xff] %v4280
  %4297 = vst [vmem:[%s7 + $0x20] sm:$0xff] %v4281
  %4298 = vst [vmem:[%s7 + $0x28] sm:$0xff] %v4282
  %4299 = vst [vmem:[%s7 + $0x30] sm:$0xff] %v4283
  %4300 = vst [vmem:[%s7 + $0x38] sm:$0xff] %v4284
  %4301 = vst [vmem:[%s7 + $0x40] sm:$0xff] %v4285
  %4302 = vst [vmem:[%s7 + $0x48] sm:$0xff] %v4286
  %4303 = vst [vmem:[%s7 + $0x50] sm:$0xff] %v4287
  %4304 = vst [vmem:[%s7 + $0x58] sm:$0xff] %v4288
  %4305 = vst [vmem:[%s7 + $0x60] sm:$0xff] %v4289
  %4306 = vst [vmem:[%s7 + $0x68] sm:$0xff] %v4290
  %4307 = vst [vmem:[%s7 + $0x70] sm:$0xff] %v4291
  %4308 = vst [vmem:[%s7 + $0x78] sm:$0xff] %v4292
  // Predicated region
  $region30: #{mlp_forward.1} parent=0 // pred_check
    _
  $region31: #{mlp_forward.1} parent=0 // pred_check_branch
    %4310 = sbr.rel (0) target = $region33
  $region32: #{mlp_forward.1} parent=0 // pred_region
    _
  $region33: #{mlp_forward.1} parent=0 // pred_fallthru
    _
  // Predicated region
  $region34: #{mlp_forward.1} parent=0 // pred_check
    _
  $region35: #{mlp_forward.1} parent=0 // pred_check_branch
    %4312 = sbr.rel (0) target = $region37
  $region36: #{mlp_forward.1} parent=0 // pred_region
    _
  $region37: #{mlp_forward.1} parent=0 // pred_fallthru
    _

</llo_original>
